<compile_context>
chip_gen: v7x
topology: tpu7x:2x2x1
jax: 0.10.0
libtpu: 0.0.40
codegen_flags: <defaults>
</compile_context>

<pallas_src>
import functools

import jax
import jax.numpy as jnp
import numpy as np
from jax import lax
from jax.experimental import pallas as pl
from jax.experimental.pallas import tpu as pltpu

EXPANSION = 1          # BasicBlock expansion
BN_EPS = 1e-5
KSIZE = 3
PAD = 1


# ---------------------------------------------------------------------------
# Fused Pallas kernel: one estimator group per grid step
# ---------------------------------------------------------------------------
def _basic_block_kernel(xph_ref, w1_ref, b1_ref, w2_ref, b2_ref, *rest,
                        stride, groups, ho, wo, proj):
    """Fused BasicBlock forward for one estimator group.

    xph_ref : (stride*stride*G, Hq, Wq, Cin) bf16  phase-decomposed padded input
    w1_ref  : (9, Cin, C) bf16   conv1 weights, r1/s1/bn1-scale folded in
    b1_ref  : (1, C)      f32    bn1 bias
    w2_ref  : (9, C, C)   bf16   conv2 weights, r2/s2/bn2-scale folded in
    b2_ref  : (1, C)      f32    bn2 bias
    [wsc_ref: (Cin, C) bf16, bsc_ref: (1, C) f32]  projection shortcut (optional)
    out_ref : (1, G*Ho*Wo, C) f32
    y1_ref  : (G, Ho+2, Wo+2, C) bf16 VMEM scratch (padded conv1 activation)
    """
    if proj:
        wsc_ref, bsc_ref, out_ref, y1_ref = rest
    else:
        out_ref, y1_ref = rest

    s = stride
    cin = xph_ref.shape[-1]
    c = out_ref.shape[-1]
    rows = groups * ho * wo

    def tap(kh, kw):
        # conv1 tap (kh, kw): x_pad[:, kh + s*i, kw + s*j, :] for the whole group.
        p = (kh % s) * s + (kw % s)          # phase index (static)
        oh, ow = kh // s, kw // s            # offset inside the phase grid
        t = xph_ref[p * groups:(p + 1) * groups, oh:oh + ho, ow:ow + wo, :]
        return t.reshape(rows, cin)          # (G*Ho*Wo, Cin) bf16

    # ---- conv1 (BatchConv2d 3x3, stride) + bn1 + relu -----------------------
    acc = jnp.zeros((rows, c), jnp.float32)
    for kh in range(KSIZE):
        for kw in range(KSIZE):
            acc = acc + jnp.dot(tap(kh, kw), w1_ref[kh * KSIZE + kw],
                                preferred_element_type=jnp.float32)
    y1 = jnp.maximum(acc + b1_ref[...], 0.0)

    # Stash y1 zero-padded in VMEM; conv2 reads its taps from this scratch.
    y1_ref[...] = jnp.zeros_like(y1_ref)
    y1_ref[:, PAD:PAD + ho, PAD:PAD + wo, :] = (
        y1.reshape(groups, ho, wo, c).astype(y1_ref.dtype))

    # ---- conv2 (BatchConv2d 3x3, stride 1) + bn2 ----------------------------
    acc2 = jnp.zeros((rows, c), jnp.float32)
    for kh in range(KSIZE):
        for kw in range(KSIZE):
            t = y1_ref[:, kh:kh + ho, kw:kw + wo, :].reshape(rows, c)
            acc2 = acc2 + jnp.dot(t, w2_ref[kh * KSIZE + kw],
                                  preferred_element_type=jnp.float32)
    y2 = acc2 + b2_ref[...]

    # ---- shortcut + residual + relu -----------------------------------------
    # The center tap of conv1 is exactly x[:, ::stride, ::stride, :] (raw input,
    # no r scaling), which is what the plain 1x1 shortcut conv / identity reads.
    center = tap(PAD, PAD)
    if proj:
        sc = jnp.dot(center, wsc_ref[...],
                     preferred_element_type=jnp.float32) + bsc_ref[...]
    else:
        sc = center.astype(jnp.float32)
    out_ref[0] = jnp.maximum(y2 + sc, 0.0)


# ---------------------------------------------------------------------------
# Wrapper: layout (halo/phase decomposition), parameter folding, pallas_call
# ---------------------------------------------------------------------------
def _phase_decompose(xpad, stride, hq, wq):
    """(N, Hp, Wp, C) padded input -> (N, stride*stride, Hq, Wq, C) phase grids.

    For stride 1 this is just the padded input; for stride s it splits the padded
    image into s*s subsampled grids so every conv tap is a contiguous static slice
    inside the kernel (no strided in-kernel loads, ~1x data volume).
    """
    phases = []
    for ph in range(stride):
        for pw in range(stride):
            p = xpad[:, ph::stride, pw::stride, :][:, :hq, :wq, :]
            dh, dw = hq - p.shape[1], wq - p.shape[2]
            if dh or dw:                      # pad to a uniform phase shape
                p = jnp.pad(p, ((0, 0), (0, dh), (0, dw), (0, 0)))
            phases.append(p)
    return jnp.stack(phases, axis=1)


def basic_block_forward(params, x_nchw, *, stride, num_estimators):
    # TODO(synk): BatchNorm2d is folded in eval mode (running statistics only).
    x = jnp.transpose(x_nchw, (0, 2, 3, 1)).astype(jnp.float32)     # NCHW -> NHWC
    n, h, w, cin = x.shape
    ne = num_estimators
    if n % ne:
        # TODO(synk): wrap-around remainder of repeat_interleave(r/s) when
        # batch % num_estimators != 0 is not supported by the fused kernel.
        raise ValueError("batch must be divisible by num_estimators")
    g = n // ne
    c = params["conv1"]["w"].shape[-1]                              # planes
    s = stride
    ho = (h + 2 * PAD - KSIZE) // s + 1
    wo = (w + 2 * PAD - KSIZE) // s + 1
    hq = ho + (KSIZE - 1) // s
    wq = wo + (KSIZE - 1) // s
    rows = g * ho * wo
    proj = (s != 1) or (cin != EXPANSION * c)

    # ---- layout: spatial pad + phase decomposition, grouped per estimator ----
    xpad = jnp.pad(x, ((0, 0), (PAD, PAD), (PAD, PAD), (0, 0)))
    xph = _phase_decompose(xpad, s, hq, wq)                 # (N, s*s, Hq, Wq, Cin)
    xph = xph.reshape(ne, g, s * s, hq, wq, cin).transpose(0, 2, 1, 3, 4, 5)
    xph = xph.reshape(ne * s * s * g, hq, wq, cin).astype(jnp.bfloat16)

    # ---- fold BatchEnsemble r/s and eval-mode BN scale into bf16 weights ----
    def fold(conv, bn):
        inv = bn["gamma"] * lax.rsqrt(bn["var"] + BN_EPS)           # (Cout,)
        wf = (conv["w"][None]                                       # (ne,KK,Cin,Cout)
              * conv["r"][:, None, :, None]
              * (conv["s"] * inv[None, :])[:, None, None, :])
        kk = conv["w"].shape[0]
        wf = wf.reshape(ne * kk, conv["w"].shape[1], -1).astype(jnp.bfloat16)
        bf = (bn["beta"] - bn["mean"] * inv).reshape(1, -1).astype(jnp.float32)
        return wf, bf

    w1f, b1f = fold(params["conv1"], params["bn1"])
    w2f, b2f = fold(params["conv2"], params["bn2"])

    in_specs = [
        pl.BlockSpec((s * s * g, hq, wq, cin), lambda e: (e, 0, 0, 0)),
        pl.BlockSpec((KSIZE * KSIZE, cin, c), lambda e: (e, 0, 0)),
        pl.BlockSpec((1, c), lambda e: (0, 0)),
        pl.BlockSpec((KSIZE * KSIZE, c, c), lambda e: (e, 0, 0)),
        pl.BlockSpec((1, c), lambda e: (0, 0)),
    ]
    args = [xph, w1f, b1f, w2f, b2f]
    if proj:
        inv = params["bn_sc"]["gamma"] * lax.rsqrt(params["bn_sc"]["var"] + BN_EPS)
        wscf = (params["conv_sc"]["w"] * inv[None, :]).astype(jnp.bfloat16)
        bscf = (params["bn_sc"]["beta"]
                - params["bn_sc"]["mean"] * inv).reshape(1, -1).astype(jnp.float32)
        in_specs += [pl.BlockSpec((cin, c), lambda e: (0, 0)),
                     pl.BlockSpec((1, c), lambda e: (0, 0))]
        args += [wscf, bscf]

    out = pl.pallas_call(
        functools.partial(_basic_block_kernel, stride=s, groups=g,
                          ho=ho, wo=wo, proj=proj),
        out_shape=jax.ShapeDtypeStruct((ne, rows, c), jnp.float32),
        grid=(ne,),
        in_specs=in_specs,
        out_specs=pl.BlockSpec((1, rows, c), lambda e: (e, 0, 0)),
        scratch_shapes=[pltpu.VMEM((g, ho + 2 * PAD, wo + 2 * PAD, c),
                                   jnp.bfloat16)],
        compiler_params=pltpu.CompilerParams(
            dimension_semantics=("parallel",)),
    )(*args)

    out = out.reshape(n, ho, wo, c)
    return jnp.transpose(out, (0, 3, 1, 2))                         # NHWC -> NCHW


# ---------------------------------------------------------------------------
# Deterministic synthetic parameters
# ---------------------------------------------------------------------------
def init_basic_block(key, in_planes, planes, stride, num_estimators):
    def bconv(k, kk, ci, co):
        kw_, kr, ks = jax.random.split(k, 3)
        return dict(
            w=jax.random.normal(kw_, (kk, ci, co), jnp.float32)
              / jnp.sqrt(float(kk * ci)),
            r=1.0 + 0.1 * jax.random.normal(kr, (num_estimators, ci), jnp.float32),
            s=1.0 + 0.1 * jax.random.normal(ks, (num_estimators, co), jnp.float32),
        )

    def bn(k, cc):
        k1, k2, k3, k4 = jax.random.split(k, 4)
        return dict(
            gamma=1.0 + 0.1 * jax.random.normal(k1, (cc,), jnp.float32),
            beta=0.1 * jax.random.normal(k2, (cc,), jnp.float32),
            mean=0.1 * jax.random.normal(k3, (cc,), jnp.float32),
            var=0.5 + jax.random.uniform(k4, (cc,), jnp.float32),
        )

    keys = jax.random.split(key, 6)
    params = {
        "conv1": bconv(keys[0], KSIZE * KSIZE, in_planes, planes),
        "bn1": bn(keys[1], planes),
        "conv2": bconv(keys[2], KSIZE * KSIZE, planes, planes),
        "bn2": bn(keys[3], planes),
    }
    if stride != 1 or in_planes != EXPANSION * planes:
        params["conv_sc"] = dict(
            w=jax.random.normal(keys[4], (in_planes, EXPANSION * planes),
                                jnp.float32) / jnp.sqrt(float(in_planes)))
        params["bn_sc"] = bn(keys[5], EXPANSION * planes)
    return params


# ---------------------------------------------------------------------------
# Pure-JAX reference (verification only)
# ---------------------------------------------------------------------------
def _ref_batch_conv(x, conv, stride, num_estimators):
    n, _, _, ci = x.shape
    g = n // num_estimators
    r = jnp.repeat(conv["r"], g, axis=0)
    sg = jnp.repeat(conv["s"], g, axis=0)
    w = conv["w"].reshape(KSIZE, KSIZE, ci, -1)
    y = lax.conv_general_dilated(
        x * r[:, None, None, :], w, (stride, stride),
        [(PAD, PAD), (PAD, PAD)], dimension_numbers=("NHWC", "HWIO", "NHWC"))
    return y * sg[:, None, None, :]


def _ref_bn(x, bn):
    inv = bn["gamma"] / jnp.sqrt(bn["var"] + BN_EPS)
    return x * inv + (bn["beta"] - bn["mean"] * inv)


def ref_basic_block(params, x_nchw, *, stride, num_estimators):
    x = jnp.transpose(x_nchw, (0, 2, 3, 1)).astype(jnp.float32)
    out = jax.nn.relu(_ref_bn(
        _ref_batch_conv(x, params["conv1"], stride, num_estimators), params["bn1"]))
    out = _ref_bn(
        _ref_batch_conv(out, params["conv2"], 1, num_estimators), params["bn2"])
    if "conv_sc" in params:
        w = params["conv_sc"]["w"][None, None]            # (1,1,Cin,C) HWIO
        sc = lax.conv_general_dilated(
            x, w, (stride, stride), [(0, 0), (0, 0)],
            dimension_numbers=("NHWC", "HWIO", "NHWC"))
        sc = _ref_bn(sc, params["bn_sc"])
    else:
        sc = x
    out = jax.nn.relu(out + sc)
    return jnp.transpose(out, (0, 3, 1, 2))


if __name__ == "__main__":
    key = jax.random.PRNGKey(0)
    ne = 4

    # Config 1: downsampling block (stride=2, 16 -> 32 planes, projection shortcut).
    n, in_planes, planes, hw, stride = 8, 16, 32, 16, 2
    kp, kx, key = jax.random.split(key, 3)
    params = init_basic_block(kp, in_planes, planes, stride, ne)
    x = jax.random.normal(kx, (n, in_planes, hw, hw), jnp.float32)
    out = jax.block_until_ready(
        basic_block_forward(params, x, stride=stride, num_estimators=ne))
    ref = jax.block_until_ready(
        ref_basic_block(params, x, stride=stride, num_estimators=ne))
    assert out.shape == (n, EXPANSION * planes, hw // stride, hw // stride), out.shape
    np.testing.assert_allclose(np.asarray(out), np.asarray(ref), rtol=5e-2, atol=5e-2)

    # Config 2: identity shortcut (stride=1, in_planes == planes).
    in2, planes2, stride2 = 32, 32, 1
    kp2, kx2 = jax.random.split(key)
    params2 = init_basic_block(kp2, in2, planes2, stride2, ne)
    x2 = jax.random.normal(kx2, (n, in2, hw, hw), jnp.float32)
    out2 = jax.block_until_ready(
        basic_block_forward(params2, x2, stride=stride2, num_estimators=ne))
    ref2 = jax.block_until_ready(
        ref_basic_block(params2, x2, stride=stride2, num_estimators=ne))
    assert out2.shape == (n, EXPANSION * planes2, hw, hw), out2.shape
    np.testing.assert_allclose(np.asarray(out2), np.asarray(ref2), rtol=5e-2, atol=5e-2)

    print("KERNEL_OK")
</pallas_src>

<mosaic_0001>
module attributes {stable_mosaic.version = 11 : i64} {
  func.func @_basic_block_kernel(%arg0: i32, %arg1: memref<8x9x9x16xbf16, #tpu.memory_space<vmem>>, %arg2: memref<9x16x32xbf16, #tpu.memory_space<vmem>>, %arg3: memref<1x32xf32, #tpu.memory_space<vmem>>, %arg4: memref<9x32x32xbf16, #tpu.memory_space<vmem>>, %arg5: memref<1x32xf32, #tpu.memory_space<vmem>>, %arg6: memref<16x32xbf16, #tpu.memory_space<vmem>>, %arg7: memref<1x32xf32, #tpu.memory_space<vmem>>, %arg8: memref<1x128x32xf32, #tpu.memory_space<vmem>>, %arg9: memref<2x10x10x32xbf16, #tpu.memory_space<vmem>>) attributes {dimension_semantics = [#tpu.dimension_semantics<parallel>], iteration_bounds = array<i64: 4>, scalar_prefetch = 0 : i64, scratch_operands = 1 : i64, tpu.core_type = #tpu.core_type<tc>, window_params = [{transform_indices = @transform_0, window_bounds = array<i64: 8, 9, 9, 16>}, {transform_indices = @transform_1, window_bounds = array<i64: 9, 16, 32>}, {pipeline_mode = #tpu.pipeline_mode<synchronous>, transform_indices = @transform_2, window_bounds = array<i64: 1, 32>}, {transform_indices = @transform_3, window_bounds = array<i64: 9, 32, 32>}, {pipeline_mode = #tpu.pipeline_mode<synchronous>, transform_indices = @transform_4, window_bounds = array<i64: 1, 32>}, {pipeline_mode = #tpu.pipeline_mode<synchronous>, transform_indices = @transform_5, window_bounds = array<i64: 16, 32>}, {pipeline_mode = #tpu.pipeline_mode<synchronous>, transform_indices = @transform_6, window_bounds = array<i64: 1, 32>}, {transform_indices = @transform_7, window_bounds = array<i64: 1, 128, 32>}]} {
    %cst = arith.constant 0.000000e+00 : f32
    %0 = vector.broadcast %cst : f32 to vector<128x32xf32>
    %c0 = arith.constant 0 : index
    %c0_0 = arith.constant 0 : index
    %c0_1 = arith.constant 0 : index
    %c0_2 = arith.constant 0 : index
    %1 = vector.load %arg1[%c0, %c0_0, %c0_1, %c0_2] : memref<8x9x9x16xbf16, #tpu.memory_space<vmem>>, vector<2x8x8x16xbf16>
    %2 = vector.shape_cast %1 : vector<2x8x8x16xbf16> to vector<128x16xbf16>
    %c0_3 = arith.constant 0 : index
    %c0_4 = arith.constant 0 : index
    %c0_5 = arith.constant 0 : index
    %3 = vector.load %arg2[%c0_3, %c0_4, %c0_5] : memref<9x16x32xbf16, #tpu.memory_space<vmem>>, vector<1x16x32xbf16>
    %4 = vector.shape_cast %3 : vector<1x16x32xbf16> to vector<16x32xbf16>
    %cst_6 = arith.constant dense<0.000000e+00> : vector<128x32xf32>
    %5 = tpu.matmul %2, %4, %cst_6 {dimension_numbers = #tpu.dot_dimension_numbers<[1], [0], [0], [1], [0, 0, 1, 1], [], []>} : vector<128x16xbf16>, vector<16x32xbf16>, vector<128x32xf32> -> vector<128x32xf32>
    %6 = arith.addf %0, %5 : vector<128x32xf32>
    %c2 = arith.constant 2 : index
    %c0_7 = arith.constant 0 : index
    %c0_8 = arith.constant 0 : index
    %c0_9 = arith.constant 0 : index
    %7 = vector.load %arg1[%c2, %c0_7, %c0_8, %c0_9] : memref<8x9x9x16xbf16, #tpu.memory_space<vmem>>, vector<2x8x8x16xbf16>
    %8 = vector.shape_cast %7 : vector<2x8x8x16xbf16> to vector<128x16xbf16>
    %c1 = arith.constant 1 : index
    %c0_10 = arith.constant 0 : index
    %c0_11 = arith.constant 0 : index
    %9 = vector.load %arg2[%c1, %c0_10, %c0_11] : memref<9x16x32xbf16, #tpu.memory_space<vmem>>, vector<1x16x32xbf16>
    %10 = vector.shape_cast %9 : vector<1x16x32xbf16> to vector<16x32xbf16>
    %cst_12 = arith.constant dense<0.000000e+00> : vector<128x32xf32>
    %11 = tpu.matmul %8, %10, %cst_12 {dimension_numbers = #tpu.dot_dimension_numbers<[1], [0], [0], [1], [0, 0, 1, 1], [], []>} : vector<128x16xbf16>, vector<16x32xbf16>, vector<128x32xf32> -> vector<128x32xf32>
    %12 = arith.addf %6, %11 : vector<128x32xf32>
    %c0_13 = arith.constant 0 : index
    %c0_14 = arith.constant 0 : index
    %c1_15 = arith.constant 1 : index
    %c0_16 = arith.constant 0 : index
    %13 = vector.load %arg1[%c0_13, %c0_14, %c1_15, %c0_16] : memref<8x9x9x16xbf16, #tpu.memory_space<vmem>>, vector<2x8x8x16xbf16>
    %14 = vector.shape_cast %13 : vector<2x8x8x16xbf16> to vector<128x16xbf16>
    %c2_17 = arith.constant 2 : index
    %c0_18 = arith.constant 0 : index
    %c0_19 = arith.constant 0 : index
    %15 = vector.load %arg2[%c2_17, %c0_18, %c0_19] : memref<9x16x32xbf16, #tpu.memory_space<vmem>>, vector<1x16x32xbf16>
    %16 = vector.shape_cast %15 : vector<1x16x32xbf16> to vector<16x32xbf16>
    %cst_20 = arith.constant dense<0.000000e+00> : vector<128x32xf32>
    %17 = tpu.matmul %14, %16, %cst_20 {dimension_numbers = #tpu.dot_dimension_numbers<[1], [0], [0], [1], [0, 0, 1, 1], [], []>} : vector<128x16xbf16>, vector<16x32xbf16>, vector<128x32xf32> -> vector<128x32xf32>
    %18 = arith.addf %12, %17 : vector<128x32xf32>
    %c4 = arith.constant 4 : index
    %c0_21 = arith.constant 0 : index
    %c0_22 = arith.constant 0 : index
    %c0_23 = arith.constant 0 : index
    %19 = vector.load %arg1[%c4, %c0_21, %c0_22, %c0_23] : memref<8x9x9x16xbf16, #tpu.memory_space<vmem>>, vector<2x8x8x16xbf16>
    %20 = vector.shape_cast %19 : vector<2x8x8x16xbf16> to vector<128x16xbf16>
    %c3 = arith.constant 3 : index
    %c0_24 = arith.constant 0 : index
    %c0_25 = arith.constant 0 : index
    %21 = vector.load %arg2[%c3, %c0_24, %c0_25] : memref<9x16x32xbf16, #tpu.memory_space<vmem>>, vector<1x16x32xbf16>
    %22 = vector.shape_cast %21 : vector<1x16x32xbf16> to vector<16x32xbf16>
    %cst_26 = arith.constant dense<0.000000e+00> : vector<128x32xf32>
    %23 = tpu.matmul %20, %22, %cst_26 {dimension_numbers = #tpu.dot_dimension_numbers<[1], [0], [0], [1], [0, 0, 1, 1], [], []>} : vector<128x16xbf16>, vector<16x32xbf16>, vector<128x32xf32> -> vector<128x32xf32>
    %24 = arith.addf %18, %23 : vector<128x32xf32>
    %c6 = arith.constant 6 : index
    %c0_27 = arith.constant 0 : index
    %c0_28 = arith.constant 0 : index
    %c0_29 = arith.constant 0 : index
    %25 = vector.load %arg1[%c6, %c0_27, %c0_28, %c0_29] : memref<8x9x9x16xbf16, #tpu.memory_space<vmem>>, vector<2x8x8x16xbf16>
    %26 = vector.shape_cast %25 : vector<2x8x8x16xbf16> to vector<128x16xbf16>
    %c4_30 = arith.constant 4 : index
    %c0_31 = arith.constant 0 : index
    %c0_32 = arith.constant 0 : index
    %27 = vector.load %arg2[%c4_30, %c0_31, %c0_32] : memref<9x16x32xbf16, #tpu.memory_space<vmem>>, vector<1x16x32xbf16>
    %28 = vector.shape_cast %27 : vector<1x16x32xbf16> to vector<16x32xbf16>
    %cst_33 = arith.constant dense<0.000000e+00> : vector<128x32xf32>
    %29 = tpu.matmul %26, %28, %cst_33 {dimension_numbers = #tpu.dot_dimension_numbers<[1], [0], [0], [1], [0, 0, 1, 1], [], []>} : vector<128x16xbf16>, vector<16x32xbf16>, vector<128x32xf32> -> vector<128x32xf32>
    %30 = arith.addf %24, %29 : vector<128x32xf32>
    %c4_34 = arith.constant 4 : index
    %c0_35 = arith.constant 0 : index
    %c1_36 = arith.constant 1 : index
    %c0_37 = arith.constant 0 : index
    %31 = vector.load %arg1[%c4_34, %c0_35, %c1_36, %c0_37] : memref<8x9x9x16xbf16, #tpu.memory_space<vmem>>, vector<2x8x8x16xbf16>
    %32 = vector.shape_cast %31 : vector<2x8x8x16xbf16> to vector<128x16xbf16>
    %c5 = arith.constant 5 : index
    %c0_38 = arith.constant 0 : index
    %c0_39 = arith.constant 0 : index
    %33 = vector.load %arg2[%c5, %c0_38, %c0_39] : memref<9x16x32xbf16, #tpu.memory_space<vmem>>, vector<1x16x32xbf16>
    %34 = vector.shape_cast %33 : vector<1x16x32xbf16> to vector<16x32xbf16>
    %cst_40 = arith.constant dense<0.000000e+00> : vector<128x32xf32>
    %35 = tpu.matmul %32, %34, %cst_40 {dimension_numbers = #tpu.dot_dimension_numbers<[1], [0], [0], [1], [0, 0, 1, 1], [], []>} : vector<128x16xbf16>, vector<16x32xbf16>, vector<128x32xf32> -> vector<128x32xf32>
    %36 = arith.addf %30, %35 : vector<128x32xf32>
    %c0_41 = arith.constant 0 : index
    %c1_42 = arith.constant 1 : index
    %c0_43 = arith.constant 0 : index
    %c0_44 = arith.constant 0 : index
    %37 = vector.load %arg1[%c0_41, %c1_42, %c0_43, %c0_44] : memref<8x9x9x16xbf16, #tpu.memory_space<vmem>>, vector<2x8x8x16xbf16>
    %38 = vector.shape_cast %37 : vector<2x8x8x16xbf16> to vector<128x16xbf16>
    %c6_45 = arith.constant 6 : index
    %c0_46 = arith.constant 0 : index
    %c0_47 = arith.constant 0 : index
    %39 = vector.load %arg2[%c6_45, %c0_46, %c0_47] : memref<9x16x32xbf16, #tpu.memory_space<vmem>>, vector<1x16x32xbf16>
    %40 = vector.shape_cast %39 : vector<1x16x32xbf16> to vector<16x32xbf16>
    %cst_48 = arith.constant dense<0.000000e+00> : vector<128x32xf32>
    %41 = tpu.matmul %38, %40, %cst_48 {dimension_numbers = #tpu.dot_dimension_numbers<[1], [0], [0], [1], [0, 0, 1, 1], [], []>} : vector<128x16xbf16>, vector<16x32xbf16>, vector<128x32xf32> -> vector<128x32xf32>
    %42 = arith.addf %36, %41 : vector<128x32xf32>
    %c2_49 = arith.constant 2 : index
    %c1_50 = arith.constant 1 : index
    %c0_51 = arith.constant 0 : index
    %c0_52 = arith.constant 0 : index
    %43 = vector.load %arg1[%c2_49, %c1_50, %c0_51, %c0_52] : memref<8x9x9x16xbf16, #tpu.memory_space<vmem>>, vector<2x8x8x16xbf16>
    %44 = vector.shape_cast %43 : vector<2x8x8x16xbf16> to vector<128x16xbf16>
    %c7 = arith.constant 7 : index
    %c0_53 = arith.constant 0 : index
    %c0_54 = arith.constant 0 : index
    %45 = vector.load %arg2[%c7, %c0_53, %c0_54] : memref<9x16x32xbf16, #tpu.memory_space<vmem>>, vector<1x16x32xbf16>
    %46 = vector.shape_cast %45 : vector<1x16x32xbf16> to vector<16x32xbf16>
    %cst_55 = arith.constant dense<0.000000e+00> : vector<128x32xf32>
    %47 = tpu.matmul %44, %46, %cst_55 {dimension_numbers = #tpu.dot_dimension_numbers<[1], [0], [0], [1], [0, 0, 1, 1], [], []>} : vector<128x16xbf16>, vector<16x32xbf16>, vector<128x32xf32> -> vector<128x32xf32>
    %48 = arith.addf %42, %47 : vector<128x32xf32>
    %c0_56 = arith.constant 0 : index
    %c1_57 = arith.constant 1 : index
    %c1_58 = arith.constant 1 : index
    %c0_59 = arith.constant 0 : index
    %49 = vector.load %arg1[%c0_56, %c1_57, %c1_58, %c0_59] : memref<8x9x9x16xbf16, #tpu.memory_space<vmem>>, vector<2x8x8x16xbf16>
    %50 = vector.shape_cast %49 : vector<2x8x8x16xbf16> to vector<128x16xbf16>
    %c8 = arith.constant 8 : index
    %c0_60 = arith.constant 0 : index
    %c0_61 = arith.constant 0 : index
    %51 = vector.load %arg2[%c8, %c0_60, %c0_61] : memref<9x16x32xbf16, #tpu.memory_space<vmem>>, vector<1x16x32xbf16>
    %52 = vector.shape_cast %51 : vector<1x16x32xbf16> to vector<16x32xbf16>
    %cst_62 = arith.constant dense<0.000000e+00> : vector<128x32xf32>
    %53 = tpu.matmul %50, %52, %cst_62 {dimension_numbers = #tpu.dot_dimension_numbers<[1], [0], [0], [1], [0, 0, 1, 1], [], []>} : vector<128x16xbf16>, vector<16x32xbf16>, vector<128x32xf32> -> vector<128x32xf32>
    %54 = arith.addf %48, %53 : vector<128x32xf32>
    %c0_63 = arith.constant 0 : index
    %c0_64 = arith.constant 0 : index
    %55 = vector.load %arg3[%c0_63, %c0_64] : memref<1x32xf32, #tpu.memory_space<vmem>>, vector<1x32xf32>
    %56 = vector.broadcast %55 : vector<1x32xf32> to vector<128x32xf32>
    %57 = arith.addf %54, %56 : vector<128x32xf32>
    %cst_65 = arith.constant 0.000000e+00 : f32
    %58 = vector.broadcast %cst_65 : f32 to vector<128x32xf32>
    %59 = arith.maximumf %57, %58 : vector<128x32xf32>
    %cst_66 = arith.constant 0.000000e+00 : bf16
    %60 = vector.broadcast %cst_66 : bf16 to vector<2x10x10x32xbf16>
    %c0_67 = arith.constant 0 : index
    %c0_68 = arith.constant 0 : index
    %c0_69 = arith.constant 0 : index
    %c0_70 = arith.constant 0 : index
    %61 = vector.load %arg9[%c0_67, %c0_68, %c0_69, %c0_70] : memref<2x10x10x32xbf16, #tpu.memory_space<vmem>>, vector<2x10x10x32xbf16>
    tpu.vector_store %arg9[%c0_67, %c0_68, %c0_69, %c0_70], %60 {strides = array<i32>} : memref<2x10x10x32xbf16, #tpu.memory_space<vmem>>, vector<2x10x10x32xbf16>,
    %62 = vector.shape_cast %59 : vector<128x32xf32> to vector<2x8x8x32xf32>
    %63 = arith.truncf %62 : vector<2x8x8x32xf32> to vector<2x8x8x32xbf16>
    %c0_71 = arith.constant 0 : index
    %c1_72 = arith.constant 1 : index
    %c1_73 = arith.constant 1 : index
    %c0_74 = arith.constant 0 : index
    %64 = vector.load %arg9[%c0_71, %c1_72, %c1_73, %c0_74] : memref<2x10x10x32xbf16, #tpu.memory_space<vmem>>, vector<2x8x8x32xbf16>
    tpu.vector_store %arg9[%c0_71, %c1_72, %c1_73, %c0_74], %63 {strides = array<i32>} : memref<2x10x10x32xbf16, #tpu.memory_space<vmem>>, vector<2x8x8x32xbf16>,
    %cst_75 = arith.constant 0.000000e+00 : f32
    %65 = vector.broadcast %cst_75 : f32 to vector<128x32xf32>
    %c0_76 = arith.constant 0 : index
    %c0_77 = arith.constant 0 : index
    %c0_78 = arith.constant 0 : index
    %c0_79 = arith.constant 0 : index
    %66 = vector.load %arg9[%c0_76, %c0_77, %c0_78, %c0_79] : memref<2x10x10x32xbf16, #tpu.memory_space<vmem>>, vector<2x8x8x32xbf16>
    %67 = vector.shape_cast %66 : vector<2x8x8x32xbf16> to vector<128x32xbf16>
    %c0_80 = arith.constant 0 : index
    %c0_81 = arith.constant 0 : index
    %c0_82 = arith.constant 0 : index
    %68 = vector.load %arg4[%c0_80, %c0_81, %c0_82] : memref<9x32x32xbf16, #tpu.memory_space<vmem>>, vector<1x32x32xbf16>
    %69 = vector.shape_cast %68 : vector<1x32x32xbf16> to vector<32x32xbf16>
    %cst_83 = arith.constant dense<0.000000e+00> : vector<128x32xf32>
    %70 = tpu.matmul %67, %69, %cst_83 {dimension_numbers = #tpu.dot_dimension_numbers<[1], [0], [0], [1], [0, 0, 1, 1], [], []>} : vector<128x32xbf16>, vector<32x32xbf16>, vector<128x32xf32> -> vector<128x32xf32>
    %71 = arith.addf %65, %70 : vector<128x32xf32>
    %c0_84 = arith.constant 0 : index
    %c0_85 = arith.constant 0 : index
    %c1_86 = arith.constant 1 : index
    %c0_87 = arith.constant 0 : index
    %72 = vector.load %arg9[%c0_84, %c0_85, %c1_86, %c0_87] : memref<2x10x10x32xbf16, #tpu.memory_space<vmem>>, vector<2x8x8x32xbf16>
    %73 = vector.shape_cast %72 : vector<2x8x8x32xbf16> to vector<128x32xbf16>
    %c1_88 = arith.constant 1 : index
    %c0_89 = arith.constant 0 : index
    %c0_90 = arith.constant 0 : index
    %74 = vector.load %arg4[%c1_88, %c0_89, %c0_90] : memref<9x32x32xbf16, #tpu.memory_space<vmem>>, vector<1x32x32xbf16>
    %75 = vector.shape_cast %74 : vector<1x32x32xbf16> to vector<32x32xbf16>
    %cst_91 = arith.constant dense<0.000000e+00> : vector<128x32xf32>
    %76 = tpu.matmul %73, %75, %cst_91 {dimension_numbers = #tpu.dot_dimension_numbers<[1], [0], [0], [1], [0, 0, 1, 1], [], []>} : vector<128x32xbf16>, vector<32x32xbf16>, vector<128x32xf32> -> vector<128x32xf32>
    %77 = arith.addf %71, %76 : vector<128x32xf32>
    %c0_92 = arith.constant 0 : index
    %c0_93 = arith.constant 0 : index
    %c2_94 = arith.constant 2 : index
    %c0_95 = arith.constant 0 : index
    %78 = vector.load %arg9[%c0_92, %c0_93, %c2_94, %c0_95] : memref<2x10x10x32xbf16, #tpu.memory_space<vmem>>, vector<2x8x8x32xbf16>
    %79 = vector.shape_cast %78 : vector<2x8x8x32xbf16> to vector<128x32xbf16>
    %c2_96 = arith.constant 2 : index
    %c0_97 = arith.constant 0 : index
    %c0_98 = arith.constant 0 : index
    %80 = vector.load %arg4[%c2_96, %c0_97, %c0_98] : memref<9x32x32xbf16, #tpu.memory_space<vmem>>, vector<1x32x32xbf16>
    %81 = vector.shape_cast %80 : vector<1x32x32xbf16> to vector<32x32xbf16>
    %cst_99 = arith.constant dense<0.000000e+00> : vector<128x32xf32>
    %82 = tpu.matmul %79, %81, %cst_99 {dimension_numbers = #tpu.dot_dimension_numbers<[1], [0], [0], [1], [0, 0, 1, 1], [], []>} : vector<128x32xbf16>, vector<32x32xbf16>, vector<128x32xf32> -> vector<128x32xf32>
    %83 = arith.addf %77, %82 : vector<128x32xf32>
    %c0_100 = arith.constant 0 : index
    %c1_101 = arith.constant 1 : index
    %c0_102 = arith.constant 0 : index
    %c0_103 = arith.constant 0 : index
    %84 = vector.load %arg9[%c0_100, %c1_101, %c0_102, %c0_103] : memref<2x10x10x32xbf16, #tpu.memory_space<vmem>>, vector<2x8x8x32xbf16>
    %85 = vector.shape_cast %84 : vector<2x8x8x32xbf16> to vector<128x32xbf16>
    %c3_104 = arith.constant 3 : index
    %c0_105 = arith.constant 0 : index
    %c0_106 = arith.constant 0 : index
    %86 = vector.load %arg4[%c3_104, %c0_105, %c0_106] : memref<9x32x32xbf16, #tpu.memory_space<vmem>>, vector<1x32x32xbf16>
    %87 = vector.shape_cast %86 : vector<1x32x32xbf16> to vector<32x32xbf16>
    %cst_107 = arith.constant dense<0.000000e+00> : vector<128x32xf32>
    %88 = tpu.matmul %85, %87, %cst_107 {dimension_numbers = #tpu.dot_dimension_numbers<[1], [0], [0], [1], [0, 0, 1, 1], [], []>} : vector<128x32xbf16>, vector<32x32xbf16>, vector<128x32xf32> -> vector<128x32xf32>
    %89 = arith.addf %83, %88 : vector<128x32xf32>
    %c0_108 = arith.constant 0 : index
    %c1_109 = arith.constant 1 : index
    %c1_110 = arith.constant 1 : index
    %c0_111 = arith.constant 0 : index
    %90 = vector.load %arg9[%c0_108, %c1_109, %c1_110, %c0_111] : memref<2x10x10x32xbf16, #tpu.memory_space<vmem>>, vector<2x8x8x32xbf16>
    %91 = vector.shape_cast %90 : vector<2x8x8x32xbf16> to vector<128x32xbf16>
    %c4_112 = arith.constant 4 : index
    %c0_113 = arith.constant 0 : index
    %c0_114 = arith.constant 0 : index
    %92 = vector.load %arg4[%c4_112, %c0_113, %c0_114] : memref<9x32x32xbf16, #tpu.memory_space<vmem>>, vector<1x32x32xbf16>
    %93 = vector.shape_cast %92 : vector<1x32x32xbf16> to vector<32x32xbf16>
    %cst_115 = arith.constant dense<0.000000e+00> : vector<128x32xf32>
    %94 = tpu.matmul %91, %93, %cst_115 {dimension_numbers = #tpu.dot_dimension_numbers<[1], [0], [0], [1], [0, 0, 1, 1], [], []>} : vector<128x32xbf16>, vector<32x32xbf16>, vector<128x32xf32> -> vector<128x32xf32>
    %95 = arith.addf %89, %94 : vector<128x32xf32>
    %c0_116 = arith.constant 0 : index
    %c1_117 = arith.constant 1 : index
    %c2_118 = arith.constant 2 : index
    %c0_119 = arith.constant 0 : index
    %96 = vector.load %arg9[%c0_116, %c1_117, %c2_118, %c0_119] : memref<2x10x10x32xbf16, #tpu.memory_space<vmem>>, vector<2x8x8x32xbf16>
    %97 = vector.shape_cast %96 : vector<2x8x8x32xbf16> to vector<128x32xbf16>
    %c5_120 = arith.constant 5 : index
    %c0_121 = arith.constant 0 : index
    %c0_122 = arith.constant 0 : index
    %98 = vector.load %arg4[%c5_120, %c0_121, %c0_122] : memref<9x32x32xbf16, #tpu.memory_space<vmem>>, vector<1x32x32xbf16>
    %99 = vector.shape_cast %98 : vector<1x32x32xbf16> to vector<32x32xbf16>
    %cst_123 = arith.constant dense<0.000000e+00> : vector<128x32xf32>
    %100 = tpu.matmul %97, %99, %cst_123 {dimension_numbers = #tpu.dot_dimension_numbers<[1], [0], [0], [1], [0, 0, 1, 1], [], []>} : vector<128x32xbf16>, vector<32x32xbf16>, vector<128x32xf32> -> vector<128x32xf32>
    %101 = arith.addf %95, %100 : vector<128x32xf32>
    %c0_124 = arith.constant 0 : index
    %c2_125 = arith.constant 2 : index
    %c0_126 = arith.constant 0 : index
    %c0_127 = arith.constant 0 : index
    %102 = vector.load %arg9[%c0_124, %c2_125, %c0_126, %c0_127] : memref<2x10x10x32xbf16, #tpu.memory_space<vmem>>, vector<2x8x8x32xbf16>
    %103 = vector.shape_cast %102 : vector<2x8x8x32xbf16> to vector<128x32xbf16>
    %c6_128 = arith.constant 6 : index
    %c0_129 = arith.constant 0 : index
    %c0_130 = arith.constant 0 : index
    %104 = vector.load %arg4[%c6_128, %c0_129, %c0_130] : memref<9x32x32xbf16, #tpu.memory_space<vmem>>, vector<1x32x32xbf16>
    %105 = vector.shape_cast %104 : vector<1x32x32xbf16> to vector<32x32xbf16>
    %cst_131 = arith.constant dense<0.000000e+00> : vector<128x32xf32>
    %106 = tpu.matmul %103, %105, %cst_131 {dimension_numbers = #tpu.dot_dimension_numbers<[1], [0], [0], [1], [0, 0, 1, 1], [], []>} : vector<128x32xbf16>, vector<32x32xbf16>, vector<128x32xf32> -> vector<128x32xf32>
    %107 = arith.addf %101, %106 : vector<128x32xf32>
    %c0_132 = arith.constant 0 : index
    %c2_133 = arith.constant 2 : index
    %c1_134 = arith.constant 1 : index
    %c0_135 = arith.constant 0 : index
    %108 = vector.load %arg9[%c0_132, %c2_133, %c1_134, %c0_135] : memref<2x10x10x32xbf16, #tpu.memory_space<vmem>>, vector<2x8x8x32xbf16>
    %109 = vector.shape_cast %108 : vector<2x8x8x32xbf16> to vector<128x32xbf16>
    %c7_136 = arith.constant 7 : index
    %c0_137 = arith.constant 0 : index
    %c0_138 = arith.constant 0 : index
    %110 = vector.load %arg4[%c7_136, %c0_137, %c0_138] : memref<9x32x32xbf16, #tpu.memory_space<vmem>>, vector<1x32x32xbf16>
    %111 = vector.shape_cast %110 : vector<1x32x32xbf16> to vector<32x32xbf16>
    %cst_139 = arith.constant dense<0.000000e+00> : vector<128x32xf32>
    %112 = tpu.matmul %109, %111, %cst_139 {dimension_numbers = #tpu.dot_dimension_numbers<[1], [0], [0], [1], [0, 0, 1, 1], [], []>} : vector<128x32xbf16>, vector<32x32xbf16>, vector<128x32xf32> -> vector<128x32xf32>
    %113 = arith.addf %107, %112 : vector<128x32xf32>
    %c0_140 = arith.constant 0 : index
    %c2_141 = arith.constant 2 : index
    %c2_142 = arith.constant 2 : index
    %c0_143 = arith.constant 0 : index
    %114 = vector.load %arg9[%c0_140, %c2_141, %c2_142, %c0_143] : memref<2x10x10x32xbf16, #tpu.memory_space<vmem>>, vector<2x8x8x32xbf16>
    %115 = vector.shape_cast %114 : vector<2x8x8x32xbf16> to vector<128x32xbf16>
    %c8_144 = arith.constant 8 : index
    %c0_145 = arith.constant 0 : index
    %c0_146 = arith.constant 0 : index
    %116 = vector.load %arg4[%c8_144, %c0_145, %c0_146] : memref<9x32x32xbf16, #tpu.memory_space<vmem>>, vector<1x32x32xbf16>
    %117 = vector.shape_cast %116 : vector<1x32x32xbf16> to vector<32x32xbf16>
    %cst_147 = arith.constant dense<0.000000e+00> : vector<128x32xf32>
    %118 = tpu.matmul %115, %117, %cst_147 {dimension_numbers = #tpu.dot_dimension_numbers<[1], [0], [0], [1], [0, 0, 1, 1], [], []>} : vector<128x32xbf16>, vector<32x32xbf16>, vector<128x32xf32> -> vector<128x32xf32>
    %119 = arith.addf %113, %118 : vector<128x32xf32>
    %c0_148 = arith.constant 0 : index
    %c0_149 = arith.constant 0 : index
    %120 = vector.load %arg5[%c0_148, %c0_149] : memref<1x32xf32, #tpu.memory_space<vmem>>, vector<1x32xf32>
    %121 = vector.broadcast %120 : vector<1x32xf32> to vector<128x32xf32>
    %122 = arith.addf %119, %121 : vector<128x32xf32>
    %c6_150 = arith.constant 6 : index
    %c0_151 = arith.constant 0 : index
    %c0_152 = arith.constant 0 : index
    %c0_153 = arith.constant 0 : index
    %123 = vector.load %arg1[%c6_150, %c0_151, %c0_152, %c0_153] : memref<8x9x9x16xbf16, #tpu.memory_space<vmem>>, vector<2x8x8x16xbf16>
    %124 = vector.shape_cast %123 : vector<2x8x8x16xbf16> to vector<128x16xbf16>
    %c0_154 = arith.constant 0 : index
    %c0_155 = arith.constant 0 : index
    %125 = vector.load %arg6[%c0_154, %c0_155] : memref<16x32xbf16, #tpu.memory_space<vmem>>, vector<16x32xbf16>
    %cst_156 = arith.constant dense<0.000000e+00> : vector<128x32xf32>
    %126 = tpu.matmul %124, %125, %cst_156 {dimension_numbers = #tpu.dot_dimension_numbers<[1], [0], [0], [1], [0, 0, 1, 1], [], []>} : vector<128x16xbf16>, vector<16x32xbf16>, vector<128x32xf32> -> vector<128x32xf32>
    %c0_157 = arith.constant 0 : index
    %c0_158 = arith.constant 0 : index
    %127 = vector.load %arg7[%c0_157, %c0_158] : memref<1x32xf32, #tpu.memory_space<vmem>>, vector<1x32xf32>
    %128 = vector.broadcast %127 : vector<1x32xf32> to vector<128x32xf32>
    %129 = arith.addf %126, %128 : vector<128x32xf32>
    %130 = arith.addf %122, %129 : vector<128x32xf32>
    %cst_159 = arith.constant 0.000000e+00 : f32
    %131 = vector.broadcast %cst_159 : f32 to vector<128x32xf32>
    %132 = arith.maximumf %130, %131 : vector<128x32xf32>
    %c0_160 = arith.constant 0 : index
    %c0_161 = arith.constant 0 : index
    %c0_162 = arith.constant 0 : index
    %133 = vector.load %arg8[%c0_160, %c0_161, %c0_162] : memref<1x128x32xf32, #tpu.memory_space<vmem>>, vector<1x128x32xf32>
    %134 = vector.shape_cast %133 : vector<1x128x32xf32> to vector<128x32xf32>
    %135 = vector.shape_cast %132 : vector<128x32xf32> to vector<1x128x32xf32>
    tpu.vector_store %arg8[%c0_160, %c0_161, %c0_162], %135 {strides = array<i32>} : memref<1x128x32xf32, #tpu.memory_space<vmem>>, vector<1x128x32xf32>,
    return
  }
  func.func @transform_0(%arg0: i32) -> (i32, i32, i32, i32) {
    %c0_i32 = arith.constant 0 : i32
    %c0_i32_0 = arith.constant 0 : i32
    %c0_i32_1 = arith.constant 0 : i32
    %c0_i32_2 = arith.constant 0 : i32
    return %arg0, %c0_i32, %c0_i32_0, %c0_i32_1 : i32, i32, i32, i32
  }
  func.func @transform_1(%arg0: i32) -> (i32, i32, i32) {
    %c0_i32 = arith.constant 0 : i32
    %c0_i32_0 = arith.constant 0 : i32
    %c0_i32_1 = arith.constant 0 : i32
    return %arg0, %c0_i32, %c0_i32_0 : i32, i32, i32
  }
  func.func @transform_2(%arg0: i32) -> (i32, i32) {
    %c0_i32 = arith.constant 0 : i32
    %c0_i32_0 = arith.constant 0 : i32
    %c0_i32_1 = arith.constant 0 : i32
    return %c0_i32, %c0_i32_0 : i32, i32
  }
  func.func @transform_3(%arg0: i32) -> (i32, i32, i32) {
    %c0_i32 = arith.constant 0 : i32
    %c0_i32_0 = arith.constant 0 : i32
    %c0_i32_1 = arith.constant 0 : i32
    return %arg0, %c0_i32, %c0_i32_0 : i32, i32, i32
  }
  func.func @transform_4(%arg0: i32) -> (i32, i32) {
    %c0_i32 = arith.constant 0 : i32
    %c0_i32_0 = arith.constant 0 : i32
    %c0_i32_1 = arith.constant 0 : i32
    return %c0_i32, %c0_i32_0 : i32, i32
  }
  func.func @transform_5(%arg0: i32) -> (i32, i32) {
    %c0_i32 = arith.constant 0 : i32
    %c0_i32_0 = arith.constant 0 : i32
    %c0_i32_1 = arith.constant 0 : i32
    return %c0_i32, %c0_i32_0 : i32, i32
  }
  func.func @transform_6(%arg0: i32) -> (i32, i32) {
    %c0_i32 = arith.constant 0 : i32
    %c0_i32_0 = arith.constant 0 : i32
    %c0_i32_1 = arith.constant 0 : i32
    return %c0_i32, %c0_i32_0 : i32, i32
  }
  func.func @transform_7(%arg0: i32) -> (i32, i32, i32) {
    %c0_i32 = arith.constant 0 : i32
    %c0_i32_0 = arith.constant 0 : i32
    %c0_i32_1 = arith.constant 0 : i32
    return %arg0, %c0_i32, %c0_i32_0 : i32, i32, i32
  }
}

</mosaic_0001>

<llo_original>
// kernel: tpu_custom_call.1
$region0: #{tpu_custom_call.1}
  #allocation0 [shape = 'u32[]', space=smem, size = 0x4, offset = 0x4, fixed_abs, tag = 'smem constant byte address 0x4 - core index']
  #allocation1 [shape = 'u32[144,128]{1,0:T(1,128)}', space=vmem, size = 0x12000, scoped, tag = 'internal scratch']
  #allocation2 [shape = 'bf16[2,10,10,32]{3,2,1,0:T(8,128)(2,1)}', space=vmem, size = 0x14000, scoped, tag = 'scratch operand']
  %s0 = inlined_call_operand.vmem [shape: bf16[32,9,9,16], index: 0, kind: input, shape index: {}]
  %s1 = inlined_call_operand.vmem [shape: bf16[36,16,32], index: 1, kind: input, shape index: {}]
  %s2 = inlined_call_operand.vmem [shape: f32[1,32], index: 2, kind: input, shape index: {}]
  %s3 = inlined_call_operand.vmem [shape: bf16[36,32,32], index: 3, kind: input, shape index: {}]
  %s4 = inlined_call_operand.vmem [shape: f32[1,32], index: 4, kind: input, shape index: {}]
  %s5 = inlined_call_operand.vmem [shape: bf16[16,32], index: 5, kind: input, shape index: {}]
  %s6 = inlined_call_operand.vmem [shape: f32[1,32], index: 6, kind: input, shape index: {}]
  %s7 = inlined_call_operand.vmem [shape: f32[4,128,32], index: 7, kind: output, shape index: {}]
  %s8 = sld [smem:[#allocation0]]
  $region61: #{tpu_custom_call.1} parent=0
    _
  %s10 = ssub.s32 1, %s8
  %s11 = scalar_select 0, %s10, %s8
  loop: start=0, step=1, limit=6
  $region2: #{tpu_custom_call.1} parent=0 // loop_pre_header
    _
  $region3: #{tpu_custom_call.1} parent=0 // loop_header
    %s13 = sphi 0, %s17
    %p14 = scmp.ge.s32.totalorder %s13, 6
    %s23 = sphi 0, %s25
    %s26 = sphi 0, %s23
    %s27 = sphi 0, %s26
    %s43 = sphi 0, %s27
    %s49 = sphi 0, %s51
    %s52 = sphi 0, %s49
    %s53 = sphi 0, %s52
    %s69 = sphi 0, %s53
    %s73 = sphi 0, %s73
    %s75 = sphi 0, %s73
    %s76 = sphi 0, %s75
    %s90 = sphi 0, %s76
    %s96 = sphi 0, %s98
    %s99 = sphi 0, %s96
    %s100 = sphi 0, %s99
    %s116 = sphi 0, %s100
    %s120 = sphi 0, %s120
    %s122 = sphi 0, %s120
    %s123 = sphi 0, %s122
    %s137 = sphi 0, %s123
    %s141 = sphi 0, %s141
    %s143 = sphi 0, %s141
    %s144 = sphi 0, %s143
    %s158 = sphi 0, %s144
    %s162 = sphi 0, %s162
    %s164 = sphi 0, %s162
    %s165 = sphi 0, %s164
    %s179 = sphi 0, %s165
    %s185 = sphi 0, %s187
    %s188 = sphi 0, %s185
    %s189 = sphi 0, %s188
    %s205 = sphi 0, %s189
  $region4: #{tpu_custom_call.1} parent=0 // loop_header_branch
    %16 = sbr.rel (%p14) target = $region8
  $region5: #{tpu_custom_call.1} parent=0 // loop_body
    %s18 = ssub.s32 %s13, 1
    %s19 = ssub.s32 %s13, 2
    %s20 = sadd.s32 %s13, 1
    %s21 = ssub.s32 %s13, %s20
    %p22 = scmp.eq.s32.totalorder %s21, 0
    %s24 = sadd.s32 %s23, 1
    %s25 = scalar_select %p22, %s23, %s24
    %p28 = pneg %p22
    %p29 = scmp.eq.s32.totalorder %s13, 3
    %p30 = por %p28, %p29
    %p31 = scmp.ne.s32.totalorder %s23, %s26
    %p32 = scmp.eq.s32.totalorder %s13, 0
    %p33 = por %p31, %p32
    %p34 = scmp.ne.s32.totalorder %s23, %s26
    %p35 = scmp.eq.s32.totalorder %s18, 3
    %p36 = por %p34, %p35
    %p37 = scmp.ne.s32.totalorder %s26, %s27
    %p38 = scmp.eq.s32.totalorder %s18, 0
    %p39 = por %p37, %p38
    %p40 = scmp.ne.s32.totalorder %s26, %s27
    %p41 = scmp.eq.s32.totalorder %s19, 3
    %p42 = por %p40, %p41
    %p44 = scmp.ne.s32.totalorder %s27, %s43
    %p45 = scmp.eq.s32.totalorder %s19, 0
    %p46 = por %p44, %p45
    %s47 = ssub.s32 %s13, %s20
    %p48 = scmp.eq.s32.totalorder %s47, 0
    %s50 = sadd.s32 %s49, 1
    %s51 = scalar_select %p48, %s49, %s50
    %p54 = pneg %p48
    %p55 = scmp.eq.s32.totalorder %s13, 3
    %p56 = por %p54, %p55
    %p57 = scmp.ne.s32.totalorder %s49, %s52
    %p58 = scmp.eq.s32.totalorder %s13, 0
    %p59 = por %p57, %p58
    %p60 = scmp.ne.s32.totalorder %s49, %s52
    %p61 = scmp.eq.s32.totalorder %s18, 3
    %p62 = por %p60, %p61
    %p63 = scmp.ne.s32.totalorder %s52, %s53
    %p64 = scmp.eq.s32.totalorder %s18, 0
    %p65 = por %p63, %p64
    %p66 = scmp.ne.s32.totalorder %s52, %s53
    %p67 = scmp.eq.s32.totalorder %s19, 3
    %p68 = por %p66, %p67
    %p70 = scmp.ne.s32.totalorder %s53, %s69
    %p71 = scmp.eq.s32.totalorder %s19, 0
    %p72 = por %p70, %p71
    %s74 = sadd.s32 %s73, 1
    %p77 = scmp.eq.s32.totalorder %s13, 3
    %p78 = scmp.ne.s32.totalorder %s73, %s75
    %p79 = scmp.eq.s32.totalorder %s13, 0
    %p80 = por %p78, %p79
    %p81 = scmp.ne.s32.totalorder %s73, %s75
    %p82 = scmp.eq.s32.totalorder %s18, 3
    %p83 = por %p81, %p82
    %p84 = scmp.ne.s32.totalorder %s75, %s76
    %p85 = scmp.eq.s32.totalorder %s18, 0
    %p86 = por %p84, %p85
    %p87 = scmp.ne.s32.totalorder %s75, %s76
    %p88 = scmp.eq.s32.totalorder %s19, 3
    %p89 = por %p87, %p88
    %p91 = scmp.ne.s32.totalorder %s76, %s90
    %p92 = scmp.eq.s32.totalorder %s19, 0
    %p93 = por %p91, %p92
    %s94 = ssub.s32 %s13, %s20
    %p95 = scmp.eq.s32.totalorder %s94, 0
    %s97 = sadd.s32 %s96, 1
    %s98 = scalar_select %p95, %s96, %s97
    %p101 = pneg %p95
    %p102 = scmp.eq.s32.totalorder %s13, 3
    %p103 = por %p101, %p102
    %p104 = scmp.ne.s32.totalorder %s96, %s99
    %p105 = scmp.eq.s32.totalorder %s13, 0
    %p106 = por %p104, %p105
    %p107 = scmp.ne.s32.totalorder %s96, %s99
    %p108 = scmp.eq.s32.totalorder %s18, 3
    %p109 = por %p107, %p108
    %p110 = scmp.ne.s32.totalorder %s99, %s100
    %p111 = scmp.eq.s32.totalorder %s18, 0
    %p112 = por %p110, %p111
    %p113 = scmp.ne.s32.totalorder %s99, %s100
    %p114 = scmp.eq.s32.totalorder %s19, 3
    %p115 = por %p113, %p114
    %p117 = scmp.ne.s32.totalorder %s100, %s116
    %p118 = scmp.eq.s32.totalorder %s19, 0
    %p119 = por %p117, %p118
    %s121 = sadd.s32 %s120, 1
    %p124 = scmp.eq.s32.totalorder %s13, 3
    %p125 = scmp.ne.s32.totalorder %s120, %s122
    %p126 = scmp.eq.s32.totalorder %s13, 0
    %p127 = por %p125, %p126
    %p128 = scmp.ne.s32.totalorder %s120, %s122
    %p129 = scmp.eq.s32.totalorder %s18, 3
    %p130 = por %p128, %p129
    %p131 = scmp.ne.s32.totalorder %s122, %s123
    %p132 = scmp.eq.s32.totalorder %s18, 0
    %p133 = por %p131, %p132
    %p134 = scmp.ne.s32.totalorder %s122, %s123
    %p135 = scmp.eq.s32.totalorder %s19, 3
    %p136 = por %p134, %p135
    %p138 = scmp.ne.s32.totalorder %s123, %s137
    %p139 = scmp.eq.s32.totalorder %s19, 0
    %p140 = por %p138, %p139
    %s142 = sadd.s32 %s141, 1
    %p145 = scmp.eq.s32.totalorder %s13, 3
    %p146 = scmp.ne.s32.totalorder %s141, %s143
    %p147 = scmp.eq.s32.totalorder %s13, 0
    %p148 = por %p146, %p147
    %p149 = scmp.ne.s32.totalorder %s141, %s143
    %p150 = scmp.eq.s32.totalorder %s18, 3
    %p151 = por %p149, %p150
    %p152 = scmp.ne.s32.totalorder %s143, %s144
    %p153 = scmp.eq.s32.totalorder %s18, 0
    %p154 = por %p152, %p153
    %p155 = scmp.ne.s32.totalorder %s143, %s144
    %p156 = scmp.eq.s32.totalorder %s19, 3
    %p157 = por %p155, %p156
    %p159 = scmp.ne.s32.totalorder %s144, %s158
    %p160 = scmp.eq.s32.totalorder %s19, 0
    %p161 = por %p159, %p160
    %s163 = sadd.s32 %s162, 1
    %p166 = scmp.eq.s32.totalorder %s13, 3
    %p167 = scmp.ne.s32.totalorder %s162, %s164
    %p168 = scmp.eq.s32.totalorder %s13, 0
    %p169 = por %p167, %p168
    %p170 = scmp.ne.s32.totalorder %s162, %s164
    %p171 = scmp.eq.s32.totalorder %s18, 3
    %p172 = por %p170, %p171
    %p173 = scmp.ne.s32.totalorder %s164, %s165
    %p174 = scmp.eq.s32.totalorder %s18, 0
    %p175 = por %p173, %p174
    %p176 = scmp.ne.s32.totalorder %s164, %s165
    %p177 = scmp.eq.s32.totalorder %s19, 3
    %p178 = por %p176, %p177
    %p180 = scmp.ne.s32.totalorder %s165, %s179
    %p181 = scmp.eq.s32.totalorder %s19, 0
    %p182 = por %p180, %p181
    %s183 = ssub.s32 %s13, %s20
    %p184 = scmp.eq.s32.totalorder %s183, 0
    %s186 = sadd.s32 %s185, 1
    %s187 = scalar_select %p184, %s185, %s186
    %p190 = pneg %p184
    %p191 = scmp.eq.s32.totalorder %s13, 3
    %p192 = por %p190, %p191
    %p193 = scmp.ne.s32.totalorder %s185, %s188
    %p194 = scmp.eq.s32.totalorder %s13, 0
    %p195 = por %p193, %p194
    %p196 = scmp.ne.s32.totalorder %s185, %s188
    %p197 = scmp.eq.s32.totalorder %s18, 3
    %p198 = por %p196, %p197
    %p199 = scmp.ne.s32.totalorder %s188, %s189
    %p200 = scmp.eq.s32.totalorder %s18, 0
    %p201 = por %p199, %p200
    %p202 = scmp.ne.s32.totalorder %s188, %s189
    %p203 = scmp.eq.s32.totalorder %s19, 3
    %p204 = por %p202, %p203
    %p206 = scmp.ne.s32.totalorder %s189, %s205
    %p207 = scmp.eq.s32.totalorder %s19, 0
    %p208 = por %p206, %p207
    %p209 = scmp.le.s32.totalorder 1, %s13
    %p210 = scmp.lt.s32.totalorder %s13, 5
    %p211 = pnand %p209, %p210
    %p212 = pneg %p211
    // Predicated region
    $region9: #{tpu_custom_call.1} parent=5 // pred_check
      _
    $region10: #{tpu_custom_call.1} parent=5 // pred_check_branch
      %214 = sbr.rel (%p211) target = $region12
    $region11: #{tpu_custom_call.1} parent=5 // pred_region
      %s215 = ssub.s32 %s13, 1
      // Predicated region
      $region13: #{tpu_custom_call.1} parent=11 // pred_check
        %p216 = pneg %p86
      $region14: #{tpu_custom_call.1} parent=11 // pred_check_branch
        %218 = sbr.rel (%p216) target = $region16
      $region15: #{tpu_custom_call.1} parent=11 // pred_region
        _
      $region16: #{tpu_custom_call.1} parent=11 // pred_fallthru
        _
      // Predicated region
      $region17: #{tpu_custom_call.1} parent=11 // pred_check
        %p219 = pneg %p133
      $region18: #{tpu_custom_call.1} parent=11 // pred_check_branch
        %221 = sbr.rel (%p219) target = $region20
      $region19: #{tpu_custom_call.1} parent=11 // pred_region
        _
      $region20: #{tpu_custom_call.1} parent=11 // pred_fallthru
        _
      // Predicated region
      $region21: #{tpu_custom_call.1} parent=11 // pred_check
        %p222 = pneg %p154
      $region22: #{tpu_custom_call.1} parent=11 // pred_check_branch
        %224 = sbr.rel (%p222) target = $region24
      $region23: #{tpu_custom_call.1} parent=11 // pred_region
        _
      $region24: #{tpu_custom_call.1} parent=11 // pred_fallthru
        _
      // Predicated region
      $region25: #{tpu_custom_call.1} parent=11 // pred_check
        %p225 = pneg %p175
      $region26: #{tpu_custom_call.1} parent=11 // pred_check_branch
        %227 = sbr.rel (%p225) target = $region28
      $region27: #{tpu_custom_call.1} parent=11 // pred_region
        _
      $region28: #{tpu_custom_call.1} parent=11 // pred_fallthru
        _
    $region12: #{tpu_custom_call.1} parent=5 // pred_fallthru
      _
    %p228 = scmp.lt.s32.totalorder %s13, 4
    // Predicated region
    $region29: #{tpu_custom_call.1} parent=5 // pred_check
      %p229 = pneg %p228
    $region30: #{tpu_custom_call.1} parent=5 // pred_check_branch
      %231 = sbr.rel (%p229) target = $region32
    $region31: #{tpu_custom_call.1} parent=5 // pred_region
      // Predicated region
      $region33: #{tpu_custom_call.1} parent=31 // pred_check
        %p232 = pneg %p33
      $region34: #{tpu_custom_call.1} parent=31 // pred_check_branch
        %234 = sbr.rel (%p232) target = $region36
      $region35: #{tpu_custom_call.1} parent=31 // pred_region
        %s235 = smul.u32 8, %s13
        %p236 = scmp.lt.s32.totalorder %s235, 31
        %s237 = scalar_select %p236, %s235, 31
        %s238 = smul.addr %s237, 18
        %s239 = smul.addr %s238, 4
        %s240 = scalar_lea.vmem %s0, %s239
        %s241 = smul.u32 8, %s13
      $region36: #{tpu_custom_call.1} parent=31 // pred_fallthru
        _
      // Predicated region
      $region37: #{tpu_custom_call.1} parent=31 // pred_check
        %p242 = pneg %p59
      $region38: #{tpu_custom_call.1} parent=31 // pred_check_branch
        %244 = sbr.rel (%p242) target = $region40
      $region39: #{tpu_custom_call.1} parent=31 // pred_region
        %s245 = smul.u32 9, %s13
        %p246 = scmp.lt.s32.totalorder %s245, 35
        %s247 = scalar_select %p246, %s245, 35
        %s248 = smul.addr %s247, 2
        %s249 = smul.addr %s248, 4
        %s250 = scalar_lea.vmem %s1, %s249
        %s251 = smul.u32 9, %s13
      $region40: #{tpu_custom_call.1} parent=31 // pred_fallthru
        _
      // Predicated region
      $region41: #{tpu_custom_call.1} parent=31 // pred_check
        %p252 = pneg %p106
      $region42: #{tpu_custom_call.1} parent=31 // pred_check_branch
        %254 = sbr.rel (%p252) target = $region44
      $region43: #{tpu_custom_call.1} parent=31 // pred_region
        %s255 = smul.u32 9, %s13
        %p256 = scmp.lt.s32.totalorder %s255, 35
        %s257 = scalar_select %p256, %s255, 35
        %s258 = smul.addr %s257, 4
        %s259 = smul.addr %s258, 4
        %s260 = scalar_lea.vmem %s3, %s259
        %s261 = smul.u32 9, %s13
      $region44: #{tpu_custom_call.1} parent=31 // pred_fallthru
        _
    $region32: #{tpu_custom_call.1} parent=5 // pred_fallthru
      _
    %p262 = scmp.le.s32.totalorder 1, %s13
    %p263 = scmp.lt.s32.totalorder %s13, 5
    %p264 = pnand %p262, %p263
    %p265 = pneg %p264
    // Predicated region
    $region45: #{tpu_custom_call.1} parent=5 // pred_check
      _
    $region46: #{tpu_custom_call.1} parent=5 // pred_check_branch
      %267 = sbr.rel (%p264) target = $region48
    $region47: #{tpu_custom_call.1} parent=5 // pred_region
      %s268 = ssub.s32 %s13, 1
      %s269 = smul.u32 8, %s18
      %p270 = scmp.lt.s32.totalorder %s269, 31
      %s271 = scalar_select %p270, %s269, 31
      %s272 = smul.addr %s271, 18
      %s273 = smul.addr %s272, 4
      %s274 = scalar_lea.vmem %s0, %s273
      %p275 = pneg %p39
      %p276 = pneg %p36
      %s277 = smul.u32 9, %s18
      %p278 = scmp.lt.s32.totalorder %s277, 35
      %s279 = scalar_select %p278, %s277, 35
      %s280 = smul.addr %s279, 2
      %s281 = smul.addr %s280, 4
      %s282 = scalar_lea.vmem %s1, %s281
      %p283 = pneg %p65
      %p284 = pneg %p62
      %p285 = pneg %p86
      %p286 = pneg %p83
      %s287 = smul.u32 9, %s18
      %p288 = scmp.lt.s32.totalorder %s287, 35
      %s289 = scalar_select %p288, %s287, 35
      %s290 = smul.addr %s289, 4
      %s291 = smul.addr %s290, 4
      %s292 = scalar_lea.vmem %s3, %s291
      %p293 = pneg %p112
      %p294 = pneg %p109
      %p295 = pneg %p133
      %p296 = pneg %p130
      %p297 = pneg %p154
      %p298 = pneg %p151
      %p299 = pneg %p175
      %p300 = pneg %p172
      %p301 = pneg %p201
      %p302 = pneg %p198
      %p303 = scmp.lt.s32.totalorder %s18, 3
      %s304 = scalar_select %p303, %s18, 3
      %s305 = smul.addr %s304, 16
      %s306 = smul.addr %s305, 8
      %s307 = scalar_lea.vmem %s7, %s306
      %s308 = smul.u32 8, %s18
      %p309 = scmp.lt.s32.totalorder %s308, 31
      %s310 = scalar_select %p309, %s308, 31
      %s311 = smul.addr %s310, 18
      %s312 = smul.addr %s311, 4
      %s313 = scalar_lea.vmem %s0, %s312
      %s314 = smul.u32 8, %s18
      %s315 = smul.u32 9, %s18
      %p316 = scmp.lt.s32.totalorder %s315, 35
      %s317 = scalar_select %p316, %s315, 35
      %s318 = smul.addr %s317, 2
      %s319 = smul.addr %s318, 4
      %s320 = scalar_lea.vmem %s1, %s319
      %s321 = smul.u32 9, %s18
      %s322 = smul.u32 9, %s18
      %p323 = scmp.lt.s32.totalorder %s322, 35
      %s324 = scalar_select %p323, %s322, 35
      %s325 = smul.addr %s324, 4
      %s326 = smul.addr %s325, 4
      %s327 = scalar_lea.vmem %s3, %s326
      %s328 = smul.u32 9, %s18
      %p329 = scmp.lt.s32.totalorder %s18, 3
      %s330 = scalar_select %p329, %s18, 3
      %s331 = smul.addr %s330, 16
      %s332 = smul.addr %s331, 8
      %s333 = scalar_lea.vmem %s7, %s332
      %v335 = vld [vmem:[%s313] sm:$0xf]
      %v336 = vld [vmem:[%s313 + $0x8] sm:$0xf]
      %v337 = vld [vmem:[%s313 + $0x10] sm:$0xf]
      %v338 = vld [vmem:[%s313 + $0x18] sm:$0xf]
      %v339 = vld [vmem:[%s313 + $0x20] sm:$0xf]
      %v340 = vld [vmem:[%s313 + $0x28] sm:$0xf]
      %v341 = vld [vmem:[%s313 + $0x30] sm:$0xf]
      %v342 = vld [vmem:[%s313 + $0x38] sm:$0xf]
      %v343 = vld [vmem:[%s313 + $0x48] sm:$0xf]
      %v344 = vld [vmem:[%s313 + $0x50] sm:$0xf]
      %v345 = vld [vmem:[%s313 + $0x58] sm:$0xf]
      %v346 = vld [vmem:[%s313 + $0x60] sm:$0xf]
      %v347 = vld [vmem:[%s313 + $0x68] sm:$0xf]
      %v348 = vld [vmem:[%s313 + $0x70] sm:$0xf]
      %v349 = vld [vmem:[%s313 + $0x78] sm:$0xf]
      %v350 = vld [vmem:[%s313 + $0x80] sm:$0xf]
      %v351 = vld [vmem:[%s320] sm:$0xf]
      %v352 = vld [vmem:[%s320 + $0x4] sm:$0xf]
      %s353 = scalar_lea.vmem %s313, 144
      %v354 = vld [vmem:[%s353] sm:$0xf]
      %v355 = vld [vmem:[%s353 + $0x8] sm:$0xf]
      %v356 = vld [vmem:[%s353 + $0x10] sm:$0xf]
      %v357 = vld [vmem:[%s353 + $0x18] sm:$0xf]
      %v358 = vld [vmem:[%s353 + $0x20] sm:$0xf]
      %v359 = vld [vmem:[%s353 + $0x28] sm:$0xf]
      %v360 = vld [vmem:[%s353 + $0x30] sm:$0xf]
      %v361 = vld [vmem:[%s353 + $0x38] sm:$0xf]
      %v362 = vld [vmem:[%s353 + $0x48] sm:$0xf]
      %v363 = vld [vmem:[%s353 + $0x50] sm:$0xf]
      %v364 = vld [vmem:[%s353 + $0x58] sm:$0xf]
      %v365 = vld [vmem:[%s353 + $0x60] sm:$0xf]
      %v366 = vld [vmem:[%s353 + $0x68] sm:$0xf]
      %v367 = vld [vmem:[%s353 + $0x70] sm:$0xf]
      %v368 = vld [vmem:[%s353 + $0x78] sm:$0xf]
      %v369 = vld [vmem:[%s353 + $0x80] sm:$0xf]
      %s370 = scalar_lea.vmem %s320, 8
      %v371 = vld [vmem:[%s370] sm:$0xf]
      %v372 = vld [vmem:[%s370 + $0x4] sm:$0xf]
      %v389 = vunpack.c.l.b16 %v354
      %v390 = vunpack.c.l.b16 %v355
      %v391 = vunpack.c.l.b16 %v356
      %v392 = vunpack.c.l.b16 %v357
      %v393 = vunpack.c.l.b16 %v358
      %v394 = vunpack.c.l.b16 %v359
      %v395 = vunpack.c.l.b16 %v360
      %v396 = vunpack.c.l.b16 %v361
      %v397 = vunpack.c.l.b16 %v362
      %v398 = vunpack.c.l.b16 %v363
      %v399 = vunpack.c.l.b16 %v364
      %v400 = vunpack.c.l.b16 %v365
      %v401 = vunpack.c.l.b16 %v366
      %v402 = vunpack.c.l.b16 %v367
      %v403 = vunpack.c.l.b16 %v368
      %v404 = vunpack.c.l.b16 %v369
      %v405 = vpack.c.b16 %v390, %v389
      %v406 = vpack.c.b16 %v392, %v391
      %v407 = vpack.c.b16 %v394, %v393
      %v408 = vpack.c.b16 %v396, %v395
      %v409 = vpack.c.b16 %v398, %v397
      %v410 = vpack.c.b16 %v400, %v399
      %v411 = vpack.c.b16 %v402, %v401
      %v412 = vpack.c.b16 %v404, %v403
      %v415 = vunpack.c.l.b16 %v371
      %v416 = vunpack.c.l.b16 %v372
      %v417 = vpack.c.b16 %v416, %v415
      %vm419 = vcmask 130048
      %v421 = vsel %vm419, %v405, 0
      %v424 = vsel %vm419, %v406, 0
      %v427 = vsel %vm419, %v407, 0
      %v430 = vsel %vm419, %v408, 0
      %v433 = vsel %vm419, %v409, 0
      %v436 = vsel %vm419, %v410, 0
      %v439 = vsel %vm419, %v411, 0
      %v442 = vsel %vm419, %v412, 0
      %444 = vmatprep.subr.bf16.mxu0 0
      %445 = vmatpush1.bf16.msra.mxu0 %v417
      %446 = vmatprep.subr.bf16.mxu0 0
      %447 = vmatpush1.bf16.msra.mxu0 0
      %448 = vmatprep.subr.bf16.mxu0 0
      %449 = vmatpush1.bf16.msra.mxu0 0
      %450 = vmatprep.subr.bf16.mxu0 0
      %451 = vmatpush1.bf16.msra.mxu0 0
      %452 = vmatprep.subr.bf16.mxu0 0
      %453 = vmatpush1.bf16.msra.mxu0 0
      %454 = vmatprep.subr.bf16.mxu0 0
      %455 = vmatpush1.bf16.msra.mxu0 0
      %456 = vmatprep.subr.bf16.mxu0 0
      %457 = vmatpush1.bf16.msra.mxu0 0
      %458 = vmatprep.subr.bf16.mxu0 0
      %459 = vmatpush1.bf16.msra.mxu0 0
      %460 = vmatprep.subr.bf16.mxu0 0
      %461 = vmatpush1.bf16.msra.mxu0 0
      %462 = vmatprep.subr.bf16.mxu0 0
      %463 = vmatpush1.bf16.msra.mxu0 0
      %464 = vmatprep.subr.bf16.mxu0 0
      %465 = vmatpush1.bf16.msra.mxu0 0
      %466 = vmatprep.subr.bf16.mxu0 0
      %467 = vmatpush1.bf16.msra.mxu0 0
      %468 = vmatprep.subr.bf16.mxu0 0
      %469 = vmatpush1.bf16.msra.mxu0 0
      %470 = vmatprep.subr.bf16.mxu0 0
      %471 = vmatpush1.bf16.msra.mxu0 0
      %472 = vmatprep.subr.bf16.mxu0 0
      %473 = vmatpush1.bf16.msra.mxu0 0
      %474 = vmatprep.subr.bf16.mxu0 0
      %475 = vmatpush1.bf16.msra.mxu0 0
      %476 = vmatprep.mubr.bf16.mxu0 0
      %477 = vmatmul.mubr.bf16.gmra.mrb[0].mxu0 %v421
      %v478 = vpop.f32.mrb[0].mxu0
      %v479 = vadd.f32 0.0, %v478
      %v480 = vpop.f32.mrb[0].mxu0
      %v481 = vpop.f32.mrb[0].mxu0
      %v482 = vadd.f32 0.0, %v481
      %v483 = vpop.f32.mrb[0].mxu0
      %484 = vmatprep.mubr.bf16.mxu0 0
      %485 = vmatmul.mubr.bf16.gmra.mrb[0].mxu0 %v424
      %v486 = vpop.f32.mrb[0].mxu0
      %v487 = vadd.f32 0.0, %v486
      %v488 = vpop.f32.mrb[0].mxu0
      %v489 = vpop.f32.mrb[0].mxu0
      %v490 = vadd.f32 0.0, %v489
      %v491 = vpop.f32.mrb[0].mxu0
      %492 = vmatprep.mubr.bf16.mxu0 0
      %493 = vmatmul.mubr.bf16.gmra.mrb[0].mxu0 %v427
      %v494 = vpop.f32.mrb[0].mxu0
      %v495 = vadd.f32 0.0, %v494
      %v496 = vpop.f32.mrb[0].mxu0
      %v497 = vpop.f32.mrb[0].mxu0
      %v498 = vadd.f32 0.0, %v497
      %v499 = vpop.f32.mrb[0].mxu0
      %500 = vmatprep.mubr.bf16.mxu0 0
      %501 = vmatmul.mubr.bf16.gmra.mrb[0].mxu0 %v430
      %v502 = vpop.f32.mrb[0].mxu0
      %v503 = vadd.f32 0.0, %v502
      %v504 = vpop.f32.mrb[0].mxu0
      %v505 = vpop.f32.mrb[0].mxu0
      %v506 = vadd.f32 0.0, %v505
      %v507 = vpop.f32.mrb[0].mxu0
      %508 = vmatprep.mubr.bf16.mxu0 0
      %509 = vmatmul.mubr.bf16.gmra.mrb[0].mxu0 %v433
      %v510 = vpop.f32.mrb[0].mxu0
      %v511 = vadd.f32 0.0, %v510
      %v512 = vpop.f32.mrb[0].mxu0
      %v513 = vpop.f32.mrb[0].mxu0
      %v514 = vadd.f32 0.0, %v513
      %v515 = vpop.f32.mrb[0].mxu0
      %516 = vmatprep.mubr.bf16.mxu0 0
      %517 = vmatmul.mubr.bf16.gmra.mrb[0].mxu0 %v436
      %v518 = vpop.f32.mrb[0].mxu0
      %v519 = vadd.f32 0.0, %v518
      %v520 = vpop.f32.mrb[0].mxu0
      %v521 = vpop.f32.mrb[0].mxu0
      %v522 = vadd.f32 0.0, %v521
      %v523 = vpop.f32.mrb[0].mxu0
      %524 = vmatprep.mubr.bf16.mxu0 0
      %525 = vmatmul.mubr.bf16.gmra.mrb[0].mxu0 %v439
      %v526 = vpop.f32.mrb[0].mxu0
      %v527 = vadd.f32 0.0, %v526
      %v528 = vpop.f32.mrb[0].mxu0
      %v529 = vpop.f32.mrb[0].mxu0
      %v530 = vadd.f32 0.0, %v529
      %v531 = vpop.f32.mrb[0].mxu0
      %532 = vmatprep.mubr.bf16.mxu0 0
      %533 = vmatmul.mubr.bf16.gmra.mrb[0].mxu0 %v442
      %v534 = vpop.f32.mrb[0].mxu0
      %v535 = vadd.f32 0.0, %v534
      %v536 = vpop.f32.mrb[0].mxu0
      %v537 = vpop.f32.mrb[0].mxu0
      %v538 = vadd.f32 0.0, %v537
      %v539 = vpop.f32.mrb[0].mxu0
      %540 = vdwg.mxu0
      %v557 = vunpack.c.l.b16 %v335
      %v558 = vunpack.c.l.b16 %v336
      %v559 = vunpack.c.l.b16 %v337
      %v560 = vunpack.c.l.b16 %v338
      %v561 = vunpack.c.l.b16 %v339
      %v562 = vunpack.c.l.b16 %v340
      %v563 = vunpack.c.l.b16 %v341
      %v564 = vunpack.c.l.b16 %v342
      %v565 = vunpack.c.l.b16 %v343
      %v566 = vunpack.c.l.b16 %v344
      %v567 = vunpack.c.l.b16 %v345
      %v568 = vunpack.c.l.b16 %v346
      %v569 = vunpack.c.l.b16 %v347
      %v570 = vunpack.c.l.b16 %v348
      %v571 = vunpack.c.l.b16 %v349
      %v572 = vunpack.c.l.b16 %v350
      %v573 = vpack.c.b16 %v558, %v557
      %v574 = vpack.c.b16 %v560, %v559
      %v575 = vpack.c.b16 %v562, %v561
      %v576 = vpack.c.b16 %v564, %v563
      %v577 = vpack.c.b16 %v566, %v565
      %v578 = vpack.c.b16 %v568, %v567
      %v579 = vpack.c.b16 %v570, %v569
      %v580 = vpack.c.b16 %v572, %v571
      %v583 = vunpack.c.l.b16 %v351
      %v584 = vunpack.c.l.b16 %v352
      %v585 = vpack.c.b16 %v584, %v583
      %v588 = vsel %vm419, %v573, 0
      %v591 = vsel %vm419, %v574, 0
      %v594 = vsel %vm419, %v575, 0
      %v597 = vsel %vm419, %v576, 0
      %v600 = vsel %vm419, %v577, 0
      %v603 = vsel %vm419, %v578, 0
      %v606 = vsel %vm419, %v579, 0
      %v609 = vsel %vm419, %v580, 0
      %611 = vmatprep.subr.bf16.mxu0 0
      %612 = vmatpush1.bf16.msra.mxu0 %v585
      %613 = vmatprep.subr.bf16.mxu0 0
      %614 = vmatpush1.bf16.msra.mxu0 0
      %615 = vmatprep.subr.bf16.mxu0 0
      %616 = vmatpush1.bf16.msra.mxu0 0
      %617 = vmatprep.subr.bf16.mxu0 0
      %618 = vmatpush1.bf16.msra.mxu0 0
      %619 = vmatprep.subr.bf16.mxu0 0
      %620 = vmatpush1.bf16.msra.mxu0 0
      %621 = vmatprep.subr.bf16.mxu0 0
      %622 = vmatpush1.bf16.msra.mxu0 0
      %623 = vmatprep.subr.bf16.mxu0 0
      %624 = vmatpush1.bf16.msra.mxu0 0
      %625 = vmatprep.subr.bf16.mxu0 0
      %626 = vmatpush1.bf16.msra.mxu0 0
      %627 = vmatprep.subr.bf16.mxu0 0
      %628 = vmatpush1.bf16.msra.mxu0 0
      %629 = vmatprep.subr.bf16.mxu0 0
      %630 = vmatpush1.bf16.msra.mxu0 0
      %631 = vmatprep.subr.bf16.mxu0 0
      %632 = vmatpush1.bf16.msra.mxu0 0
      %633 = vmatprep.subr.bf16.mxu0 0
      %634 = vmatpush1.bf16.msra.mxu0 0
      %635 = vmatprep.subr.bf16.mxu0 0
      %636 = vmatpush1.bf16.msra.mxu0 0
      %637 = vmatprep.subr.bf16.mxu0 0
      %638 = vmatpush1.bf16.msra.mxu0 0
      %639 = vmatprep.subr.bf16.mxu0 0
      %640 = vmatpush1.bf16.msra.mxu0 0
      %641 = vmatprep.subr.bf16.mxu0 0
      %642 = vmatpush1.bf16.msra.mxu0 0
      %643 = vmatprep.mubr.bf16.mxu0 0
      %644 = vmatmul.mubr.bf16.gmra.mrb[0].mxu0 %v588
      %v645 = vpop.f32.mrb[0].mxu0
      %v646 = vadd.f32 %v479, %v645
      %v647 = vpop.f32.mrb[0].mxu0
      %v648 = vpop.f32.mrb[0].mxu0
      %v649 = vadd.f32 %v482, %v648
      %v650 = vpop.f32.mrb[0].mxu0
      %651 = vmatprep.mubr.bf16.mxu0 0
      %652 = vmatmul.mubr.bf16.gmra.mrb[0].mxu0 %v591
      %v653 = vpop.f32.mrb[0].mxu0
      %v654 = vadd.f32 %v487, %v653
      %v655 = vpop.f32.mrb[0].mxu0
      %v656 = vpop.f32.mrb[0].mxu0
      %v657 = vadd.f32 %v490, %v656
      %v658 = vpop.f32.mrb[0].mxu0
      %659 = vmatprep.mubr.bf16.mxu0 0
      %660 = vmatmul.mubr.bf16.gmra.mrb[0].mxu0 %v594
      %v661 = vpop.f32.mrb[0].mxu0
      %v662 = vadd.f32 %v495, %v661
      %v663 = vpop.f32.mrb[0].mxu0
      %v664 = vpop.f32.mrb[0].mxu0
      %v665 = vadd.f32 %v498, %v664
      %v666 = vpop.f32.mrb[0].mxu0
      %667 = vmatprep.mubr.bf16.mxu0 0
      %668 = vmatmul.mubr.bf16.gmra.mrb[0].mxu0 %v597
      %v669 = vpop.f32.mrb[0].mxu0
      %v670 = vadd.f32 %v503, %v669
      %v671 = vpop.f32.mrb[0].mxu0
      %v672 = vpop.f32.mrb[0].mxu0
      %v673 = vadd.f32 %v506, %v672
      %v674 = vpop.f32.mrb[0].mxu0
      %675 = vmatprep.mubr.bf16.mxu0 0
      %676 = vmatmul.mubr.bf16.gmra.mrb[0].mxu0 %v600
      %v677 = vpop.f32.mrb[0].mxu0
      %v678 = vadd.f32 %v511, %v677
      %v679 = vpop.f32.mrb[0].mxu0
      %v680 = vpop.f32.mrb[0].mxu0
      %v681 = vadd.f32 %v514, %v680
      %v682 = vpop.f32.mrb[0].mxu0
      %683 = vmatprep.mubr.bf16.mxu0 0
      %684 = vmatmul.mubr.bf16.gmra.mrb[0].mxu0 %v603
      %v685 = vpop.f32.mrb[0].mxu0
      %v686 = vadd.f32 %v519, %v685
      %v687 = vpop.f32.mrb[0].mxu0
      %v688 = vpop.f32.mrb[0].mxu0
      %v689 = vadd.f32 %v522, %v688
      %v690 = vpop.f32.mrb[0].mxu0
      %691 = vmatprep.mubr.bf16.mxu0 0
      %692 = vmatmul.mubr.bf16.gmra.mrb[0].mxu0 %v606
      %v693 = vpop.f32.mrb[0].mxu0
      %v694 = vadd.f32 %v527, %v693
      %v695 = vpop.f32.mrb[0].mxu0
      %v696 = vpop.f32.mrb[0].mxu0
      %v697 = vadd.f32 %v530, %v696
      %v698 = vpop.f32.mrb[0].mxu0
      %699 = vmatprep.mubr.bf16.mxu0 0
      %700 = vmatmul.mubr.bf16.gmra.mrb[0].mxu0 %v609
      %v701 = vpop.f32.mrb[0].mxu0
      %v702 = vadd.f32 %v535, %v701
      %v703 = vpop.f32.mrb[0].mxu0
      %v704 = vpop.f32.mrb[0].mxu0
      %v705 = vadd.f32 %v538, %v704
      %v706 = vpop.f32.mrb[0].mxu0
      %707 = vdwg.mxu0
      %v708 = vld [vmem:[%s313] sm:$0xf]
      %v709 = vld [vmem:[%s313 + $0x4] sm:$0x1]
      %v710 = vld [vmem:[%s313 + $0x8] sm:$0xf]
      %v711 = vld [vmem:[%s313 + $0xc] sm:$0x1]
      %v712 = vld [vmem:[%s313 + $0x10] sm:$0xf]
      %v713 = vld [vmem:[%s313 + $0x14] sm:$0x1]
      %v714 = vld [vmem:[%s313 + $0x18] sm:$0xf]
      %v715 = vld [vmem:[%s313 + $0x1c] sm:$0x1]
      %v716 = vld [vmem:[%s313 + $0x20] sm:$0xf]
      %v717 = vld [vmem:[%s313 + $0x24] sm:$0x1]
      %v718 = vld [vmem:[%s313 + $0x28] sm:$0xf]
      %v719 = vld [vmem:[%s313 + $0x2c] sm:$0x1]
      %v720 = vld [vmem:[%s313 + $0x30] sm:$0xf]
      %v721 = vld [vmem:[%s313 + $0x34] sm:$0x1]
      %v722 = vld [vmem:[%s313 + $0x38] sm:$0xf]
      %v723 = vld [vmem:[%s313 + $0x3c] sm:$0x1]
      %v724 = vld [vmem:[%s313 + $0x48] sm:$0xf]
      %v725 = vld [vmem:[%s313 + $0x4c] sm:$0x1]
      %v726 = vld [vmem:[%s313 + $0x50] sm:$0xf]
      %v727 = vld [vmem:[%s313 + $0x54] sm:$0x1]
      %v728 = vld [vmem:[%s313 + $0x58] sm:$0xf]
      %v729 = vld [vmem:[%s313 + $0x5c] sm:$0x1]
      %v730 = vld [vmem:[%s313 + $0x60] sm:$0xf]
      %v731 = vld [vmem:[%s313 + $0x64] sm:$0x1]
      %v732 = vld [vmem:[%s313 + $0x68] sm:$0xf]
      %v733 = vld [vmem:[%s313 + $0x6c] sm:$0x1]
      %v734 = vld [vmem:[%s313 + $0x70] sm:$0xf]
      %v735 = vld [vmem:[%s313 + $0x74] sm:$0x1]
      %v736 = vld [vmem:[%s313 + $0x78] sm:$0xf]
      %v737 = vld [vmem:[%s313 + $0x7c] sm:$0x1]
      %v738 = vld [vmem:[%s313 + $0x80] sm:$0xf]
      %v739 = vld [vmem:[%s313 + $0x84] sm:$0x1]
      %vm740 = vsmask.f32 3328
      %vm741 = vsmask.f32 7440
      %vm742 = vmor %vm740, %vm741
      %v744 = vshrl.u32 %v708, 16
      %v746 = vrot.slane %v744, 4
      %v747 = vshll.u32 %v708, 16
      %v749 = vrot.slane %v747, 5
      %v750 = vor.u32 %v746, %v749
      %v751 = vrot.slane %v750, 4
      %v753 = vshll.u32 %v709, 16
      %v755 = vrot.slane %v753, 5
      %v756 = vsel %vm742, %v751, %v755
      %v758 = vshrl.u32 %v710, 16
      %v760 = vrot.slane %v758, 4
      %v761 = vshll.u32 %v710, 16
      %v763 = vrot.slane %v761, 5
      %v764 = vor.u32 %v760, %v763
      %v765 = vrot.slane %v764, 4
      %v767 = vshll.u32 %v711, 16
      %v769 = vrot.slane %v767, 5
      %v770 = vsel %vm742, %v765, %v769
      %v772 = vshrl.u32 %v712, 16
      %v774 = vrot.slane %v772, 4
      %v775 = vshll.u32 %v712, 16
      %v777 = vrot.slane %v775, 5
      %v778 = vor.u32 %v774, %v777
      %v779 = vrot.slane %v778, 4
      %v781 = vshll.u32 %v713, 16
      %v783 = vrot.slane %v781, 5
      %v784 = vsel %vm742, %v779, %v783
      %v786 = vshrl.u32 %v714, 16
      %v788 = vrot.slane %v786, 4
      %v789 = vshll.u32 %v714, 16
      %v791 = vrot.slane %v789, 5
      %v792 = vor.u32 %v788, %v791
      %v793 = vrot.slane %v792, 4
      %v795 = vshll.u32 %v715, 16
      %v797 = vrot.slane %v795, 5
      %v798 = vsel %vm742, %v793, %v797
      %v800 = vshrl.u32 %v716, 16
      %v802 = vrot.slane %v800, 4
      %v803 = vshll.u32 %v716, 16
      %v805 = vrot.slane %v803, 5
      %v806 = vor.u32 %v802, %v805
      %v807 = vrot.slane %v806, 4
      %v809 = vshll.u32 %v717, 16
      %v811 = vrot.slane %v809, 5
      %v812 = vsel %vm742, %v807, %v811
      %v814 = vshrl.u32 %v718, 16
      %v816 = vrot.slane %v814, 4
      %v817 = vshll.u32 %v718, 16
      %v819 = vrot.slane %v817, 5
      %v820 = vor.u32 %v816, %v819
      %v821 = vrot.slane %v820, 4
      %v823 = vshll.u32 %v719, 16
      %v825 = vrot.slane %v823, 5
      %v826 = vsel %vm742, %v821, %v825
      %v828 = vshrl.u32 %v720, 16
      %v830 = vrot.slane %v828, 4
      %v831 = vshll.u32 %v720, 16
      %v833 = vrot.slane %v831, 5
      %v834 = vor.u32 %v830, %v833
      %v835 = vrot.slane %v834, 4
      %v837 = vshll.u32 %v721, 16
      %v839 = vrot.slane %v837, 5
      %v840 = vsel %vm742, %v835, %v839
      %v842 = vshrl.u32 %v722, 16
      %v844 = vrot.slane %v842, 4
      %v845 = vshll.u32 %v722, 16
      %v847 = vrot.slane %v845, 5
      %v848 = vor.u32 %v844, %v847
      %v849 = vrot.slane %v848, 4
      %v851 = vshll.u32 %v723, 16
      %v853 = vrot.slane %v851, 5
      %v854 = vsel %vm742, %v849, %v853
      %v856 = vshrl.u32 %v724, 16
      %v858 = vrot.slane %v856, 4
      %v859 = vshll.u32 %v724, 16
      %v861 = vrot.slane %v859, 5
      %v862 = vor.u32 %v858, %v861
      %v863 = vrot.slane %v862, 4
      %v865 = vshll.u32 %v725, 16
      %v867 = vrot.slane %v865, 5
      %v868 = vsel %vm742, %v863, %v867
      %v870 = vshrl.u32 %v726, 16
      %v872 = vrot.slane %v870, 4
      %v873 = vshll.u32 %v726, 16
      %v875 = vrot.slane %v873, 5
      %v876 = vor.u32 %v872, %v875
      %v877 = vrot.slane %v876, 4
      %v879 = vshll.u32 %v727, 16
      %v881 = vrot.slane %v879, 5
      %v882 = vsel %vm742, %v877, %v881
      %v884 = vshrl.u32 %v728, 16
      %v886 = vrot.slane %v884, 4
      %v887 = vshll.u32 %v728, 16
      %v889 = vrot.slane %v887, 5
      %v890 = vor.u32 %v886, %v889
      %v891 = vrot.slane %v890, 4
      %v893 = vshll.u32 %v729, 16
      %v895 = vrot.slane %v893, 5
      %v896 = vsel %vm742, %v891, %v895
      %v898 = vshrl.u32 %v730, 16
      %v900 = vrot.slane %v898, 4
      %v901 = vshll.u32 %v730, 16
      %v903 = vrot.slane %v901, 5
      %v904 = vor.u32 %v900, %v903
      %v905 = vrot.slane %v904, 4
      %v907 = vshll.u32 %v731, 16
      %v909 = vrot.slane %v907, 5
      %v910 = vsel %vm742, %v905, %v909
      %v912 = vshrl.u32 %v732, 16
      %v914 = vrot.slane %v912, 4
      %v915 = vshll.u32 %v732, 16
      %v917 = vrot.slane %v915, 5
      %v918 = vor.u32 %v914, %v917
      %v919 = vrot.slane %v918, 4
      %v921 = vshll.u32 %v733, 16
      %v923 = vrot.slane %v921, 5
      %v924 = vsel %vm742, %v919, %v923
      %v926 = vshrl.u32 %v734, 16
      %v928 = vrot.slane %v926, 4
      %v929 = vshll.u32 %v734, 16
      %v931 = vrot.slane %v929, 5
      %v932 = vor.u32 %v928, %v931
      %v933 = vrot.slane %v932, 4
      %v935 = vshll.u32 %v735, 16
      %v937 = vrot.slane %v935, 5
      %v938 = vsel %vm742, %v933, %v937
      %v940 = vshrl.u32 %v736, 16
      %v942 = vrot.slane %v940, 4
      %v943 = vshll.u32 %v736, 16
      %v945 = vrot.slane %v943, 5
      %v946 = vor.u32 %v942, %v945
      %v947 = vrot.slane %v946, 4
      %v949 = vshll.u32 %v737, 16
      %v951 = vrot.slane %v949, 5
      %v952 = vsel %vm742, %v947, %v951
      %v954 = vshrl.u32 %v738, 16
      %v956 = vrot.slane %v954, 4
      %v957 = vshll.u32 %v738, 16
      %v959 = vrot.slane %v957, 5
      %v960 = vor.u32 %v956, %v959
      %v961 = vrot.slane %v960, 4
      %v963 = vshll.u32 %v739, 16
      %v965 = vrot.slane %v963, 5
      %v966 = vsel %vm742, %v961, %v965
      %s967 = scalar_lea.vmem %s320, 16
      %v968 = vld [vmem:[%s967] sm:$0xf]
      %v969 = vld [vmem:[%s967 + $0x4] sm:$0xf]
      %v970 = vunpack.c.l.b16 %v756
      %v971 = vunpack.c.l.b16 %v770
      %v972 = vunpack.c.l.b16 %v784
      %v973 = vunpack.c.l.b16 %v798
      %v974 = vunpack.c.l.b16 %v812
      %v975 = vunpack.c.l.b16 %v826
      %v976 = vunpack.c.l.b16 %v840
      %v977 = vunpack.c.l.b16 %v854
      %v978 = vunpack.c.l.b16 %v868
      %v979 = vunpack.c.l.b16 %v882
      %v980 = vunpack.c.l.b16 %v896
      %v981 = vunpack.c.l.b16 %v910
      %v982 = vunpack.c.l.b16 %v924
      %v983 = vunpack.c.l.b16 %v938
      %v984 = vunpack.c.l.b16 %v952
      %v985 = vunpack.c.l.b16 %v966
      %v986 = vpack.c.b16 %v971, %v970
      %v987 = vpack.c.b16 %v973, %v972
      %v988 = vpack.c.b16 %v975, %v974
      %v989 = vpack.c.b16 %v977, %v976
      %v990 = vpack.c.b16 %v979, %v978
      %v991 = vpack.c.b16 %v981, %v980
      %v992 = vpack.c.b16 %v983, %v982
      %v993 = vpack.c.b16 %v985, %v984
      %v996 = vunpack.c.l.b16 %v968
      %v997 = vunpack.c.l.b16 %v969
      %v998 = vpack.c.b16 %v997, %v996
      %v1001 = vsel %vm419, %v986, 0
      %v1004 = vsel %vm419, %v987, 0
      %v1007 = vsel %vm419, %v988, 0
      %v1010 = vsel %vm419, %v989, 0
      %v1013 = vsel %vm419, %v990, 0
      %v1016 = vsel %vm419, %v991, 0
      %v1019 = vsel %vm419, %v992, 0
      %v1022 = vsel %vm419, %v993, 0
      %1024 = vmatprep.subr.bf16.mxu0 0
      %1025 = vmatpush1.bf16.msra.mxu0 %v998
      %1026 = vmatprep.subr.bf16.mxu0 0
      %1027 = vmatpush1.bf16.msra.mxu0 0
      %1028 = vmatprep.subr.bf16.mxu0 0
      %1029 = vmatpush1.bf16.msra.mxu0 0
      %1030 = vmatprep.subr.bf16.mxu0 0
      %1031 = vmatpush1.bf16.msra.mxu0 0
      %1032 = vmatprep.subr.bf16.mxu0 0
      %1033 = vmatpush1.bf16.msra.mxu0 0
      %1034 = vmatprep.subr.bf16.mxu0 0
      %1035 = vmatpush1.bf16.msra.mxu0 0
      %1036 = vmatprep.subr.bf16.mxu0 0
      %1037 = vmatpush1.bf16.msra.mxu0 0
      %1038 = vmatprep.subr.bf16.mxu0 0
      %1039 = vmatpush1.bf16.msra.mxu0 0
      %1040 = vmatprep.subr.bf16.mxu0 0
      %1041 = vmatpush1.bf16.msra.mxu0 0
      %1042 = vmatprep.subr.bf16.mxu0 0
      %1043 = vmatpush1.bf16.msra.mxu0 0
      %1044 = vmatprep.subr.bf16.mxu0 0
      %1045 = vmatpush1.bf16.msra.mxu0 0
      %1046 = vmatprep.subr.bf16.mxu0 0
      %1047 = vmatpush1.bf16.msra.mxu0 0
      %1048 = vmatprep.subr.bf16.mxu0 0
      %1049 = vmatpush1.bf16.msra.mxu0 0
      %1050 = vmatprep.subr.bf16.mxu0 0
      %1051 = vmatpush1.bf16.msra.mxu0 0
      %1052 = vmatprep.subr.bf16.mxu0 0
      %1053 = vmatpush1.bf16.msra.mxu0 0
      %1054 = vmatprep.subr.bf16.mxu0 0
      %1055 = vmatpush1.bf16.msra.mxu0 0
      %1056 = vmatprep.mubr.bf16.mxu0 0
      %1057 = vmatmul.mubr.bf16.gmra.mrb[0].mxu0 %v1001
      %v1058 = vpop.f32.mrb[0].mxu0
      %v1059 = vadd.f32 0.0, %v1058
      %v1060 = vpop.f32.mrb[0].mxu0
      %v1061 = vpop.f32.mrb[0].mxu0
      %v1062 = vadd.f32 0.0, %v1061
      %v1063 = vpop.f32.mrb[0].mxu0
      %1064 = vmatprep.mubr.bf16.mxu0 0
      %1065 = vmatmul.mubr.bf16.gmra.mrb[0].mxu0 %v1004
      %v1066 = vpop.f32.mrb[0].mxu0
      %v1067 = vadd.f32 0.0, %v1066
      %v1068 = vpop.f32.mrb[0].mxu0
      %v1069 = vpop.f32.mrb[0].mxu0
      %v1070 = vadd.f32 0.0, %v1069
      %v1071 = vpop.f32.mrb[0].mxu0
      %1072 = vmatprep.mubr.bf16.mxu0 0
      %1073 = vmatmul.mubr.bf16.gmra.mrb[0].mxu0 %v1007
      %v1074 = vpop.f32.mrb[0].mxu0
      %v1075 = vadd.f32 0.0, %v1074
      %v1076 = vpop.f32.mrb[0].mxu0
      %v1077 = vpop.f32.mrb[0].mxu0
      %v1078 = vadd.f32 0.0, %v1077
      %v1079 = vpop.f32.mrb[0].mxu0
      %1080 = vmatprep.mubr.bf16.mxu0 0
      %1081 = vmatmul.mubr.bf16.gmra.mrb[0].mxu0 %v1010
      %v1082 = vpop.f32.mrb[0].mxu0
      %v1083 = vadd.f32 0.0, %v1082
      %v1084 = vpop.f32.mrb[0].mxu0
      %v1085 = vpop.f32.mrb[0].mxu0
      %v1086 = vadd.f32 0.0, %v1085
      %v1087 = vpop.f32.mrb[0].mxu0
      %1088 = vmatprep.mubr.bf16.mxu0 0
      %1089 = vmatmul.mubr.bf16.gmra.mrb[0].mxu0 %v1013
      %v1090 = vpop.f32.mrb[0].mxu0
      %v1091 = vadd.f32 0.0, %v1090
      %v1092 = vpop.f32.mrb[0].mxu0
      %v1093 = vpop.f32.mrb[0].mxu0
      %v1094 = vadd.f32 0.0, %v1093
      %v1095 = vpop.f32.mrb[0].mxu0
      %1096 = vmatprep.mubr.bf16.mxu0 0
      %1097 = vmatmul.mubr.bf16.gmra.mrb[0].mxu0 %v1016
      %v1098 = vpop.f32.mrb[0].mxu0
      %v1099 = vadd.f32 0.0, %v1098
      %v1100 = vpop.f32.mrb[0].mxu0
      %v1101 = vpop.f32.mrb[0].mxu0
      %v1102 = vadd.f32 0.0, %v1101
      %v1103 = vpop.f32.mrb[0].mxu0
      %1104 = vmatprep.mubr.bf16.mxu0 0
      %1105 = vmatmul.mubr.bf16.gmra.mrb[0].mxu0 %v1019
      %v1106 = vpop.f32.mrb[0].mxu0
      %v1107 = vadd.f32 0.0, %v1106
      %v1108 = vpop.f32.mrb[0].mxu0
      %v1109 = vpop.f32.mrb[0].mxu0
      %v1110 = vadd.f32 0.0, %v1109
      %v1111 = vpop.f32.mrb[0].mxu0
      %1112 = vmatprep.mubr.bf16.mxu0 0
      %1113 = vmatmul.mubr.bf16.gmra.mrb[0].mxu0 %v1022
      %v1114 = vpop.f32.mrb[0].mxu0
      %v1115 = vadd.f32 0.0, %v1114
      %v1116 = vpop.f32.mrb[0].mxu0
      %v1117 = vpop.f32.mrb[0].mxu0
      %v1118 = vadd.f32 0.0, %v1117
      %v1119 = vpop.f32.mrb[0].mxu0
      %1120 = vdwg.mxu0
      %v1121 = vadd.f32 %v646, %v1059
      %v1122 = vadd.f32 %v649, %v1062
      %v1123 = vadd.f32 %v654, %v1067
      %v1124 = vadd.f32 %v657, %v1070
      %v1125 = vadd.f32 %v662, %v1075
      %v1126 = vadd.f32 %v665, %v1078
      %v1127 = vadd.f32 %v670, %v1083
      %v1128 = vadd.f32 %v673, %v1086
      %v1129 = vadd.f32 %v678, %v1091
      %v1130 = vadd.f32 %v681, %v1094
      %v1131 = vadd.f32 %v686, %v1099
      %v1132 = vadd.f32 %v689, %v1102
      %v1133 = vadd.f32 %v694, %v1107
      %v1134 = vadd.f32 %v697, %v1110
      %v1135 = vadd.f32 %v702, %v1115
      %v1136 = vadd.f32 %v705, %v1118
      %s1137 = scalar_lea.vmem %s313, 288
      %v1138 = vld [vmem:[%s1137] sm:$0xf]
      %v1139 = vld [vmem:[%s1137 + $0x8] sm:$0xf]
      %v1140 = vld [vmem:[%s1137 + $0x10] sm:$0xf]
      %v1141 = vld [vmem:[%s1137 + $0x18] sm:$0xf]
      %v1142 = vld [vmem:[%s1137 + $0x20] sm:$0xf]
      %v1143 = vld [vmem:[%s1137 + $0x28] sm:$0xf]
      %v1144 = vld [vmem:[%s1137 + $0x30] sm:$0xf]
      %v1145 = vld [vmem:[%s1137 + $0x38] sm:$0xf]
      %v1146 = vld [vmem:[%s1137 + $0x48] sm:$0xf]
      %v1147 = vld [vmem:[%s1137 + $0x50] sm:$0xf]
      %v1148 = vld [vmem:[%s1137 + $0x58] sm:$0xf]
      %v1149 = vld [vmem:[%s1137 + $0x60] sm:$0xf]
      %v1150 = vld [vmem:[%s1137 + $0x68] sm:$0xf]
      %v1151 = vld [vmem:[%s1137 + $0x70] sm:$0xf]
      %v1152 = vld [vmem:[%s1137 + $0x78] sm:$0xf]
      %v1153 = vld [vmem:[%s1137 + $0x80] sm:$0xf]
      %s1154 = scalar_lea.vmem %s320, 24
      %v1155 = vld [vmem:[%s1154] sm:$0xf]
      %v1156 = vld [vmem:[%s1154 + $0x4] sm:$0xf]
      %v1173 = vunpack.c.l.b16 %v1138
      %v1174 = vunpack.c.l.b16 %v1139
      %v1175 = vunpack.c.l.b16 %v1140
      %v1176 = vunpack.c.l.b16 %v1141
      %v1177 = vunpack.c.l.b16 %v1142
      %v1178 = vunpack.c.l.b16 %v1143
      %v1179 = vunpack.c.l.b16 %v1144
      %v1180 = vunpack.c.l.b16 %v1145
      %v1181 = vunpack.c.l.b16 %v1146
      %v1182 = vunpack.c.l.b16 %v1147
      %v1183 = vunpack.c.l.b16 %v1148
      %v1184 = vunpack.c.l.b16 %v1149
      %v1185 = vunpack.c.l.b16 %v1150
      %v1186 = vunpack.c.l.b16 %v1151
      %v1187 = vunpack.c.l.b16 %v1152
      %v1188 = vunpack.c.l.b16 %v1153
      %v1189 = vpack.c.b16 %v1174, %v1173
      %v1190 = vpack.c.b16 %v1176, %v1175
      %v1191 = vpack.c.b16 %v1178, %v1177
      %v1192 = vpack.c.b16 %v1180, %v1179
      %v1193 = vpack.c.b16 %v1182, %v1181
      %v1194 = vpack.c.b16 %v1184, %v1183
      %v1195 = vpack.c.b16 %v1186, %v1185
      %v1196 = vpack.c.b16 %v1188, %v1187
      %v1199 = vunpack.c.l.b16 %v1155
      %v1200 = vunpack.c.l.b16 %v1156
      %v1201 = vpack.c.b16 %v1200, %v1199
      %v1204 = vsel %vm419, %v1189, 0
      %v1207 = vsel %vm419, %v1190, 0
      %v1210 = vsel %vm419, %v1191, 0
      %v1213 = vsel %vm419, %v1192, 0
      %v1216 = vsel %vm419, %v1193, 0
      %v1219 = vsel %vm419, %v1194, 0
      %v1222 = vsel %vm419, %v1195, 0
      %v1225 = vsel %vm419, %v1196, 0
      %1227 = vmatprep.subr.bf16.mxu0 0
      %1228 = vmatpush1.bf16.msra.mxu0 %v1201
      %1229 = vmatprep.subr.bf16.mxu0 0
      %1230 = vmatpush1.bf16.msra.mxu0 0
      %1231 = vmatprep.subr.bf16.mxu0 0
      %1232 = vmatpush1.bf16.msra.mxu0 0
      %1233 = vmatprep.subr.bf16.mxu0 0
      %1234 = vmatpush1.bf16.msra.mxu0 0
      %1235 = vmatprep.subr.bf16.mxu0 0
      %1236 = vmatpush1.bf16.msra.mxu0 0
      %1237 = vmatprep.subr.bf16.mxu0 0
      %1238 = vmatpush1.bf16.msra.mxu0 0
      %1239 = vmatprep.subr.bf16.mxu0 0
      %1240 = vmatpush1.bf16.msra.mxu0 0
      %1241 = vmatprep.subr.bf16.mxu0 0
      %1242 = vmatpush1.bf16.msra.mxu0 0
      %1243 = vmatprep.subr.bf16.mxu0 0
      %1244 = vmatpush1.bf16.msra.mxu0 0
      %1245 = vmatprep.subr.bf16.mxu0 0
      %1246 = vmatpush1.bf16.msra.mxu0 0
      %1247 = vmatprep.subr.bf16.mxu0 0
      %1248 = vmatpush1.bf16.msra.mxu0 0
      %1249 = vmatprep.subr.bf16.mxu0 0
      %1250 = vmatpush1.bf16.msra.mxu0 0
      %1251 = vmatprep.subr.bf16.mxu0 0
      %1252 = vmatpush1.bf16.msra.mxu0 0
      %1253 = vmatprep.subr.bf16.mxu0 0
      %1254 = vmatpush1.bf16.msra.mxu0 0
      %1255 = vmatprep.subr.bf16.mxu0 0
      %1256 = vmatpush1.bf16.msra.mxu0 0
      %1257 = vmatprep.subr.bf16.mxu0 0
      %1258 = vmatpush1.bf16.msra.mxu0 0
      %1259 = vmatprep.mubr.bf16.mxu0 0
      %1260 = vmatmul.mubr.bf16.gmra.mrb[0].mxu0 %v1204
      %v1261 = vpop.f32.mrb[0].mxu0
      %v1262 = vadd.f32 0.0, %v1261
      %v1263 = vpop.f32.mrb[0].mxu0
      %v1264 = vpop.f32.mrb[0].mxu0
      %v1265 = vadd.f32 0.0, %v1264
      %v1266 = vpop.f32.mrb[0].mxu0
      %1267 = vmatprep.mubr.bf16.mxu0 0
      %1268 = vmatmul.mubr.bf16.gmra.mrb[0].mxu0 %v1207
      %v1269 = vpop.f32.mrb[0].mxu0
      %v1270 = vadd.f32 0.0, %v1269
      %v1271 = vpop.f32.mrb[0].mxu0
      %v1272 = vpop.f32.mrb[0].mxu0
      %v1273 = vadd.f32 0.0, %v1272
      %v1274 = vpop.f32.mrb[0].mxu0
      %1275 = vmatprep.mubr.bf16.mxu0 0
      %1276 = vmatmul.mubr.bf16.gmra.mrb[0].mxu0 %v1210
      %v1277 = vpop.f32.mrb[0].mxu0
      %v1278 = vadd.f32 0.0, %v1277
      %v1279 = vpop.f32.mrb[0].mxu0
      %v1280 = vpop.f32.mrb[0].mxu0
      %v1281 = vadd.f32 0.0, %v1280
      %v1282 = vpop.f32.mrb[0].mxu0
      %1283 = vmatprep.mubr.bf16.mxu0 0
      %1284 = vmatmul.mubr.bf16.gmra.mrb[0].mxu0 %v1213
      %v1285 = vpop.f32.mrb[0].mxu0
      %v1286 = vadd.f32 0.0, %v1285
      %v1287 = vpop.f32.mrb[0].mxu0
      %v1288 = vpop.f32.mrb[0].mxu0
      %v1289 = vadd.f32 0.0, %v1288
      %v1290 = vpop.f32.mrb[0].mxu0
      %1291 = vmatprep.mubr.bf16.mxu0 0
      %1292 = vmatmul.mubr.bf16.gmra.mrb[0].mxu0 %v1216
      %v1293 = vpop.f32.mrb[0].mxu0
      %v1294 = vadd.f32 0.0, %v1293
      %v1295 = vpop.f32.mrb[0].mxu0
      %v1296 = vpop.f32.mrb[0].mxu0
      %v1297 = vadd.f32 0.0, %v1296
      %v1298 = vpop.f32.mrb[0].mxu0
      %1299 = vmatprep.mubr.bf16.mxu0 0
      %1300 = vmatmul.mubr.bf16.gmra.mrb[0].mxu0 %v1219
      %v1301 = vpop.f32.mrb[0].mxu0
      %v1302 = vadd.f32 0.0, %v1301
      %v1303 = vpop.f32.mrb[0].mxu0
      %v1304 = vpop.f32.mrb[0].mxu0
      %v1305 = vadd.f32 0.0, %v1304
      %v1306 = vpop.f32.mrb[0].mxu0
      %1307 = vmatprep.mubr.bf16.mxu0 0
      %1308 = vmatmul.mubr.bf16.gmra.mrb[0].mxu0 %v1222
      %v1309 = vpop.f32.mrb[0].mxu0
      %v1310 = vadd.f32 0.0, %v1309
      %v1311 = vpop.f32.mrb[0].mxu0
      %v1312 = vpop.f32.mrb[0].mxu0
      %v1313 = vadd.f32 0.0, %v1312
      %v1314 = vpop.f32.mrb[0].mxu0
      %1315 = vmatprep.mubr.bf16.mxu0 0
      %1316 = vmatmul.mubr.bf16.gmra.mrb[0].mxu0 %v1225
      %v1317 = vpop.f32.mrb[0].mxu0
      %v1318 = vadd.f32 0.0, %v1317
      %v1319 = vpop.f32.mrb[0].mxu0
      %v1320 = vpop.f32.mrb[0].mxu0
      %v1321 = vadd.f32 0.0, %v1320
      %v1322 = vpop.f32.mrb[0].mxu0
      %1323 = vdwg.mxu0
      %v1324 = vadd.f32 %v1121, %v1262
      %v1325 = vadd.f32 %v1122, %v1265
      %v1326 = vadd.f32 %v1123, %v1270
      %v1327 = vadd.f32 %v1124, %v1273
      %v1328 = vadd.f32 %v1125, %v1278
      %v1329 = vadd.f32 %v1126, %v1281
      %v1330 = vadd.f32 %v1127, %v1286
      %v1331 = vadd.f32 %v1128, %v1289
      %v1332 = vadd.f32 %v1129, %v1294
      %v1333 = vadd.f32 %v1130, %v1297
      %v1334 = vadd.f32 %v1131, %v1302
      %v1335 = vadd.f32 %v1132, %v1305
      %v1336 = vadd.f32 %v1133, %v1310
      %v1337 = vadd.f32 %v1134, %v1313
      %v1338 = vadd.f32 %v1135, %v1318
      %v1339 = vadd.f32 %v1136, %v1321
      %s1340 = scalar_lea.vmem %s313, 432
      %v1341 = vld [vmem:[%s1340] sm:$0xf]
      %v1342 = vld [vmem:[%s1340 + $0x8] sm:$0xf]
      %v1343 = vld [vmem:[%s1340 + $0x10] sm:$0xf]
      %v1344 = vld [vmem:[%s1340 + $0x18] sm:$0xf]
      %v1345 = vld [vmem:[%s1340 + $0x20] sm:$0xf]
      %v1346 = vld [vmem:[%s1340 + $0x28] sm:$0xf]
      %v1347 = vld [vmem:[%s1340 + $0x30] sm:$0xf]
      %v1348 = vld [vmem:[%s1340 + $0x38] sm:$0xf]
      %v1349 = vld [vmem:[%s1340 + $0x48] sm:$0xf]
      %v1350 = vld [vmem:[%s1340 + $0x50] sm:$0xf]
      %v1351 = vld [vmem:[%s1340 + $0x58] sm:$0xf]
      %v1352 = vld [vmem:[%s1340 + $0x60] sm:$0xf]
      %v1353 = vld [vmem:[%s1340 + $0x68] sm:$0xf]
      %v1354 = vld [vmem:[%s1340 + $0x70] sm:$0xf]
      %v1355 = vld [vmem:[%s1340 + $0x78] sm:$0xf]
      %v1356 = vld [vmem:[%s1340 + $0x80] sm:$0xf]
      %s1357 = scalar_lea.vmem %s320, 32
      %v1358 = vld [vmem:[%s1357] sm:$0xf]
      %v1359 = vld [vmem:[%s1357 + $0x4] sm:$0xf]
      %v1376 = vunpack.c.l.b16 %v1341
      %v1377 = vunpack.c.l.b16 %v1342
      %v1378 = vunpack.c.l.b16 %v1343
      %v1379 = vunpack.c.l.b16 %v1344
      %v1380 = vunpack.c.l.b16 %v1345
      %v1381 = vunpack.c.l.b16 %v1346
      %v1382 = vunpack.c.l.b16 %v1347
      %v1383 = vunpack.c.l.b16 %v1348
      %v1384 = vunpack.c.l.b16 %v1349
      %v1385 = vunpack.c.l.b16 %v1350
      %v1386 = vunpack.c.l.b16 %v1351
      %v1387 = vunpack.c.l.b16 %v1352
      %v1388 = vunpack.c.l.b16 %v1353
      %v1389 = vunpack.c.l.b16 %v1354
      %v1390 = vunpack.c.l.b16 %v1355
      %v1391 = vunpack.c.l.b16 %v1356
      %v1392 = vpack.c.b16 %v1377, %v1376
      %v1393 = vpack.c.b16 %v1379, %v1378
      %v1394 = vpack.c.b16 %v1381, %v1380
      %v1395 = vpack.c.b16 %v1383, %v1382
      %v1396 = vpack.c.b16 %v1385, %v1384
      %v1397 = vpack.c.b16 %v1387, %v1386
      %v1398 = vpack.c.b16 %v1389, %v1388
      %v1399 = vpack.c.b16 %v1391, %v1390
      %v1402 = vunpack.c.l.b16 %v1358
      %v1403 = vunpack.c.l.b16 %v1359
      %v1404 = vpack.c.b16 %v1403, %v1402
      %v1407 = vsel %vm419, %v1392, 0
      %v1410 = vsel %vm419, %v1393, 0
      %v1413 = vsel %vm419, %v1394, 0
      %v1416 = vsel %vm419, %v1395, 0
      %v1419 = vsel %vm419, %v1396, 0
      %v1422 = vsel %vm419, %v1397, 0
      %v1425 = vsel %vm419, %v1398, 0
      %v1428 = vsel %vm419, %v1399, 0
      %1430 = vmatprep.subr.bf16.mxu0 0
      %1431 = vmatpush1.bf16.msra.mxu0 %v1404
      %1432 = vmatprep.subr.bf16.mxu0 0
      %1433 = vmatpush1.bf16.msra.mxu0 0
      %1434 = vmatprep.subr.bf16.mxu0 0
      %1435 = vmatpush1.bf16.msra.mxu0 0
      %1436 = vmatprep.subr.bf16.mxu0 0
      %1437 = vmatpush1.bf16.msra.mxu0 0
      %1438 = vmatprep.subr.bf16.mxu0 0
      %1439 = vmatpush1.bf16.msra.mxu0 0
      %1440 = vmatprep.subr.bf16.mxu0 0
      %1441 = vmatpush1.bf16.msra.mxu0 0
      %1442 = vmatprep.subr.bf16.mxu0 0
      %1443 = vmatpush1.bf16.msra.mxu0 0
      %1444 = vmatprep.subr.bf16.mxu0 0
      %1445 = vmatpush1.bf16.msra.mxu0 0
      %1446 = vmatprep.subr.bf16.mxu0 0
      %1447 = vmatpush1.bf16.msra.mxu0 0
      %1448 = vmatprep.subr.bf16.mxu0 0
      %1449 = vmatpush1.bf16.msra.mxu0 0
      %1450 = vmatprep.subr.bf16.mxu0 0
      %1451 = vmatpush1.bf16.msra.mxu0 0
      %1452 = vmatprep.subr.bf16.mxu0 0
      %1453 = vmatpush1.bf16.msra.mxu0 0
      %1454 = vmatprep.subr.bf16.mxu0 0
      %1455 = vmatpush1.bf16.msra.mxu0 0
      %1456 = vmatprep.subr.bf16.mxu0 0
      %1457 = vmatpush1.bf16.msra.mxu0 0
      %1458 = vmatprep.subr.bf16.mxu0 0
      %1459 = vmatpush1.bf16.msra.mxu0 0
      %1460 = vmatprep.subr.bf16.mxu0 0
      %1461 = vmatpush1.bf16.msra.mxu0 0
      %1462 = vmatprep.mubr.bf16.mxu0 0
      %1463 = vmatmul.mubr.bf16.gmra.mrb[0].mxu0 %v1407
      %v1464 = vpop.f32.mrb[0].mxu0
      %v1465 = vadd.f32 0.0, %v1464
      %v1466 = vpop.f32.mrb[0].mxu0
      %v1467 = vpop.f32.mrb[0].mxu0
      %v1468 = vadd.f32 0.0, %v1467
      %v1469 = vpop.f32.mrb[0].mxu0
      %1470 = vmatprep.mubr.bf16.mxu0 0
      %1471 = vmatmul.mubr.bf16.gmra.mrb[0].mxu0 %v1410
      %v1472 = vpop.f32.mrb[0].mxu0
      %v1473 = vadd.f32 0.0, %v1472
      %v1474 = vpop.f32.mrb[0].mxu0
      %v1475 = vpop.f32.mrb[0].mxu0
      %v1476 = vadd.f32 0.0, %v1475
      %v1477 = vpop.f32.mrb[0].mxu0
      %1478 = vmatprep.mubr.bf16.mxu0 0
      %1479 = vmatmul.mubr.bf16.gmra.mrb[0].mxu0 %v1413
      %v1480 = vpop.f32.mrb[0].mxu0
      %v1481 = vadd.f32 0.0, %v1480
      %v1482 = vpop.f32.mrb[0].mxu0
      %v1483 = vpop.f32.mrb[0].mxu0
      %v1484 = vadd.f32 0.0, %v1483
      %v1485 = vpop.f32.mrb[0].mxu0
      %1486 = vmatprep.mubr.bf16.mxu0 0
      %1487 = vmatmul.mubr.bf16.gmra.mrb[0].mxu0 %v1416
      %v1488 = vpop.f32.mrb[0].mxu0
      %v1489 = vadd.f32 0.0, %v1488
      %v1490 = vpop.f32.mrb[0].mxu0
      %v1491 = vpop.f32.mrb[0].mxu0
      %v1492 = vadd.f32 0.0, %v1491
      %v1493 = vpop.f32.mrb[0].mxu0
      %1494 = vmatprep.mubr.bf16.mxu0 0
      %1495 = vmatmul.mubr.bf16.gmra.mrb[0].mxu0 %v1419
      %v1496 = vpop.f32.mrb[0].mxu0
      %v1497 = vadd.f32 0.0, %v1496
      %v1498 = vpop.f32.mrb[0].mxu0
      %v1499 = vpop.f32.mrb[0].mxu0
      %v1500 = vadd.f32 0.0, %v1499
      %v1501 = vpop.f32.mrb[0].mxu0
      %1502 = vmatprep.mubr.bf16.mxu0 0
      %1503 = vmatmul.mubr.bf16.gmra.mrb[0].mxu0 %v1422
      %v1504 = vpop.f32.mrb[0].mxu0
      %v1505 = vadd.f32 0.0, %v1504
      %v1506 = vpop.f32.mrb[0].mxu0
      %v1507 = vpop.f32.mrb[0].mxu0
      %v1508 = vadd.f32 0.0, %v1507
      %v1509 = vpop.f32.mrb[0].mxu0
      %1510 = vmatprep.mubr.bf16.mxu0 0
      %1511 = vmatmul.mubr.bf16.gmra.mrb[0].mxu0 %v1425
      %v1512 = vpop.f32.mrb[0].mxu0
      %v1513 = vadd.f32 0.0, %v1512
      %v1514 = vpop.f32.mrb[0].mxu0
      %v1515 = vpop.f32.mrb[0].mxu0
      %v1516 = vadd.f32 0.0, %v1515
      %v1517 = vpop.f32.mrb[0].mxu0
      %1518 = vmatprep.mubr.bf16.mxu0 0
      %1519 = vmatmul.mubr.bf16.gmra.mrb[0].mxu0 %v1428
      %v1520 = vpop.f32.mrb[0].mxu0
      %v1521 = vadd.f32 0.0, %v1520
      %v1522 = vpop.f32.mrb[0].mxu0
      %v1523 = vpop.f32.mrb[0].mxu0
      %v1524 = vadd.f32 0.0, %v1523
      %v1525 = vpop.f32.mrb[0].mxu0
      %1526 = vdwg.mxu0
      %v1527 = vadd.f32 %v1324, %v1465
      %v1528 = vadd.f32 %v1325, %v1468
      %v1529 = vadd.f32 %v1326, %v1473
      %v1530 = vadd.f32 %v1327, %v1476
      %v1531 = vadd.f32 %v1328, %v1481
      %v1532 = vadd.f32 %v1329, %v1484
      %v1533 = vadd.f32 %v1330, %v1489
      %v1534 = vadd.f32 %v1331, %v1492
      %v1535 = vadd.f32 %v1332, %v1497
      %v1536 = vadd.f32 %v1333, %v1500
      %v1537 = vadd.f32 %v1334, %v1505
      %v1538 = vadd.f32 %v1335, %v1508
      %v1539 = vadd.f32 %v1336, %v1513
      %v1540 = vadd.f32 %v1337, %v1516
      %v1541 = vadd.f32 %v1338, %v1521
      %v1542 = vadd.f32 %v1339, %v1524
      %v1543 = vld [vmem:[%s1137] sm:$0xf]
      %v1544 = vld [vmem:[%s1137 + $0x4] sm:$0x1]
      %v1545 = vld [vmem:[%s1137 + $0x8] sm:$0xf]
      %v1546 = vld [vmem:[%s1137 + $0xc] sm:$0x1]
      %v1547 = vld [vmem:[%s1137 + $0x10] sm:$0xf]
      %v1548 = vld [vmem:[%s1137 + $0x14] sm:$0x1]
      %v1549 = vld [vmem:[%s1137 + $0x18] sm:$0xf]
      %v1550 = vld [vmem:[%s1137 + $0x1c] sm:$0x1]
      %v1551 = vld [vmem:[%s1137 + $0x20] sm:$0xf]
      %v1552 = vld [vmem:[%s1137 + $0x24] sm:$0x1]
      %v1553 = vld [vmem:[%s1137 + $0x28] sm:$0xf]
      %v1554 = vld [vmem:[%s1137 + $0x2c] sm:$0x1]
      %v1555 = vld [vmem:[%s1137 + $0x30] sm:$0xf]
      %v1556 = vld [vmem:[%s1137 + $0x34] sm:$0x1]
      %v1557 = vld [vmem:[%s1137 + $0x38] sm:$0xf]
      %v1558 = vld [vmem:[%s1137 + $0x3c] sm:$0x1]
      %v1559 = vld [vmem:[%s1137 + $0x48] sm:$0xf]
      %v1560 = vld [vmem:[%s1137 + $0x4c] sm:$0x1]
      %v1561 = vld [vmem:[%s1137 + $0x50] sm:$0xf]
      %v1562 = vld [vmem:[%s1137 + $0x54] sm:$0x1]
      %v1563 = vld [vmem:[%s1137 + $0x58] sm:$0xf]
      %v1564 = vld [vmem:[%s1137 + $0x5c] sm:$0x1]
      %v1565 = vld [vmem:[%s1137 + $0x60] sm:$0xf]
      %v1566 = vld [vmem:[%s1137 + $0x64] sm:$0x1]
      %v1567 = vld [vmem:[%s1137 + $0x68] sm:$0xf]
      %v1568 = vld [vmem:[%s1137 + $0x6c] sm:$0x1]
      %v1569 = vld [vmem:[%s1137 + $0x70] sm:$0xf]
      %v1570 = vld [vmem:[%s1137 + $0x74] sm:$0x1]
      %v1571 = vld [vmem:[%s1137 + $0x78] sm:$0xf]
      %v1572 = vld [vmem:[%s1137 + $0x7c] sm:$0x1]
      %v1573 = vld [vmem:[%s1137 + $0x80] sm:$0xf]
      %v1574 = vld [vmem:[%s1137 + $0x84] sm:$0x1]
      %v1576 = vshrl.u32 %v1543, 16
      %v1578 = vrot.slane %v1576, 4
      %v1579 = vshll.u32 %v1543, 16
      %v1581 = vrot.slane %v1579, 5
      %v1582 = vor.u32 %v1578, %v1581
      %v1583 = vrot.slane %v1582, 4
      %v1585 = vshll.u32 %v1544, 16
      %v1587 = vrot.slane %v1585, 5
      %v1588 = vsel %vm742, %v1583, %v1587
      %v1590 = vshrl.u32 %v1545, 16
      %v1592 = vrot.slane %v1590, 4
      %v1593 = vshll.u32 %v1545, 16
      %v1595 = vrot.slane %v1593, 5
      %v1596 = vor.u32 %v1592, %v1595
      %v1597 = vrot.slane %v1596, 4
      %v1599 = vshll.u32 %v1546, 16
      %v1601 = vrot.slane %v1599, 5
      %v1602 = vsel %vm742, %v1597, %v1601
      %v1604 = vshrl.u32 %v1547, 16
      %v1606 = vrot.slane %v1604, 4
      %v1607 = vshll.u32 %v1547, 16
      %v1609 = vrot.slane %v1607, 5
      %v1610 = vor.u32 %v1606, %v1609
      %v1611 = vrot.slane %v1610, 4
      %v1613 = vshll.u32 %v1548, 16
      %v1615 = vrot.slane %v1613, 5
      %v1616 = vsel %vm742, %v1611, %v1615
      %v1618 = vshrl.u32 %v1549, 16
      %v1620 = vrot.slane %v1618, 4
      %v1621 = vshll.u32 %v1549, 16
      %v1623 = vrot.slane %v1621, 5
      %v1624 = vor.u32 %v1620, %v1623
      %v1625 = vrot.slane %v1624, 4
      %v1627 = vshll.u32 %v1550, 16
      %v1629 = vrot.slane %v1627, 5
      %v1630 = vsel %vm742, %v1625, %v1629
      %v1632 = vshrl.u32 %v1551, 16
      %v1634 = vrot.slane %v1632, 4
      %v1635 = vshll.u32 %v1551, 16
      %v1637 = vrot.slane %v1635, 5
      %v1638 = vor.u32 %v1634, %v1637
      %v1639 = vrot.slane %v1638, 4
      %v1641 = vshll.u32 %v1552, 16
      %v1643 = vrot.slane %v1641, 5
      %v1644 = vsel %vm742, %v1639, %v1643
      %v1646 = vshrl.u32 %v1553, 16
      %v1648 = vrot.slane %v1646, 4
      %v1649 = vshll.u32 %v1553, 16
      %v1651 = vrot.slane %v1649, 5
      %v1652 = vor.u32 %v1648, %v1651
      %v1653 = vrot.slane %v1652, 4
      %v1655 = vshll.u32 %v1554, 16
      %v1657 = vrot.slane %v1655, 5
      %v1658 = vsel %vm742, %v1653, %v1657
      %v1660 = vshrl.u32 %v1555, 16
      %v1662 = vrot.slane %v1660, 4
      %v1663 = vshll.u32 %v1555, 16
      %v1665 = vrot.slane %v1663, 5
      %v1666 = vor.u32 %v1662, %v1665
      %v1667 = vrot.slane %v1666, 4
      %v1669 = vshll.u32 %v1556, 16
      %v1671 = vrot.slane %v1669, 5
      %v1672 = vsel %vm742, %v1667, %v1671
      %v1674 = vshrl.u32 %v1557, 16
      %v1676 = vrot.slane %v1674, 4
      %v1677 = vshll.u32 %v1557, 16
      %v1679 = vrot.slane %v1677, 5
      %v1680 = vor.u32 %v1676, %v1679
      %v1681 = vrot.slane %v1680, 4
      %v1683 = vshll.u32 %v1558, 16
      %v1685 = vrot.slane %v1683, 5
      %v1686 = vsel %vm742, %v1681, %v1685
      %v1688 = vshrl.u32 %v1559, 16
      %v1690 = vrot.slane %v1688, 4
      %v1691 = vshll.u32 %v1559, 16
      %v1693 = vrot.slane %v1691, 5
      %v1694 = vor.u32 %v1690, %v1693
      %v1695 = vrot.slane %v1694, 4
      %v1697 = vshll.u32 %v1560, 16
      %v1699 = vrot.slane %v1697, 5
      %v1700 = vsel %vm742, %v1695, %v1699
      %v1702 = vshrl.u32 %v1561, 16
      %v1704 = vrot.slane %v1702, 4
      %v1705 = vshll.u32 %v1561, 16
      %v1707 = vrot.slane %v1705, 5
      %v1708 = vor.u32 %v1704, %v1707
      %v1709 = vrot.slane %v1708, 4
      %v1711 = vshll.u32 %v1562, 16
      %v1713 = vrot.slane %v1711, 5
      %v1714 = vsel %vm742, %v1709, %v1713
      %v1716 = vshrl.u32 %v1563, 16
      %v1718 = vrot.slane %v1716, 4
      %v1719 = vshll.u32 %v1563, 16
      %v1721 = vrot.slane %v1719, 5
      %v1722 = vor.u32 %v1718, %v1721
      %v1723 = vrot.slane %v1722, 4
      %v1725 = vshll.u32 %v1564, 16
      %v1727 = vrot.slane %v1725, 5
      %v1728 = vsel %vm742, %v1723, %v1727
      %v1730 = vshrl.u32 %v1565, 16
      %v1732 = vrot.slane %v1730, 4
      %v1733 = vshll.u32 %v1565, 16
      %v1735 = vrot.slane %v1733, 5
      %v1736 = vor.u32 %v1732, %v1735
      %v1737 = vrot.slane %v1736, 4
      %v1739 = vshll.u32 %v1566, 16
      %v1741 = vrot.slane %v1739, 5
      %v1742 = vsel %vm742, %v1737, %v1741
      %v1744 = vshrl.u32 %v1567, 16
      %v1746 = vrot.slane %v1744, 4
      %v1747 = vshll.u32 %v1567, 16
      %v1749 = vrot.slane %v1747, 5
      %v1750 = vor.u32 %v1746, %v1749
      %v1751 = vrot.slane %v1750, 4
      %v1753 = vshll.u32 %v1568, 16
      %v1755 = vrot.slane %v1753, 5
      %v1756 = vsel %vm742, %v1751, %v1755
      %v1758 = vshrl.u32 %v1569, 16
      %v1760 = vrot.slane %v1758, 4
      %v1761 = vshll.u32 %v1569, 16
      %v1763 = vrot.slane %v1761, 5
      %v1764 = vor.u32 %v1760, %v1763
      %v1765 = vrot.slane %v1764, 4
      %v1767 = vshll.u32 %v1570, 16
      %v1769 = vrot.slane %v1767, 5
      %v1770 = vsel %vm742, %v1765, %v1769
      %v1772 = vshrl.u32 %v1571, 16
      %v1774 = vrot.slane %v1772, 4
      %v1775 = vshll.u32 %v1571, 16
      %v1777 = vrot.slane %v1775, 5
      %v1778 = vor.u32 %v1774, %v1777
      %v1779 = vrot.slane %v1778, 4
      %v1781 = vshll.u32 %v1572, 16
      %v1783 = vrot.slane %v1781, 5
      %v1784 = vsel %vm742, %v1779, %v1783
      %v1786 = vshrl.u32 %v1573, 16
      %v1788 = vrot.slane %v1786, 4
      %v1789 = vshll.u32 %v1573, 16
      %v1791 = vrot.slane %v1789, 5
      %v1792 = vor.u32 %v1788, %v1791
      %v1793 = vrot.slane %v1792, 4
      %v1795 = vshll.u32 %v1574, 16
      %v1797 = vrot.slane %v1795, 5
      %v1798 = vsel %vm742, %v1793, %v1797
      %s1799 = scalar_lea.vmem %s320, 40
      %v1800 = vld [vmem:[%s1799] sm:$0xf]
      %v1801 = vld [vmem:[%s1799 + $0x4] sm:$0xf]
      %v1802 = vunpack.c.l.b16 %v1588
      %v1803 = vunpack.c.l.b16 %v1602
      %v1804 = vunpack.c.l.b16 %v1616
      %v1805 = vunpack.c.l.b16 %v1630
      %v1806 = vunpack.c.l.b16 %v1644
      %v1807 = vunpack.c.l.b16 %v1658
      %v1808 = vunpack.c.l.b16 %v1672
      %v1809 = vunpack.c.l.b16 %v1686
      %v1810 = vunpack.c.l.b16 %v1700
      %v1811 = vunpack.c.l.b16 %v1714
      %v1812 = vunpack.c.l.b16 %v1728
      %v1813 = vunpack.c.l.b16 %v1742
      %v1814 = vunpack.c.l.b16 %v1756
      %v1815 = vunpack.c.l.b16 %v1770
      %v1816 = vunpack.c.l.b16 %v1784
      %v1817 = vunpack.c.l.b16 %v1798
      %v1818 = vpack.c.b16 %v1803, %v1802
      %v1819 = vpack.c.b16 %v1805, %v1804
      %v1820 = vpack.c.b16 %v1807, %v1806
      %v1821 = vpack.c.b16 %v1809, %v1808
      %v1822 = vpack.c.b16 %v1811, %v1810
      %v1823 = vpack.c.b16 %v1813, %v1812
      %v1824 = vpack.c.b16 %v1815, %v1814
      %v1825 = vpack.c.b16 %v1817, %v1816
      %v1828 = vunpack.c.l.b16 %v1800
      %v1829 = vunpack.c.l.b16 %v1801
      %v1830 = vpack.c.b16 %v1829, %v1828
      %v1833 = vsel %vm419, %v1818, 0
      %v1836 = vsel %vm419, %v1819, 0
      %v1839 = vsel %vm419, %v1820, 0
      %v1842 = vsel %vm419, %v1821, 0
      %v1845 = vsel %vm419, %v1822, 0
      %v1848 = vsel %vm419, %v1823, 0
      %v1851 = vsel %vm419, %v1824, 0
      %v1854 = vsel %vm419, %v1825, 0
      %1856 = vmatprep.subr.bf16.mxu0 0
      %1857 = vmatpush1.bf16.msra.mxu0 %v1830
      %1858 = vmatprep.subr.bf16.mxu0 0
      %1859 = vmatpush1.bf16.msra.mxu0 0
      %1860 = vmatprep.subr.bf16.mxu0 0
      %1861 = vmatpush1.bf16.msra.mxu0 0
      %1862 = vmatprep.subr.bf16.mxu0 0
      %1863 = vmatpush1.bf16.msra.mxu0 0
      %1864 = vmatprep.subr.bf16.mxu0 0
      %1865 = vmatpush1.bf16.msra.mxu0 0
      %1866 = vmatprep.subr.bf16.mxu0 0
      %1867 = vmatpush1.bf16.msra.mxu0 0
      %1868 = vmatprep.subr.bf16.mxu0 0
      %1869 = vmatpush1.bf16.msra.mxu0 0
      %1870 = vmatprep.subr.bf16.mxu0 0
      %1871 = vmatpush1.bf16.msra.mxu0 0
      %1872 = vmatprep.subr.bf16.mxu0 0
      %1873 = vmatpush1.bf16.msra.mxu0 0
      %1874 = vmatprep.subr.bf16.mxu0 0
      %1875 = vmatpush1.bf16.msra.mxu0 0
      %1876 = vmatprep.subr.bf16.mxu0 0
      %1877 = vmatpush1.bf16.msra.mxu0 0
      %1878 = vmatprep.subr.bf16.mxu0 0
      %1879 = vmatpush1.bf16.msra.mxu0 0
      %1880 = vmatprep.subr.bf16.mxu0 0
      %1881 = vmatpush1.bf16.msra.mxu0 0
      %1882 = vmatprep.subr.bf16.mxu0 0
      %1883 = vmatpush1.bf16.msra.mxu0 0
      %1884 = vmatprep.subr.bf16.mxu0 0
      %1885 = vmatpush1.bf16.msra.mxu0 0
      %1886 = vmatprep.subr.bf16.mxu0 0
      %1887 = vmatpush1.bf16.msra.mxu0 0
      %1888 = vmatprep.mubr.bf16.mxu0 0
      %1889 = vmatmul.mubr.bf16.gmra.mrb[0].mxu0 %v1833
      %v1890 = vpop.f32.mrb[0].mxu0
      %v1891 = vadd.f32 0.0, %v1890
      %v1892 = vpop.f32.mrb[0].mxu0
      %v1893 = vpop.f32.mrb[0].mxu0
      %v1894 = vadd.f32 0.0, %v1893
      %v1895 = vpop.f32.mrb[0].mxu0
      %1896 = vmatprep.mubr.bf16.mxu0 0
      %1897 = vmatmul.mubr.bf16.gmra.mrb[0].mxu0 %v1836
      %v1898 = vpop.f32.mrb[0].mxu0
      %v1899 = vadd.f32 0.0, %v1898
      %v1900 = vpop.f32.mrb[0].mxu0
      %v1901 = vpop.f32.mrb[0].mxu0
      %v1902 = vadd.f32 0.0, %v1901
      %v1903 = vpop.f32.mrb[0].mxu0
      %1904 = vmatprep.mubr.bf16.mxu0 0
      %1905 = vmatmul.mubr.bf16.gmra.mrb[0].mxu0 %v1839
      %v1906 = vpop.f32.mrb[0].mxu0
      %v1907 = vadd.f32 0.0, %v1906
      %v1908 = vpop.f32.mrb[0].mxu0
      %v1909 = vpop.f32.mrb[0].mxu0
      %v1910 = vadd.f32 0.0, %v1909
      %v1911 = vpop.f32.mrb[0].mxu0
      %1912 = vmatprep.mubr.bf16.mxu0 0
      %1913 = vmatmul.mubr.bf16.gmra.mrb[0].mxu0 %v1842
      %v1914 = vpop.f32.mrb[0].mxu0
      %v1915 = vadd.f32 0.0, %v1914
      %v1916 = vpop.f32.mrb[0].mxu0
      %v1917 = vpop.f32.mrb[0].mxu0
      %v1918 = vadd.f32 0.0, %v1917
      %v1919 = vpop.f32.mrb[0].mxu0
      %1920 = vmatprep.mubr.bf16.mxu0 0
      %1921 = vmatmul.mubr.bf16.gmra.mrb[0].mxu0 %v1845
      %v1922 = vpop.f32.mrb[0].mxu0
      %v1923 = vadd.f32 0.0, %v1922
      %v1924 = vpop.f32.mrb[0].mxu0
      %v1925 = vpop.f32.mrb[0].mxu0
      %v1926 = vadd.f32 0.0, %v1925
      %v1927 = vpop.f32.mrb[0].mxu0
      %1928 = vmatprep.mubr.bf16.mxu0 0
      %1929 = vmatmul.mubr.bf16.gmra.mrb[0].mxu0 %v1848
      %v1930 = vpop.f32.mrb[0].mxu0
      %v1931 = vadd.f32 0.0, %v1930
      %v1932 = vpop.f32.mrb[0].mxu0
      %v1933 = vpop.f32.mrb[0].mxu0
      %v1934 = vadd.f32 0.0, %v1933
      %v1935 = vpop.f32.mrb[0].mxu0
      %1936 = vmatprep.mubr.bf16.mxu0 0
      %1937 = vmatmul.mubr.bf16.gmra.mrb[0].mxu0 %v1851
      %v1938 = vpop.f32.mrb[0].mxu0
      %v1939 = vadd.f32 0.0, %v1938
      %v1940 = vpop.f32.mrb[0].mxu0
      %v1941 = vpop.f32.mrb[0].mxu0
      %v1942 = vadd.f32 0.0, %v1941
      %v1943 = vpop.f32.mrb[0].mxu0
      %1944 = vmatprep.mubr.bf16.mxu0 0
      %1945 = vmatmul.mubr.bf16.gmra.mrb[0].mxu0 %v1854
      %v1946 = vpop.f32.mrb[0].mxu0
      %v1947 = vadd.f32 0.0, %v1946
      %v1948 = vpop.f32.mrb[0].mxu0
      %v1949 = vpop.f32.mrb[0].mxu0
      %v1950 = vadd.f32 0.0, %v1949
      %v1951 = vpop.f32.mrb[0].mxu0
      %1952 = vdwg.mxu0
      %v1953 = vadd.f32 %v1527, %v1891
      %v1954 = vadd.f32 %v1528, %v1894
      %v1955 = vadd.f32 %v1529, %v1899
      %v1956 = vadd.f32 %v1530, %v1902
      %v1957 = vadd.f32 %v1531, %v1907
      %v1958 = vadd.f32 %v1532, %v1910
      %v1959 = vadd.f32 %v1533, %v1915
      %v1960 = vadd.f32 %v1534, %v1918
      %v1961 = vadd.f32 %v1535, %v1923
      %v1962 = vadd.f32 %v1536, %v1926
      %v1963 = vadd.f32 %v1537, %v1931
      %v1964 = vadd.f32 %v1538, %v1934
      %v1965 = vadd.f32 %v1539, %v1939
      %v1966 = vadd.f32 %v1540, %v1942
      %v1967 = vadd.f32 %v1541, %v1947
      %v1968 = vadd.f32 %v1542, %v1950
      %s1969 = scalar_lea.vmem %s313, 8
      %v1970 = vld [vmem:[%s1969] sm:$0xf]
      %v1971 = vld [vmem:[%s1969 + $0x8] sm:$0xf]
      %v1972 = vld [vmem:[%s1969 + $0x10] sm:$0xf]
      %v1973 = vld [vmem:[%s1969 + $0x18] sm:$0xf]
      %v1974 = vld [vmem:[%s1969 + $0x20] sm:$0xf]
      %v1975 = vld [vmem:[%s1969 + $0x28] sm:$0xf]
      %v1976 = vld [vmem:[%s1969 + $0x30] sm:$0xf]
      %v1977 = vld [vmem:[%s1969 + $0x38] sm:$0xf]
      %v1978 = vld [vmem:[%s1969 + $0x48] sm:$0xf]
      %v1979 = vld [vmem:[%s1969 + $0x50] sm:$0xf]
      %v1980 = vld [vmem:[%s1969 + $0x58] sm:$0xf]
      %v1981 = vld [vmem:[%s1969 + $0x60] sm:$0xf]
      %v1982 = vld [vmem:[%s1969 + $0x68] sm:$0xf]
      %v1983 = vld [vmem:[%s1969 + $0x70] sm:$0xf]
      %v1984 = vld [vmem:[%s1969 + $0x78] sm:$0xf]
      %v1985 = vld [vmem:[%s1969 + $0x80] sm:$0xf]
      %s1986 = scalar_lea.vmem %s320, 48
      %v1987 = vld [vmem:[%s1986] sm:$0xf]
      %v1988 = vld [vmem:[%s1986 + $0x4] sm:$0xf]
      %v2005 = vunpack.c.l.b16 %v1970
      %v2006 = vunpack.c.l.b16 %v1971
      %v2007 = vunpack.c.l.b16 %v1972
      %v2008 = vunpack.c.l.b16 %v1973
      %v2009 = vunpack.c.l.b16 %v1974
      %v2010 = vunpack.c.l.b16 %v1975
      %v2011 = vunpack.c.l.b16 %v1976
      %v2012 = vunpack.c.l.b16 %v1977
      %v2013 = vunpack.c.l.b16 %v1978
      %v2014 = vunpack.c.l.b16 %v1979
      %v2015 = vunpack.c.l.b16 %v1980
      %v2016 = vunpack.c.l.b16 %v1981
      %v2017 = vunpack.c.l.b16 %v1982
      %v2018 = vunpack.c.l.b16 %v1983
      %v2019 = vunpack.c.l.b16 %v1984
      %v2020 = vunpack.c.l.b16 %v1985
      %v2021 = vpack.c.b16 %v2006, %v2005
      %v2022 = vpack.c.b16 %v2008, %v2007
      %v2023 = vpack.c.b16 %v2010, %v2009
      %v2024 = vpack.c.b16 %v2012, %v2011
      %v2025 = vpack.c.b16 %v2014, %v2013
      %v2026 = vpack.c.b16 %v2016, %v2015
      %v2027 = vpack.c.b16 %v2018, %v2017
      %v2028 = vpack.c.b16 %v2020, %v2019
      %v2031 = vunpack.c.l.b16 %v1987
      %v2032 = vunpack.c.l.b16 %v1988
      %v2033 = vpack.c.b16 %v2032, %v2031
      %v2036 = vsel %vm419, %v2021, 0
      %v2039 = vsel %vm419, %v2022, 0
      %v2042 = vsel %vm419, %v2023, 0
      %v2045 = vsel %vm419, %v2024, 0
      %v2048 = vsel %vm419, %v2025, 0
      %v2051 = vsel %vm419, %v2026, 0
      %v2054 = vsel %vm419, %v2027, 0
      %v2057 = vsel %vm419, %v2028, 0
      %2059 = vmatprep.subr.bf16.mxu0 0
      %2060 = vmatpush1.bf16.msra.mxu0 %v2033
      %2061 = vmatprep.subr.bf16.mxu0 0
      %2062 = vmatpush1.bf16.msra.mxu0 0
      %2063 = vmatprep.subr.bf16.mxu0 0
      %2064 = vmatpush1.bf16.msra.mxu0 0
      %2065 = vmatprep.subr.bf16.mxu0 0
      %2066 = vmatpush1.bf16.msra.mxu0 0
      %2067 = vmatprep.subr.bf16.mxu0 0
      %2068 = vmatpush1.bf16.msra.mxu0 0
      %2069 = vmatprep.subr.bf16.mxu0 0
      %2070 = vmatpush1.bf16.msra.mxu0 0
      %2071 = vmatprep.subr.bf16.mxu0 0
      %2072 = vmatpush1.bf16.msra.mxu0 0
      %2073 = vmatprep.subr.bf16.mxu0 0
      %2074 = vmatpush1.bf16.msra.mxu0 0
      %2075 = vmatprep.subr.bf16.mxu0 0
      %2076 = vmatpush1.bf16.msra.mxu0 0
      %2077 = vmatprep.subr.bf16.mxu0 0
      %2078 = vmatpush1.bf16.msra.mxu0 0
      %2079 = vmatprep.subr.bf16.mxu0 0
      %2080 = vmatpush1.bf16.msra.mxu0 0
      %2081 = vmatprep.subr.bf16.mxu0 0
      %2082 = vmatpush1.bf16.msra.mxu0 0
      %2083 = vmatprep.subr.bf16.mxu0 0
      %2084 = vmatpush1.bf16.msra.mxu0 0
      %2085 = vmatprep.subr.bf16.mxu0 0
      %2086 = vmatpush1.bf16.msra.mxu0 0
      %2087 = vmatprep.subr.bf16.mxu0 0
      %2088 = vmatpush1.bf16.msra.mxu0 0
      %2089 = vmatprep.subr.bf16.mxu0 0
      %2090 = vmatpush1.bf16.msra.mxu0 0
      %2091 = vmatprep.mubr.bf16.mxu0 0
      %2092 = vmatmul.mubr.bf16.gmra.mrb[0].mxu0 %v2036
      %v2093 = vpop.f32.mrb[0].mxu0
      %v2094 = vadd.f32 0.0, %v2093
      %v2095 = vpop.f32.mrb[0].mxu0
      %v2096 = vpop.f32.mrb[0].mxu0
      %v2097 = vadd.f32 0.0, %v2096
      %v2098 = vpop.f32.mrb[0].mxu0
      %2099 = vmatprep.mubr.bf16.mxu0 0
      %2100 = vmatmul.mubr.bf16.gmra.mrb[0].mxu0 %v2039
      %v2101 = vpop.f32.mrb[0].mxu0
      %v2102 = vadd.f32 0.0, %v2101
      %v2103 = vpop.f32.mrb[0].mxu0
      %v2104 = vpop.f32.mrb[0].mxu0
      %v2105 = vadd.f32 0.0, %v2104
      %v2106 = vpop.f32.mrb[0].mxu0
      %2107 = vmatprep.mubr.bf16.mxu0 0
      %2108 = vmatmul.mubr.bf16.gmra.mrb[0].mxu0 %v2042
      %v2109 = vpop.f32.mrb[0].mxu0
      %v2110 = vadd.f32 0.0, %v2109
      %v2111 = vpop.f32.mrb[0].mxu0
      %v2112 = vpop.f32.mrb[0].mxu0
      %v2113 = vadd.f32 0.0, %v2112
      %v2114 = vpop.f32.mrb[0].mxu0
      %2115 = vmatprep.mubr.bf16.mxu0 0
      %2116 = vmatmul.mubr.bf16.gmra.mrb[0].mxu0 %v2045
      %v2117 = vpop.f32.mrb[0].mxu0
      %v2118 = vadd.f32 0.0, %v2117
      %v2119 = vpop.f32.mrb[0].mxu0
      %v2120 = vpop.f32.mrb[0].mxu0
      %v2121 = vadd.f32 0.0, %v2120
      %v2122 = vpop.f32.mrb[0].mxu0
      %2123 = vmatprep.mubr.bf16.mxu0 0
      %2124 = vmatmul.mubr.bf16.gmra.mrb[0].mxu0 %v2048
      %v2125 = vpop.f32.mrb[0].mxu0
      %v2126 = vadd.f32 0.0, %v2125
      %v2127 = vpop.f32.mrb[0].mxu0
      %v2128 = vpop.f32.mrb[0].mxu0
      %v2129 = vadd.f32 0.0, %v2128
      %v2130 = vpop.f32.mrb[0].mxu0
      %2131 = vmatprep.mubr.bf16.mxu0 0
      %2132 = vmatmul.mubr.bf16.gmra.mrb[0].mxu0 %v2051
      %v2133 = vpop.f32.mrb[0].mxu0
      %v2134 = vadd.f32 0.0, %v2133
      %v2135 = vpop.f32.mrb[0].mxu0
      %v2136 = vpop.f32.mrb[0].mxu0
      %v2137 = vadd.f32 0.0, %v2136
      %v2138 = vpop.f32.mrb[0].mxu0
      %2139 = vmatprep.mubr.bf16.mxu0 0
      %2140 = vmatmul.mubr.bf16.gmra.mrb[0].mxu0 %v2054
      %v2141 = vpop.f32.mrb[0].mxu0
      %v2142 = vadd.f32 0.0, %v2141
      %v2143 = vpop.f32.mrb[0].mxu0
      %v2144 = vpop.f32.mrb[0].mxu0
      %v2145 = vadd.f32 0.0, %v2144
      %v2146 = vpop.f32.mrb[0].mxu0
      %2147 = vmatprep.mubr.bf16.mxu0 0
      %2148 = vmatmul.mubr.bf16.gmra.mrb[0].mxu0 %v2057
      %v2149 = vpop.f32.mrb[0].mxu0
      %v2150 = vadd.f32 0.0, %v2149
      %v2151 = vpop.f32.mrb[0].mxu0
      %v2152 = vpop.f32.mrb[0].mxu0
      %v2153 = vadd.f32 0.0, %v2152
      %v2154 = vpop.f32.mrb[0].mxu0
      %2155 = vdwg.mxu0
      %v2156 = vadd.f32 %v1953, %v2094
      %v2157 = vadd.f32 %v1954, %v2097
      %v2158 = vadd.f32 %v1955, %v2102
      %v2159 = vadd.f32 %v1956, %v2105
      %v2160 = vadd.f32 %v1957, %v2110
      %v2161 = vadd.f32 %v1958, %v2113
      %v2162 = vadd.f32 %v1959, %v2118
      %v2163 = vadd.f32 %v1960, %v2121
      %v2164 = vadd.f32 %v1961, %v2126
      %v2165 = vadd.f32 %v1962, %v2129
      %v2166 = vadd.f32 %v1963, %v2134
      %v2167 = vadd.f32 %v1964, %v2137
      %v2168 = vadd.f32 %v1965, %v2142
      %v2169 = vadd.f32 %v1966, %v2145
      %v2170 = vadd.f32 %v1967, %v2150
      %v2171 = vadd.f32 %v1968, %v2153
      %s2172 = scalar_lea.vmem %s313, 152
      %v2173 = vld [vmem:[%s2172] sm:$0xf]
      %v2174 = vld [vmem:[%s2172 + $0x8] sm:$0xf]
      %v2175 = vld [vmem:[%s2172 + $0x10] sm:$0xf]
      %v2176 = vld [vmem:[%s2172 + $0x18] sm:$0xf]
      %v2177 = vld [vmem:[%s2172 + $0x20] sm:$0xf]
      %v2178 = vld [vmem:[%s2172 + $0x28] sm:$0xf]
      %v2179 = vld [vmem:[%s2172 + $0x30] sm:$0xf]
      %v2180 = vld [vmem:[%s2172 + $0x38] sm:$0xf]
      %v2181 = vld [vmem:[%s2172 + $0x48] sm:$0xf]
      %v2182 = vld [vmem:[%s2172 + $0x50] sm:$0xf]
      %v2183 = vld [vmem:[%s2172 + $0x58] sm:$0xf]
      %v2184 = vld [vmem:[%s2172 + $0x60] sm:$0xf]
      %v2185 = vld [vmem:[%s2172 + $0x68] sm:$0xf]
      %v2186 = vld [vmem:[%s2172 + $0x70] sm:$0xf]
      %v2187 = vld [vmem:[%s2172 + $0x78] sm:$0xf]
      %v2188 = vld [vmem:[%s2172 + $0x80] sm:$0xf]
      %s2189 = scalar_lea.vmem %s320, 56
      %v2190 = vld [vmem:[%s2189] sm:$0xf]
      %v2191 = vld [vmem:[%s2189 + $0x4] sm:$0xf]
      %v2208 = vunpack.c.l.b16 %v2173
      %v2209 = vunpack.c.l.b16 %v2174
      %v2210 = vunpack.c.l.b16 %v2175
      %v2211 = vunpack.c.l.b16 %v2176
      %v2212 = vunpack.c.l.b16 %v2177
      %v2213 = vunpack.c.l.b16 %v2178
      %v2214 = vunpack.c.l.b16 %v2179
      %v2215 = vunpack.c.l.b16 %v2180
      %v2216 = vunpack.c.l.b16 %v2181
      %v2217 = vunpack.c.l.b16 %v2182
      %v2218 = vunpack.c.l.b16 %v2183
      %v2219 = vunpack.c.l.b16 %v2184
      %v2220 = vunpack.c.l.b16 %v2185
      %v2221 = vunpack.c.l.b16 %v2186
      %v2222 = vunpack.c.l.b16 %v2187
      %v2223 = vunpack.c.l.b16 %v2188
      %v2224 = vpack.c.b16 %v2209, %v2208
      %v2225 = vpack.c.b16 %v2211, %v2210
      %v2226 = vpack.c.b16 %v2213, %v2212
      %v2227 = vpack.c.b16 %v2215, %v2214
      %v2228 = vpack.c.b16 %v2217, %v2216
      %v2229 = vpack.c.b16 %v2219, %v2218
      %v2230 = vpack.c.b16 %v2221, %v2220
      %v2231 = vpack.c.b16 %v2223, %v2222
      %v2234 = vunpack.c.l.b16 %v2190
      %v2235 = vunpack.c.l.b16 %v2191
      %v2236 = vpack.c.b16 %v2235, %v2234
      %v2239 = vsel %vm419, %v2224, 0
      %v2242 = vsel %vm419, %v2225, 0
      %v2245 = vsel %vm419, %v2226, 0
      %v2248 = vsel %vm419, %v2227, 0
      %v2251 = vsel %vm419, %v2228, 0
      %v2254 = vsel %vm419, %v2229, 0
      %v2257 = vsel %vm419, %v2230, 0
      %v2260 = vsel %vm419, %v2231, 0
      %2262 = vmatprep.subr.bf16.mxu0 0
      %2263 = vmatpush1.bf16.msra.mxu0 %v2236
      %2264 = vmatprep.subr.bf16.mxu0 0
      %2265 = vmatpush1.bf16.msra.mxu0 0
      %2266 = vmatprep.subr.bf16.mxu0 0
      %2267 = vmatpush1.bf16.msra.mxu0 0
      %2268 = vmatprep.subr.bf16.mxu0 0
      %2269 = vmatpush1.bf16.msra.mxu0 0
      %2270 = vmatprep.subr.bf16.mxu0 0
      %2271 = vmatpush1.bf16.msra.mxu0 0
      %2272 = vmatprep.subr.bf16.mxu0 0
      %2273 = vmatpush1.bf16.msra.mxu0 0
      %2274 = vmatprep.subr.bf16.mxu0 0
      %2275 = vmatpush1.bf16.msra.mxu0 0
      %2276 = vmatprep.subr.bf16.mxu0 0
      %2277 = vmatpush1.bf16.msra.mxu0 0
      %2278 = vmatprep.subr.bf16.mxu0 0
      %2279 = vmatpush1.bf16.msra.mxu0 0
      %2280 = vmatprep.subr.bf16.mxu0 0
      %2281 = vmatpush1.bf16.msra.mxu0 0
      %2282 = vmatprep.subr.bf16.mxu0 0
      %2283 = vmatpush1.bf16.msra.mxu0 0
      %2284 = vmatprep.subr.bf16.mxu0 0
      %2285 = vmatpush1.bf16.msra.mxu0 0
      %2286 = vmatprep.subr.bf16.mxu0 0
      %2287 = vmatpush1.bf16.msra.mxu0 0
      %2288 = vmatprep.subr.bf16.mxu0 0
      %2289 = vmatpush1.bf16.msra.mxu0 0
      %2290 = vmatprep.subr.bf16.mxu0 0
      %2291 = vmatpush1.bf16.msra.mxu0 0
      %2292 = vmatprep.subr.bf16.mxu0 0
      %2293 = vmatpush1.bf16.msra.mxu0 0
      %2294 = vmatprep.mubr.bf16.mxu0 0
      %2295 = vmatmul.mubr.bf16.gmra.mrb[0].mxu0 %v2239
      %v2296 = vpop.f32.mrb[0].mxu0
      %v2297 = vadd.f32 0.0, %v2296
      %v2298 = vpop.f32.mrb[0].mxu0
      %v2299 = vpop.f32.mrb[0].mxu0
      %v2300 = vadd.f32 0.0, %v2299
      %v2301 = vpop.f32.mrb[0].mxu0
      %2302 = vmatprep.mubr.bf16.mxu0 0
      %2303 = vmatmul.mubr.bf16.gmra.mrb[0].mxu0 %v2242
      %v2304 = vpop.f32.mrb[0].mxu0
      %v2305 = vadd.f32 0.0, %v2304
      %v2306 = vpop.f32.mrb[0].mxu0
      %v2307 = vpop.f32.mrb[0].mxu0
      %v2308 = vadd.f32 0.0, %v2307
      %v2309 = vpop.f32.mrb[0].mxu0
      %2310 = vmatprep.mubr.bf16.mxu0 0
      %2311 = vmatmul.mubr.bf16.gmra.mrb[0].mxu0 %v2245
      %v2312 = vpop.f32.mrb[0].mxu0
      %v2313 = vadd.f32 0.0, %v2312
      %v2314 = vpop.f32.mrb[0].mxu0
      %v2315 = vpop.f32.mrb[0].mxu0
      %v2316 = vadd.f32 0.0, %v2315
      %v2317 = vpop.f32.mrb[0].mxu0
      %2318 = vmatprep.mubr.bf16.mxu0 0
      %2319 = vmatmul.mubr.bf16.gmra.mrb[0].mxu0 %v2248
      %v2320 = vpop.f32.mrb[0].mxu0
      %v2321 = vadd.f32 0.0, %v2320
      %v2322 = vpop.f32.mrb[0].mxu0
      %v2323 = vpop.f32.mrb[0].mxu0
      %v2324 = vadd.f32 0.0, %v2323
      %v2325 = vpop.f32.mrb[0].mxu0
      %2326 = vmatprep.mubr.bf16.mxu0 0
      %2327 = vmatmul.mubr.bf16.gmra.mrb[0].mxu0 %v2251
      %v2328 = vpop.f32.mrb[0].mxu0
      %v2329 = vadd.f32 0.0, %v2328
      %v2330 = vpop.f32.mrb[0].mxu0
      %v2331 = vpop.f32.mrb[0].mxu0
      %v2332 = vadd.f32 0.0, %v2331
      %v2333 = vpop.f32.mrb[0].mxu0
      %2334 = vmatprep.mubr.bf16.mxu0 0
      %2335 = vmatmul.mubr.bf16.gmra.mrb[0].mxu0 %v2254
      %v2336 = vpop.f32.mrb[0].mxu0
      %v2337 = vadd.f32 0.0, %v2336
      %v2338 = vpop.f32.mrb[0].mxu0
      %v2339 = vpop.f32.mrb[0].mxu0
      %v2340 = vadd.f32 0.0, %v2339
      %v2341 = vpop.f32.mrb[0].mxu0
      %2342 = vmatprep.mubr.bf16.mxu0 0
      %2343 = vmatmul.mubr.bf16.gmra.mrb[0].mxu0 %v2257
      %v2344 = vpop.f32.mrb[0].mxu0
      %v2345 = vadd.f32 0.0, %v2344
      %v2346 = vpop.f32.mrb[0].mxu0
      %v2347 = vpop.f32.mrb[0].mxu0
      %v2348 = vadd.f32 0.0, %v2347
      %v2349 = vpop.f32.mrb[0].mxu0
      %2350 = vmatprep.mubr.bf16.mxu0 0
      %2351 = vmatmul.mubr.bf16.gmra.mrb[0].mxu0 %v2260
      %v2352 = vpop.f32.mrb[0].mxu0
      %v2353 = vadd.f32 0.0, %v2352
      %v2354 = vpop.f32.mrb[0].mxu0
      %v2355 = vpop.f32.mrb[0].mxu0
      %v2356 = vadd.f32 0.0, %v2355
      %v2357 = vpop.f32.mrb[0].mxu0
      %2358 = vdwg.mxu0
      %v2359 = vadd.f32 %v2156, %v2297
      %v2360 = vadd.f32 %v2157, %v2300
      %v2361 = vadd.f32 %v2158, %v2305
      %v2362 = vadd.f32 %v2159, %v2308
      %v2363 = vadd.f32 %v2160, %v2313
      %v2364 = vadd.f32 %v2161, %v2316
      %v2365 = vadd.f32 %v2162, %v2321
      %v2366 = vadd.f32 %v2163, %v2324
      %v2367 = vadd.f32 %v2164, %v2329
      %v2368 = vadd.f32 %v2165, %v2332
      %v2369 = vadd.f32 %v2166, %v2337
      %v2370 = vadd.f32 %v2167, %v2340
      %v2371 = vadd.f32 %v2168, %v2345
      %v2372 = vadd.f32 %v2169, %v2348
      %v2373 = vadd.f32 %v2170, %v2353
      %v2374 = vadd.f32 %v2171, %v2356
      %v2375 = vld [vmem:[%s1969] sm:$0xf]
      %v2376 = vld [vmem:[%s1969 + $0x4] sm:$0x1]
      %v2377 = vld [vmem:[%s1969 + $0x8] sm:$0xf]
      %v2378 = vld [vmem:[%s1969 + $0xc] sm:$0x1]
      %v2379 = vld [vmem:[%s1969 + $0x10] sm:$0xf]
      %v2380 = vld [vmem:[%s1969 + $0x14] sm:$0x1]
      %v2381 = vld [vmem:[%s1969 + $0x18] sm:$0xf]
      %v2382 = vld [vmem:[%s1969 + $0x1c] sm:$0x1]
      %v2383 = vld [vmem:[%s1969 + $0x20] sm:$0xf]
      %v2384 = vld [vmem:[%s1969 + $0x24] sm:$0x1]
      %v2385 = vld [vmem:[%s1969 + $0x28] sm:$0xf]
      %v2386 = vld [vmem:[%s1969 + $0x2c] sm:$0x1]
      %v2387 = vld [vmem:[%s1969 + $0x30] sm:$0xf]
      %v2388 = vld [vmem:[%s1969 + $0x34] sm:$0x1]
      %v2389 = vld [vmem:[%s1969 + $0x38] sm:$0xf]
      %v2390 = vld [vmem:[%s1969 + $0x3c] sm:$0x1]
      %v2391 = vld [vmem:[%s1969 + $0x48] sm:$0xf]
      %v2392 = vld [vmem:[%s1969 + $0x4c] sm:$0x1]
      %v2393 = vld [vmem:[%s1969 + $0x50] sm:$0xf]
      %v2394 = vld [vmem:[%s1969 + $0x54] sm:$0x1]
      %v2395 = vld [vmem:[%s1969 + $0x58] sm:$0xf]
      %v2396 = vld [vmem:[%s1969 + $0x5c] sm:$0x1]
      %v2397 = vld [vmem:[%s1969 + $0x60] sm:$0xf]
      %v2398 = vld [vmem:[%s1969 + $0x64] sm:$0x1]
      %v2399 = vld [vmem:[%s1969 + $0x68] sm:$0xf]
      %v2400 = vld [vmem:[%s1969 + $0x6c] sm:$0x1]
      %v2401 = vld [vmem:[%s1969 + $0x70] sm:$0xf]
      %v2402 = vld [vmem:[%s1969 + $0x74] sm:$0x1]
      %v2403 = vld [vmem:[%s1969 + $0x78] sm:$0xf]
      %v2404 = vld [vmem:[%s1969 + $0x7c] sm:$0x1]
      %v2405 = vld [vmem:[%s1969 + $0x80] sm:$0xf]
      %v2406 = vld [vmem:[%s1969 + $0x84] sm:$0x1]
      %v2408 = vshrl.u32 %v2375, 16
      %v2410 = vrot.slane %v2408, 4
      %v2411 = vshll.u32 %v2375, 16
      %v2413 = vrot.slane %v2411, 5
      %v2414 = vor.u32 %v2410, %v2413
      %v2415 = vrot.slane %v2414, 4
      %v2417 = vshll.u32 %v2376, 16
      %v2419 = vrot.slane %v2417, 5
      %v2420 = vsel %vm742, %v2415, %v2419
      %v2422 = vshrl.u32 %v2377, 16
      %v2424 = vrot.slane %v2422, 4
      %v2425 = vshll.u32 %v2377, 16
      %v2427 = vrot.slane %v2425, 5
      %v2428 = vor.u32 %v2424, %v2427
      %v2429 = vrot.slane %v2428, 4
      %v2431 = vshll.u32 %v2378, 16
      %v2433 = vrot.slane %v2431, 5
      %v2434 = vsel %vm742, %v2429, %v2433
      %v2436 = vshrl.u32 %v2379, 16
      %v2438 = vrot.slane %v2436, 4
      %v2439 = vshll.u32 %v2379, 16
      %v2441 = vrot.slane %v2439, 5
      %v2442 = vor.u32 %v2438, %v2441
      %v2443 = vrot.slane %v2442, 4
      %v2445 = vshll.u32 %v2380, 16
      %v2447 = vrot.slane %v2445, 5
      %v2448 = vsel %vm742, %v2443, %v2447
      %v2450 = vshrl.u32 %v2381, 16
      %v2452 = vrot.slane %v2450, 4
      %v2453 = vshll.u32 %v2381, 16
      %v2455 = vrot.slane %v2453, 5
      %v2456 = vor.u32 %v2452, %v2455
      %v2457 = vrot.slane %v2456, 4
      %v2459 = vshll.u32 %v2382, 16
      %v2461 = vrot.slane %v2459, 5
      %v2462 = vsel %vm742, %v2457, %v2461
      %v2464 = vshrl.u32 %v2383, 16
      %v2466 = vrot.slane %v2464, 4
      %v2467 = vshll.u32 %v2383, 16
      %v2469 = vrot.slane %v2467, 5
      %v2470 = vor.u32 %v2466, %v2469
      %v2471 = vrot.slane %v2470, 4
      %v2473 = vshll.u32 %v2384, 16
      %v2475 = vrot.slane %v2473, 5
      %v2476 = vsel %vm742, %v2471, %v2475
      %v2478 = vshrl.u32 %v2385, 16
      %v2480 = vrot.slane %v2478, 4
      %v2481 = vshll.u32 %v2385, 16
      %v2483 = vrot.slane %v2481, 5
      %v2484 = vor.u32 %v2480, %v2483
      %v2485 = vrot.slane %v2484, 4
      %v2487 = vshll.u32 %v2386, 16
      %v2489 = vrot.slane %v2487, 5
      %v2490 = vsel %vm742, %v2485, %v2489
      %v2492 = vshrl.u32 %v2387, 16
      %v2494 = vrot.slane %v2492, 4
      %v2495 = vshll.u32 %v2387, 16
      %v2497 = vrot.slane %v2495, 5
      %v2498 = vor.u32 %v2494, %v2497
      %v2499 = vrot.slane %v2498, 4
      %v2501 = vshll.u32 %v2388, 16
      %v2503 = vrot.slane %v2501, 5
      %v2504 = vsel %vm742, %v2499, %v2503
      %v2506 = vshrl.u32 %v2389, 16
      %v2508 = vrot.slane %v2506, 4
      %v2509 = vshll.u32 %v2389, 16
      %v2511 = vrot.slane %v2509, 5
      %v2512 = vor.u32 %v2508, %v2511
      %v2513 = vrot.slane %v2512, 4
      %v2515 = vshll.u32 %v2390, 16
      %v2517 = vrot.slane %v2515, 5
      %v2518 = vsel %vm742, %v2513, %v2517
      %v2520 = vshrl.u32 %v2391, 16
      %v2522 = vrot.slane %v2520, 4
      %v2523 = vshll.u32 %v2391, 16
      %v2525 = vrot.slane %v2523, 5
      %v2526 = vor.u32 %v2522, %v2525
      %v2527 = vrot.slane %v2526, 4
      %v2529 = vshll.u32 %v2392, 16
      %v2531 = vrot.slane %v2529, 5
      %v2532 = vsel %vm742, %v2527, %v2531
      %v2534 = vshrl.u32 %v2393, 16
      %v2536 = vrot.slane %v2534, 4
      %v2537 = vshll.u32 %v2393, 16
      %v2539 = vrot.slane %v2537, 5
      %v2540 = vor.u32 %v2536, %v2539
      %v2541 = vrot.slane %v2540, 4
      %v2543 = vshll.u32 %v2394, 16
      %v2545 = vrot.slane %v2543, 5
      %v2546 = vsel %vm742, %v2541, %v2545
      %v2548 = vshrl.u32 %v2395, 16
      %v2550 = vrot.slane %v2548, 4
      %v2551 = vshll.u32 %v2395, 16
      %v2553 = vrot.slane %v2551, 5
      %v2554 = vor.u32 %v2550, %v2553
      %v2555 = vrot.slane %v2554, 4
      %v2557 = vshll.u32 %v2396, 16
      %v2559 = vrot.slane %v2557, 5
      %v2560 = vsel %vm742, %v2555, %v2559
      %v2562 = vshrl.u32 %v2397, 16
      %v2564 = vrot.slane %v2562, 4
      %v2565 = vshll.u32 %v2397, 16
      %v2567 = vrot.slane %v2565, 5
      %v2568 = vor.u32 %v2564, %v2567
      %v2569 = vrot.slane %v2568, 4
      %v2571 = vshll.u32 %v2398, 16
      %v2573 = vrot.slane %v2571, 5
      %v2574 = vsel %vm742, %v2569, %v2573
      %v2576 = vshrl.u32 %v2399, 16
      %v2578 = vrot.slane %v2576, 4
      %v2579 = vshll.u32 %v2399, 16
      %v2581 = vrot.slane %v2579, 5
      %v2582 = vor.u32 %v2578, %v2581
      %v2583 = vrot.slane %v2582, 4
      %v2585 = vshll.u32 %v2400, 16
      %v2587 = vrot.slane %v2585, 5
      %v2588 = vsel %vm742, %v2583, %v2587
      %v2590 = vshrl.u32 %v2401, 16
      %v2592 = vrot.slane %v2590, 4
      %v2593 = vshll.u32 %v2401, 16
      %v2595 = vrot.slane %v2593, 5
      %v2596 = vor.u32 %v2592, %v2595
      %v2597 = vrot.slane %v2596, 4
      %v2599 = vshll.u32 %v2402, 16
      %v2601 = vrot.slane %v2599, 5
      %v2602 = vsel %vm742, %v2597, %v2601
      %v2604 = vshrl.u32 %v2403, 16
      %v2606 = vrot.slane %v2604, 4
      %v2607 = vshll.u32 %v2403, 16
      %v2609 = vrot.slane %v2607, 5
      %v2610 = vor.u32 %v2606, %v2609
      %v2611 = vrot.slane %v2610, 4
      %v2613 = vshll.u32 %v2404, 16
      %v2615 = vrot.slane %v2613, 5
      %v2616 = vsel %vm742, %v2611, %v2615
      %v2618 = vshrl.u32 %v2405, 16
      %v2620 = vrot.slane %v2618, 4
      %v2621 = vshll.u32 %v2405, 16
      %v2623 = vrot.slane %v2621, 5
      %v2624 = vor.u32 %v2620, %v2623
      %v2625 = vrot.slane %v2624, 4
      %v2627 = vshll.u32 %v2406, 16
      %v2629 = vrot.slane %v2627, 5
      %v2630 = vsel %vm742, %v2625, %v2629
      %s2631 = scalar_lea.vmem %s320, 64
      %v2632 = vld [vmem:[%s2631] sm:$0xf]
      %v2633 = vld [vmem:[%s2631 + $0x4] sm:$0xf]
      %v2634 = vunpack.c.l.b16 %v2420
      %v2635 = vunpack.c.l.b16 %v2434
      %v2636 = vunpack.c.l.b16 %v2448
      %v2637 = vunpack.c.l.b16 %v2462
      %v2638 = vunpack.c.l.b16 %v2476
      %v2639 = vunpack.c.l.b16 %v2490
      %v2640 = vunpack.c.l.b16 %v2504
      %v2641 = vunpack.c.l.b16 %v2518
      %v2642 = vunpack.c.l.b16 %v2532
      %v2643 = vunpack.c.l.b16 %v2546
      %v2644 = vunpack.c.l.b16 %v2560
      %v2645 = vunpack.c.l.b16 %v2574
      %v2646 = vunpack.c.l.b16 %v2588
      %v2647 = vunpack.c.l.b16 %v2602
      %v2648 = vunpack.c.l.b16 %v2616
      %v2649 = vunpack.c.l.b16 %v2630
      %v2650 = vpack.c.b16 %v2635, %v2634
      %v2651 = vpack.c.b16 %v2637, %v2636
      %v2652 = vpack.c.b16 %v2639, %v2638
      %v2653 = vpack.c.b16 %v2641, %v2640
      %v2654 = vpack.c.b16 %v2643, %v2642
      %v2655 = vpack.c.b16 %v2645, %v2644
      %v2656 = vpack.c.b16 %v2647, %v2646
      %v2657 = vpack.c.b16 %v2649, %v2648
      %v2660 = vunpack.c.l.b16 %v2632
      %v2661 = vunpack.c.l.b16 %v2633
      %v2662 = vpack.c.b16 %v2661, %v2660
      %v2665 = vsel %vm419, %v2650, 0
      %v2668 = vsel %vm419, %v2651, 0
      %v2671 = vsel %vm419, %v2652, 0
      %v2674 = vsel %vm419, %v2653, 0
      %v2677 = vsel %vm419, %v2654, 0
      %v2680 = vsel %vm419, %v2655, 0
      %v2683 = vsel %vm419, %v2656, 0
      %v2686 = vsel %vm419, %v2657, 0
      %2688 = vmatprep.subr.bf16.mxu0 0
      %2689 = vmatpush1.bf16.msra.mxu0 %v2662
      %2690 = vmatprep.subr.bf16.mxu0 0
      %2691 = vmatpush1.bf16.msra.mxu0 0
      %2692 = vmatprep.subr.bf16.mxu0 0
      %2693 = vmatpush1.bf16.msra.mxu0 0
      %2694 = vmatprep.subr.bf16.mxu0 0
      %2695 = vmatpush1.bf16.msra.mxu0 0
      %2696 = vmatprep.subr.bf16.mxu0 0
      %2697 = vmatpush1.bf16.msra.mxu0 0
      %2698 = vmatprep.subr.bf16.mxu0 0
      %2699 = vmatpush1.bf16.msra.mxu0 0
      %2700 = vmatprep.subr.bf16.mxu0 0
      %2701 = vmatpush1.bf16.msra.mxu0 0
      %2702 = vmatprep.subr.bf16.mxu0 0
      %2703 = vmatpush1.bf16.msra.mxu0 0
      %2704 = vmatprep.subr.bf16.mxu0 0
      %2705 = vmatpush1.bf16.msra.mxu0 0
      %2706 = vmatprep.subr.bf16.mxu0 0
      %2707 = vmatpush1.bf16.msra.mxu0 0
      %2708 = vmatprep.subr.bf16.mxu0 0
      %2709 = vmatpush1.bf16.msra.mxu0 0
      %2710 = vmatprep.subr.bf16.mxu0 0
      %2711 = vmatpush1.bf16.msra.mxu0 0
      %2712 = vmatprep.subr.bf16.mxu0 0
      %2713 = vmatpush1.bf16.msra.mxu0 0
      %2714 = vmatprep.subr.bf16.mxu0 0
      %2715 = vmatpush1.bf16.msra.mxu0 0
      %2716 = vmatprep.subr.bf16.mxu0 0
      %2717 = vmatpush1.bf16.msra.mxu0 0
      %2718 = vmatprep.subr.bf16.mxu0 0
      %2719 = vmatpush1.bf16.msra.mxu0 0
      %2720 = vmatprep.mubr.bf16.mxu0 0
      %2721 = vmatmul.mubr.bf16.gmra.mrb[0].mxu0 %v2665
      %v2722 = vpop.f32.mrb[0].mxu0
      %v2723 = vadd.f32 0.0, %v2722
      %v2724 = vpop.f32.mrb[0].mxu0
      %v2725 = vpop.f32.mrb[0].mxu0
      %v2726 = vadd.f32 0.0, %v2725
      %v2727 = vpop.f32.mrb[0].mxu0
      %2728 = vmatprep.mubr.bf16.mxu0 0
      %2729 = vmatmul.mubr.bf16.gmra.mrb[0].mxu0 %v2668
      %v2730 = vpop.f32.mrb[0].mxu0
      %v2731 = vadd.f32 0.0, %v2730
      %v2732 = vpop.f32.mrb[0].mxu0
      %v2733 = vpop.f32.mrb[0].mxu0
      %v2734 = vadd.f32 0.0, %v2733
      %v2735 = vpop.f32.mrb[0].mxu0
      %2736 = vmatprep.mubr.bf16.mxu0 0
      %2737 = vmatmul.mubr.bf16.gmra.mrb[0].mxu0 %v2671
      %v2738 = vpop.f32.mrb[0].mxu0
      %v2739 = vadd.f32 0.0, %v2738
      %v2740 = vpop.f32.mrb[0].mxu0
      %v2741 = vpop.f32.mrb[0].mxu0
      %v2742 = vadd.f32 0.0, %v2741
      %v2743 = vpop.f32.mrb[0].mxu0
      %2744 = vmatprep.mubr.bf16.mxu0 0
      %2745 = vmatmul.mubr.bf16.gmra.mrb[0].mxu0 %v2674
      %v2746 = vpop.f32.mrb[0].mxu0
      %v2747 = vadd.f32 0.0, %v2746
      %v2748 = vpop.f32.mrb[0].mxu0
      %v2749 = vpop.f32.mrb[0].mxu0
      %v2750 = vadd.f32 0.0, %v2749
      %v2751 = vpop.f32.mrb[0].mxu0
      %2752 = vmatprep.mubr.bf16.mxu0 0
      %2753 = vmatmul.mubr.bf16.gmra.mrb[0].mxu0 %v2677
      %v2754 = vpop.f32.mrb[0].mxu0
      %v2755 = vadd.f32 0.0, %v2754
      %v2756 = vpop.f32.mrb[0].mxu0
      %v2757 = vpop.f32.mrb[0].mxu0
      %v2758 = vadd.f32 0.0, %v2757
      %v2759 = vpop.f32.mrb[0].mxu0
      %2760 = vmatprep.mubr.bf16.mxu0 0
      %2761 = vmatmul.mubr.bf16.gmra.mrb[0].mxu0 %v2680
      %v2762 = vpop.f32.mrb[0].mxu0
      %v2763 = vadd.f32 0.0, %v2762
      %v2764 = vpop.f32.mrb[0].mxu0
      %v2765 = vpop.f32.mrb[0].mxu0
      %v2766 = vadd.f32 0.0, %v2765
      %v2767 = vpop.f32.mrb[0].mxu0
      %2768 = vmatprep.mubr.bf16.mxu0 0
      %2769 = vmatmul.mubr.bf16.gmra.mrb[0].mxu0 %v2683
      %v2770 = vpop.f32.mrb[0].mxu0
      %v2771 = vadd.f32 0.0, %v2770
      %v2772 = vpop.f32.mrb[0].mxu0
      %v2773 = vpop.f32.mrb[0].mxu0
      %v2774 = vadd.f32 0.0, %v2773
      %v2775 = vpop.f32.mrb[0].mxu0
      %2776 = vmatprep.mubr.bf16.mxu0 0
      %2777 = vmatmul.mubr.bf16.gmra.mrb[0].mxu0 %v2686
      %v2778 = vpop.f32.mrb[0].mxu0
      %v2779 = vadd.f32 0.0, %v2778
      %v2780 = vpop.f32.mrb[0].mxu0
      %v2781 = vpop.f32.mrb[0].mxu0
      %v2782 = vadd.f32 0.0, %v2781
      %v2783 = vpop.f32.mrb[0].mxu0
      %2784 = vdwg.mxu0
      %v2785 = vadd.f32 %v2359, %v2723
      %v2786 = vadd.f32 %v2360, %v2726
      %v2787 = vadd.f32 %v2361, %v2731
      %v2788 = vadd.f32 %v2362, %v2734
      %v2789 = vadd.f32 %v2363, %v2739
      %v2790 = vadd.f32 %v2364, %v2742
      %v2791 = vadd.f32 %v2365, %v2747
      %v2792 = vadd.f32 %v2366, %v2750
      %v2793 = vadd.f32 %v2367, %v2755
      %v2794 = vadd.f32 %v2368, %v2758
      %v2795 = vadd.f32 %v2369, %v2763
      %v2796 = vadd.f32 %v2370, %v2766
      %v2797 = vadd.f32 %v2371, %v2771
      %v2798 = vadd.f32 %v2372, %v2774
      %v2799 = vadd.f32 %v2373, %v2779
      %v2800 = vadd.f32 %v2374, %v2782
      %v2801 = vld [vmem:[%s2] sm:$0x1]
      %v2803 = vlaneseq
      %v2804 = vshrl.u32 %v2803, 7
      %v2805 = vsub.s32 0, %v2804
      %v2806 = vrot.slane %v2801, %v2805
      %v2808 = vadd.f32 %v2785, %v2806
      %v2809 = vadd.f32 %v2786, %v2806
      %v2810 = vadd.f32 %v2787, %v2806
      %v2811 = vadd.f32 %v2788, %v2806
      %v2812 = vadd.f32 %v2789, %v2806
      %v2813 = vadd.f32 %v2790, %v2806
      %v2814 = vadd.f32 %v2791, %v2806
      %v2815 = vadd.f32 %v2792, %v2806
      %v2816 = vadd.f32 %v2793, %v2806
      %v2817 = vadd.f32 %v2794, %v2806
      %v2818 = vadd.f32 %v2795, %v2806
      %v2819 = vadd.f32 %v2796, %v2806
      %v2820 = vadd.f32 %v2797, %v2806
      %v2821 = vadd.f32 %v2798, %v2806
      %v2822 = vadd.f32 %v2799, %v2806
      %v2823 = vadd.f32 %v2800, %v2806
      %v2824 = vmax.f32 %v2808, 0.0
      %v2825 = vmax.f32 %v2809, 0.0
      %v2826 = vmax.f32 %v2810, 0.0
      %v2827 = vmax.f32 %v2811, 0.0
      %v2828 = vmax.f32 %v2812, 0.0
      %v2829 = vmax.f32 %v2813, 0.0
      %v2830 = vmax.f32 %v2814, 0.0
      %v2831 = vmax.f32 %v2815, 0.0
      %v2832 = vmax.f32 %v2816, 0.0
      %v2833 = vmax.f32 %v2817, 0.0
      %v2834 = vmax.f32 %v2818, 0.0
      %v2835 = vmax.f32 %v2819, 0.0
      %v2836 = vmax.f32 %v2820, 0.0
      %v2837 = vmax.f32 %v2821, 0.0
      %v2838 = vmax.f32 %v2822, 0.0
      %v2839 = vmax.f32 %v2823, 0.0
      %vm2840 = vcmask 257024
      %2841 = vst.msk [vmem:[#allocation2] sm:$0xf] %vm2840, 0
      %vm2842 = vcmask 253952
      %2843 = vst.msk [vmem:[#allocation2 + $0x4] sm:$0x1] %vm2842, 0
      %2844 = vst.msk [vmem:[#allocation2 + $0x8] sm:$0xf] %vm2840, 0
      %2845 = vst.msk [vmem:[#allocation2 + $0xc] sm:$0x1] %vm2842, 0
      %2846 = vst.msk [vmem:[#allocation2 + $0x10] sm:$0xf] %vm2840, 0
      %2847 = vst.msk [vmem:[#allocation2 + $0x14] sm:$0x1] %vm2842, 0
      %2848 = vst.msk [vmem:[#allocation2 + $0x18] sm:$0xf] %vm2840, 0
      %2849 = vst.msk [vmem:[#allocation2 + $0x1c] sm:$0x1] %vm2842, 0
      %2850 = vst.msk [vmem:[#allocation2 + $0x20] sm:$0xf] %vm2840, 0
      %2851 = vst.msk [vmem:[#allocation2 + $0x24] sm:$0x1] %vm2842, 0
      %2852 = vst.msk [vmem:[#allocation2 + $0x28] sm:$0xf] %vm2840, 0
      %2853 = vst.msk [vmem:[#allocation2 + $0x2c] sm:$0x1] %vm2842, 0
      %2854 = vst.msk [vmem:[#allocation2 + $0x30] sm:$0xf] %vm2840, 0
      %2855 = vst.msk [vmem:[#allocation2 + $0x34] sm:$0x1] %vm2842, 0
      %2856 = vst.msk [vmem:[#allocation2 + $0x38] sm:$0xf] %vm2840, 0
      %2857 = vst.msk [vmem:[#allocation2 + $0x3c] sm:$0x1] %vm2842, 0
      %2858 = vst.msk [vmem:[#allocation2 + $0x40] sm:$0xf] %vm2840, 0
      %2859 = vst.msk [vmem:[#allocation2 + $0x44] sm:$0x1] %vm2842, 0
      %2860 = vst.msk [vmem:[#allocation2 + $0x48] sm:$0xf] %vm2840, 0
      %2861 = vst.msk [vmem:[#allocation2 + $0x4c] sm:$0x1] %vm2842, 0
      %2862 = vst.msk [vmem:[#allocation2 + $0x50] sm:$0xf] %vm2840, 0
      %2863 = vst.msk [vmem:[#allocation2 + $0x54] sm:$0x1] %vm2842, 0
      %2864 = vst.msk [vmem:[#allocation2 + $0x58] sm:$0xf] %vm2840, 0
      %2865 = vst.msk [vmem:[#allocation2 + $0x5c] sm:$0x1] %vm2842, 0
      %2866 = vst.msk [vmem:[#allocation2 + $0x60] sm:$0xf] %vm2840, 0
      %2867 = vst.msk [vmem:[#allocation2 + $0x64] sm:$0x1] %vm2842, 0
      %2868 = vst.msk [vmem:[#allocation2 + $0x68] sm:$0xf] %vm2840, 0
      %2869 = vst.msk [vmem:[#allocation2 + $0x6c] sm:$0x1] %vm2842, 0
      %2870 = vst.msk [vmem:[#allocation2 + $0x70] sm:$0xf] %vm2840, 0
      %2871 = vst.msk [vmem:[#allocation2 + $0x74] sm:$0x1] %vm2842, 0
      %2872 = vst.msk [vmem:[#allocation2 + $0x78] sm:$0xf] %vm2840, 0
      %2873 = vst.msk [vmem:[#allocation2 + $0x7c] sm:$0x1] %vm2842, 0
      %2874 = vst.msk [vmem:[#allocation2 + $0x80] sm:$0xf] %vm2840, 0
      %2875 = vst.msk [vmem:[#allocation2 + $0x84] sm:$0x1] %vm2842, 0
      %2876 = vst.msk [vmem:[#allocation2 + $0x88] sm:$0xf] %vm2840, 0
      %2877 = vst.msk [vmem:[#allocation2 + $0x8c] sm:$0x1] %vm2842, 0
      %2878 = vst.msk [vmem:[#allocation2 + $0x90] sm:$0xf] %vm2840, 0
      %2879 = vst.msk [vmem:[#allocation2 + $0x94] sm:$0x1] %vm2842, 0
      %2880 = vst.msk [vmem:[#allocation2 + $0x98] sm:$0xf] %vm2840, 0
      %2881 = vst.msk [vmem:[#allocation2 + $0x9c] sm:$0x1] %vm2842, 0
      %v2882 = vpack.c.bf16 %v2824, %v2824
      %v2883 = vpack.c.bf16 %v2825, %v2825
      %v2884 = vpack.c.bf16 %v2826, %v2826
      %v2885 = vpack.c.bf16 %v2827, %v2827
      %v2886 = vpack.c.bf16 %v2828, %v2828
      %v2887 = vpack.c.bf16 %v2829, %v2829
      %v2888 = vpack.c.bf16 %v2830, %v2830
      %v2889 = vpack.c.bf16 %v2831, %v2831
      %v2890 = vpack.c.bf16 %v2832, %v2832
      %v2891 = vpack.c.bf16 %v2833, %v2833
      %v2892 = vpack.c.bf16 %v2834, %v2834
      %v2893 = vpack.c.bf16 %v2835, %v2835
      %v2894 = vpack.c.bf16 %v2836, %v2836
      %v2895 = vpack.c.bf16 %v2837, %v2837
      %v2896 = vpack.c.bf16 %v2838, %v2838
      %v2897 = vpack.c.bf16 %v2839, %v2839
      %v2914 = vunpack.c.l.b16 %v2882
      %v2915 = vunpack.c.l.b16 %v2883
      %v2916 = vunpack.c.l.b16 %v2884
      %v2917 = vunpack.c.l.b16 %v2885
      %v2918 = vunpack.c.l.b16 %v2886
      %v2919 = vunpack.c.l.b16 %v2887
      %v2920 = vunpack.c.l.b16 %v2888
      %v2921 = vunpack.c.l.b16 %v2889
      %v2922 = vunpack.c.l.b16 %v2890
      %v2923 = vunpack.c.l.b16 %v2891
      %v2924 = vunpack.c.l.b16 %v2892
      %v2925 = vunpack.c.l.b16 %v2893
      %v2926 = vunpack.c.l.b16 %v2894
      %v2927 = vunpack.c.l.b16 %v2895
      %v2928 = vunpack.c.l.b16 %v2896
      %v2929 = vunpack.c.l.b16 %v2897
      %v2930 = vpack.c.b16 %v2914, %v2914
      %v2931 = vpack.c.b16 %v2915, %v2915
      %v2932 = vpack.c.b16 %v2916, %v2916
      %v2933 = vpack.c.b16 %v2917, %v2917
      %v2934 = vpack.c.b16 %v2918, %v2918
      %v2935 = vpack.c.b16 %v2919, %v2919
      %v2936 = vpack.c.b16 %v2920, %v2920
      %v2937 = vpack.c.b16 %v2921, %v2921
      %v2938 = vpack.c.b16 %v2922, %v2922
      %v2939 = vpack.c.b16 %v2923, %v2923
      %v2940 = vpack.c.b16 %v2924, %v2924
      %v2941 = vpack.c.b16 %v2925, %v2925
      %v2942 = vpack.c.b16 %v2926, %v2926
      %v2943 = vpack.c.b16 %v2927, %v2927
      %v2944 = vpack.c.b16 %v2928, %v2928
      %v2945 = vpack.c.b16 %v2929, %v2929
      %v2947 = vshrl.u32 %v2930, 16
      %v2949 = vrot.slane %v2947, 7
      %v2950 = vshll.u32 %v2930, 16
      %v2952 = vor.u32 %v2949, %v2950
      %v2953 = vrot.slane %v2949, 4
      %v2955 = vshrl.u32 %v2931, 16
      %v2957 = vrot.slane %v2955, 7
      %v2958 = vshll.u32 %v2931, 16
      %v2960 = vor.u32 %v2957, %v2958
      %v2961 = vrot.slane %v2957, 4
      %v2963 = vshrl.u32 %v2932, 16
      %v2965 = vrot.slane %v2963, 7
      %v2966 = vshll.u32 %v2932, 16
      %v2968 = vor.u32 %v2965, %v2966
      %v2969 = vrot.slane %v2965, 4
      %v2971 = vshrl.u32 %v2933, 16
      %v2973 = vrot.slane %v2971, 7
      %v2974 = vshll.u32 %v2933, 16
      %v2976 = vor.u32 %v2973, %v2974
      %v2977 = vrot.slane %v2973, 4
      %v2979 = vshrl.u32 %v2934, 16
      %v2981 = vrot.slane %v2979, 7
      %v2982 = vshll.u32 %v2934, 16
      %v2984 = vor.u32 %v2981, %v2982
      %v2985 = vrot.slane %v2981, 4
      %v2987 = vshrl.u32 %v2935, 16
      %v2989 = vrot.slane %v2987, 7
      %v2990 = vshll.u32 %v2935, 16
      %v2992 = vor.u32 %v2989, %v2990
      %v2993 = vrot.slane %v2989, 4
      %v2995 = vshrl.u32 %v2936, 16
      %v2997 = vrot.slane %v2995, 7
      %v2998 = vshll.u32 %v2936, 16
      %v3000 = vor.u32 %v2997, %v2998
      %v3001 = vrot.slane %v2997, 4
      %v3003 = vshrl.u32 %v2937, 16
      %v3005 = vrot.slane %v3003, 7
      %v3006 = vshll.u32 %v2937, 16
      %v3008 = vor.u32 %v3005, %v3006
      %v3009 = vrot.slane %v3005, 4
      %v3011 = vshrl.u32 %v2938, 16
      %v3013 = vrot.slane %v3011, 7
      %v3014 = vshll.u32 %v2938, 16
      %v3016 = vor.u32 %v3013, %v3014
      %v3017 = vrot.slane %v3013, 4
      %v3019 = vshrl.u32 %v2939, 16
      %v3021 = vrot.slane %v3019, 7
      %v3022 = vshll.u32 %v2939, 16
      %v3024 = vor.u32 %v3021, %v3022
      %v3025 = vrot.slane %v3021, 4
      %v3027 = vshrl.u32 %v2940, 16
      %v3029 = vrot.slane %v3027, 7
      %v3030 = vshll.u32 %v2940, 16
      %v3032 = vor.u32 %v3029, %v3030
      %v3033 = vrot.slane %v3029, 4
      %v3035 = vshrl.u32 %v2941, 16
      %v3037 = vrot.slane %v3035, 7
      %v3038 = vshll.u32 %v2941, 16
      %v3040 = vor.u32 %v3037, %v3038
      %v3041 = vrot.slane %v3037, 4
      %v3043 = vshrl.u32 %v2942, 16
      %v3045 = vrot.slane %v3043, 7
      %v3046 = vshll.u32 %v2942, 16
      %v3048 = vor.u32 %v3045, %v3046
      %v3049 = vrot.slane %v3045, 4
      %v3051 = vshrl.u32 %v2943, 16
      %v3053 = vrot.slane %v3051, 7
      %v3054 = vshll.u32 %v2943, 16
      %v3056 = vor.u32 %v3053, %v3054
      %v3057 = vrot.slane %v3053, 4
      %v3059 = vshrl.u32 %v2944, 16
      %v3061 = vrot.slane %v3059, 7
      %v3062 = vshll.u32 %v2944, 16
      %v3064 = vor.u32 %v3061, %v3062
      %v3065 = vrot.slane %v3061, 4
      %v3067 = vshrl.u32 %v2945, 16
      %v3069 = vrot.slane %v3067, 7
      %v3070 = vshll.u32 %v2945, 16
      %v3072 = vor.u32 %v3069, %v3070
      %v3073 = vrot.slane %v3069, 4
      %s3106 = scalar_lea.vmem [#allocation2], 8
      %vm3107 = vcmask 257024
      %vm3108 = vsmask.f32 7938
      %vm3109 = vmand %vm3107, %vm3108
      %v3110 = vld [vmem:[%s3106] sm:$0xf]
      %v3111 = vsel %vm3109, %v2952, %v3110
      %3112 = vst [vmem:[%s3106] sm:$0xf] %v3111
      %vm3113 = vcmask 253952
      %vm3114 = vsmask.f32 256
      %vm3115 = vmand %vm3113, %vm3114
      %v3116 = vld [vmem:[%s3106 + $0x4] sm:$0x1]
      %v3117 = vsel %vm3115, %v2953, %v3116
      %3118 = vst [vmem:[%s3106 + $0x4] sm:$0x1] %v3117
      %v3119 = vld [vmem:[%s3106 + $0x8] sm:$0xf]
      %v3120 = vsel %vm3109, %v2960, %v3119
      %3121 = vst [vmem:[%s3106 + $0x8] sm:$0xf] %v3120
      %v3122 = vld [vmem:[%s3106 + $0xc] sm:$0x1]
      %v3123 = vsel %vm3115, %v2961, %v3122
      %3124 = vst [vmem:[%s3106 + $0xc] sm:$0x1] %v3123
      %v3125 = vld [vmem:[%s3106 + $0x10] sm:$0xf]
      %v3126 = vsel %vm3109, %v2968, %v3125
      %3127 = vst [vmem:[%s3106 + $0x10] sm:$0xf] %v3126
      %v3128 = vld [vmem:[%s3106 + $0x14] sm:$0x1]
      %v3129 = vsel %vm3115, %v2969, %v3128
      %3130 = vst [vmem:[%s3106 + $0x14] sm:$0x1] %v3129
      %v3131 = vld [vmem:[%s3106 + $0x18] sm:$0xf]
      %v3132 = vsel %vm3109, %v2976, %v3131
      %3133 = vst [vmem:[%s3106 + $0x18] sm:$0xf] %v3132
      %v3134 = vld [vmem:[%s3106 + $0x1c] sm:$0x1]
      %v3135 = vsel %vm3115, %v2977, %v3134
      %3136 = vst [vmem:[%s3106 + $0x1c] sm:$0x1] %v3135
      %v3137 = vld [vmem:[%s3106 + $0x20] sm:$0xf]
      %v3138 = vsel %vm3109, %v2984, %v3137
      %3139 = vst [vmem:[%s3106 + $0x20] sm:$0xf] %v3138
      %v3140 = vld [vmem:[%s3106 + $0x24] sm:$0x1]
      %v3141 = vsel %vm3115, %v2985, %v3140
      %3142 = vst [vmem:[%s3106 + $0x24] sm:$0x1] %v3141
      %v3143 = vld [vmem:[%s3106 + $0x28] sm:$0xf]
      %v3144 = vsel %vm3109, %v2992, %v3143
      %3145 = vst [vmem:[%s3106 + $0x28] sm:$0xf] %v3144
      %v3146 = vld [vmem:[%s3106 + $0x2c] sm:$0x1]
      %v3147 = vsel %vm3115, %v2993, %v3146
      %3148 = vst [vmem:[%s3106 + $0x2c] sm:$0x1] %v3147
      %v3149 = vld [vmem:[%s3106 + $0x30] sm:$0xf]
      %v3150 = vsel %vm3109, %v3000, %v3149
      %3151 = vst [vmem:[%s3106 + $0x30] sm:$0xf] %v3150
      %v3152 = vld [vmem:[%s3106 + $0x34] sm:$0x1]
      %v3153 = vsel %vm3115, %v3001, %v3152
      %3154 = vst [vmem:[%s3106 + $0x34] sm:$0x1] %v3153
      %v3155 = vld [vmem:[%s3106 + $0x38] sm:$0xf]
      %v3156 = vsel %vm3109, %v3008, %v3155
      %3157 = vst [vmem:[%s3106 + $0x38] sm:$0xf] %v3156
      %v3158 = vld [vmem:[%s3106 + $0x3c] sm:$0x1]
      %v3159 = vsel %vm3115, %v3009, %v3158
      %3160 = vst [vmem:[%s3106 + $0x3c] sm:$0x1] %v3159
      %v3161 = vld [vmem:[%s3106 + $0x50] sm:$0xf]
      %v3162 = vsel %vm3109, %v3016, %v3161
      %3163 = vst [vmem:[%s3106 + $0x50] sm:$0xf] %v3162
      %v3164 = vld [vmem:[%s3106 + $0x54] sm:$0x1]
      %v3165 = vsel %vm3115, %v3017, %v3164
      %3166 = vst [vmem:[%s3106 + $0x54] sm:$0x1] %v3165
      %v3167 = vld [vmem:[%s3106 + $0x58] sm:$0xf]
      %v3168 = vsel %vm3109, %v3024, %v3167
      %3169 = vst [vmem:[%s3106 + $0x58] sm:$0xf] %v3168
      %v3170 = vld [vmem:[%s3106 + $0x5c] sm:$0x1]
      %v3171 = vsel %vm3115, %v3025, %v3170
      %3172 = vst [vmem:[%s3106 + $0x5c] sm:$0x1] %v3171
      %v3173 = vld [vmem:[%s3106 + $0x60] sm:$0xf]
      %v3174 = vsel %vm3109, %v3032, %v3173
      %3175 = vst [vmem:[%s3106 + $0x60] sm:$0xf] %v3174
      %v3176 = vld [vmem:[%s3106 + $0x64] sm:$0x1]
      %v3177 = vsel %vm3115, %v3033, %v3176
      %3178 = vst [vmem:[%s3106 + $0x64] sm:$0x1] %v3177
      %v3179 = vld [vmem:[%s3106 + $0x68] sm:$0xf]
      %v3180 = vsel %vm3109, %v3040, %v3179
      %3181 = vst [vmem:[%s3106 + $0x68] sm:$0xf] %v3180
      %v3182 = vld [vmem:[%s3106 + $0x6c] sm:$0x1]
      %v3183 = vsel %vm3115, %v3041, %v3182
      %3184 = vst [vmem:[%s3106 + $0x6c] sm:$0x1] %v3183
      %v3185 = vld [vmem:[%s3106 + $0x70] sm:$0xf]
      %v3186 = vsel %vm3109, %v3048, %v3185
      %3187 = vst [vmem:[%s3106 + $0x70] sm:$0xf] %v3186
      %v3188 = vld [vmem:[%s3106 + $0x74] sm:$0x1]
      %v3189 = vsel %vm3115, %v3049, %v3188
      %3190 = vst [vmem:[%s3106 + $0x74] sm:$0x1] %v3189
      %v3191 = vld [vmem:[%s3106 + $0x78] sm:$0xf]
      %v3192 = vsel %vm3109, %v3056, %v3191
      %3193 = vst [vmem:[%s3106 + $0x78] sm:$0xf] %v3192
      %v3194 = vld [vmem:[%s3106 + $0x7c] sm:$0x1]
      %v3195 = vsel %vm3115, %v3057, %v3194
      %3196 = vst [vmem:[%s3106 + $0x7c] sm:$0x1] %v3195
      %v3197 = vld [vmem:[%s3106 + $0x80] sm:$0xf]
      %v3198 = vsel %vm3109, %v3064, %v3197
      %3199 = vst [vmem:[%s3106 + $0x80] sm:$0xf] %v3198
      %v3200 = vld [vmem:[%s3106 + $0x84] sm:$0x1]
      %v3201 = vsel %vm3115, %v3065, %v3200
      %3202 = vst [vmem:[%s3106 + $0x84] sm:$0x1] %v3201
      %v3203 = vld [vmem:[%s3106 + $0x88] sm:$0xf]
      %v3204 = vsel %vm3109, %v3072, %v3203
      %3205 = vst [vmem:[%s3106 + $0x88] sm:$0xf] %v3204
      %v3206 = vld [vmem:[%s3106 + $0x8c] sm:$0x1]
      %v3207 = vsel %vm3115, %v3073, %v3206
      %3208 = vst [vmem:[%s3106 + $0x8c] sm:$0x1] %v3207
      %v3209 = vld [vmem:[#allocation2] sm:$0xf]
      %v3210 = vld [vmem:[#allocation2 + $0x8] sm:$0xf]
      %v3211 = vld [vmem:[#allocation2 + $0x10] sm:$0xf]
      %v3212 = vld [vmem:[#allocation2 + $0x18] sm:$0xf]
      %v3213 = vld [vmem:[#allocation2 + $0x20] sm:$0xf]
      %v3214 = vld [vmem:[#allocation2 + $0x28] sm:$0xf]
      %v3215 = vld [vmem:[#allocation2 + $0x30] sm:$0xf]
      %v3216 = vld [vmem:[#allocation2 + $0x38] sm:$0xf]
      %v3217 = vld [vmem:[#allocation2 + $0x50] sm:$0xf]
      %v3218 = vld [vmem:[#allocation2 + $0x58] sm:$0xf]
      %v3219 = vld [vmem:[#allocation2 + $0x60] sm:$0xf]
      %v3220 = vld [vmem:[#allocation2 + $0x68] sm:$0xf]
      %v3221 = vld [vmem:[#allocation2 + $0x70] sm:$0xf]
      %v3222 = vld [vmem:[#allocation2 + $0x78] sm:$0xf]
      %v3223 = vld [vmem:[#allocation2 + $0x80] sm:$0xf]
      %v3224 = vld [vmem:[#allocation2 + $0x88] sm:$0xf]
      %v3225 = vld [vmem:[%s327] sm:$0xf]
      %v3226 = vld [vmem:[%s327 + $0x4] sm:$0xf]
      %v3227 = vld [vmem:[%s327 + $0x8] sm:$0xf]
      %v3228 = vld [vmem:[%s327 + $0xc] sm:$0xf]
      %v3229 = vld [vmem:[#allocation2 + $0x4] sm:$0x1]
      %v3230 = vld [vmem:[#allocation2 + $0xc] sm:$0x1]
      %v3231 = vld [vmem:[#allocation2 + $0x14] sm:$0x1]
      %v3232 = vld [vmem:[#allocation2 + $0x1c] sm:$0x1]
      %v3233 = vld [vmem:[#allocation2 + $0x24] sm:$0x1]
      %v3234 = vld [vmem:[#allocation2 + $0x2c] sm:$0x1]
      %v3235 = vld [vmem:[#allocation2 + $0x34] sm:$0x1]
      %v3236 = vld [vmem:[#allocation2 + $0x3c] sm:$0x1]
      %v3237 = vld [vmem:[#allocation2 + $0x54] sm:$0x1]
      %v3238 = vld [vmem:[#allocation2 + $0x5c] sm:$0x1]
      %v3239 = vld [vmem:[#allocation2 + $0x64] sm:$0x1]
      %v3240 = vld [vmem:[#allocation2 + $0x6c] sm:$0x1]
      %v3241 = vld [vmem:[#allocation2 + $0x74] sm:$0x1]
      %v3242 = vld [vmem:[#allocation2 + $0x7c] sm:$0x1]
      %v3243 = vld [vmem:[#allocation2 + $0x84] sm:$0x1]
      %v3244 = vld [vmem:[#allocation2 + $0x8c] sm:$0x1]
      %v3246 = vshrl.u32 %v3209, 16
      %v3248 = vrot.slane %v3246, 4
      %v3249 = vshll.u32 %v3209, 16
      %v3251 = vrot.slane %v3249, 5
      %v3252 = vor.u32 %v3248, %v3251
      %v3253 = vrot.slane %v3252, 4
      %v3255 = vshll.u32 %v3229, 16
      %v3257 = vrot.slane %v3255, 5
      %v3258 = vsel %vm742, %v3253, %v3257
      %v3260 = vshrl.u32 %v3210, 16
      %v3262 = vrot.slane %v3260, 4
      %v3263 = vshll.u32 %v3210, 16
      %v3265 = vrot.slane %v3263, 5
      %v3266 = vor.u32 %v3262, %v3265
      %v3267 = vrot.slane %v3266, 4
      %v3269 = vshll.u32 %v3230, 16
      %v3271 = vrot.slane %v3269, 5
      %v3272 = vsel %vm742, %v3267, %v3271
      %v3274 = vshrl.u32 %v3211, 16
      %v3276 = vrot.slane %v3274, 4
      %v3277 = vshll.u32 %v3211, 16
      %v3279 = vrot.slane %v3277, 5
      %v3280 = vor.u32 %v3276, %v3279
      %v3281 = vrot.slane %v3280, 4
      %v3283 = vshll.u32 %v3231, 16
      %v3285 = vrot.slane %v3283, 5
      %v3286 = vsel %vm742, %v3281, %v3285
      %v3288 = vshrl.u32 %v3212, 16
      %v3290 = vrot.slane %v3288, 4
      %v3291 = vshll.u32 %v3212, 16
      %v3293 = vrot.slane %v3291, 5
      %v3294 = vor.u32 %v3290, %v3293
      %v3295 = vrot.slane %v3294, 4
      %v3297 = vshll.u32 %v3232, 16
      %v3299 = vrot.slane %v3297, 5
      %v3300 = vsel %vm742, %v3295, %v3299
      %v3302 = vshrl.u32 %v3213, 16
      %v3304 = vrot.slane %v3302, 4
      %v3305 = vshll.u32 %v3213, 16
      %v3307 = vrot.slane %v3305, 5
      %v3308 = vor.u32 %v3304, %v3307
      %v3309 = vrot.slane %v3308, 4
      %v3311 = vshll.u32 %v3233, 16
      %v3313 = vrot.slane %v3311, 5
      %v3314 = vsel %vm742, %v3309, %v3313
      %v3316 = vshrl.u32 %v3214, 16
      %v3318 = vrot.slane %v3316, 4
      %v3319 = vshll.u32 %v3214, 16
      %v3321 = vrot.slane %v3319, 5
      %v3322 = vor.u32 %v3318, %v3321
      %v3323 = vrot.slane %v3322, 4
      %v3325 = vshll.u32 %v3234, 16
      %v3327 = vrot.slane %v3325, 5
      %v3328 = vsel %vm742, %v3323, %v3327
      %v3330 = vshrl.u32 %v3215, 16
      %v3332 = vrot.slane %v3330, 4
      %v3333 = vshll.u32 %v3215, 16
      %v3335 = vrot.slane %v3333, 5
      %v3336 = vor.u32 %v3332, %v3335
      %v3337 = vrot.slane %v3336, 4
      %v3339 = vshll.u32 %v3235, 16
      %v3341 = vrot.slane %v3339, 5
      %v3342 = vsel %vm742, %v3337, %v3341
      %v3344 = vshrl.u32 %v3216, 16
      %v3346 = vrot.slane %v3344, 4
      %v3347 = vshll.u32 %v3216, 16
      %v3349 = vrot.slane %v3347, 5
      %v3350 = vor.u32 %v3346, %v3349
      %v3351 = vrot.slane %v3350, 4
      %v3353 = vshll.u32 %v3236, 16
      %v3355 = vrot.slane %v3353, 5
      %v3356 = vsel %vm742, %v3351, %v3355
      %v3358 = vshrl.u32 %v3217, 16
      %v3360 = vrot.slane %v3358, 4
      %v3361 = vshll.u32 %v3217, 16
      %v3363 = vrot.slane %v3361, 5
      %v3364 = vor.u32 %v3360, %v3363
      %v3365 = vrot.slane %v3364, 4
      %v3367 = vshll.u32 %v3237, 16
      %v3369 = vrot.slane %v3367, 5
      %v3370 = vsel %vm742, %v3365, %v3369
      %v3372 = vshrl.u32 %v3218, 16
      %v3374 = vrot.slane %v3372, 4
      %v3375 = vshll.u32 %v3218, 16
      %v3377 = vrot.slane %v3375, 5
      %v3378 = vor.u32 %v3374, %v3377
      %v3379 = vrot.slane %v3378, 4
      %v3381 = vshll.u32 %v3238, 16
      %v3383 = vrot.slane %v3381, 5
      %v3384 = vsel %vm742, %v3379, %v3383
      %v3386 = vshrl.u32 %v3219, 16
      %v3388 = vrot.slane %v3386, 4
      %v3389 = vshll.u32 %v3219, 16
      %v3391 = vrot.slane %v3389, 5
      %v3392 = vor.u32 %v3388, %v3391
      %v3393 = vrot.slane %v3392, 4
      %v3395 = vshll.u32 %v3239, 16
      %v3397 = vrot.slane %v3395, 5
      %v3398 = vsel %vm742, %v3393, %v3397
      %v3400 = vshrl.u32 %v3220, 16
      %v3402 = vrot.slane %v3400, 4
      %v3403 = vshll.u32 %v3220, 16
      %v3405 = vrot.slane %v3403, 5
      %v3406 = vor.u32 %v3402, %v3405
      %v3407 = vrot.slane %v3406, 4
      %v3409 = vshll.u32 %v3240, 16
      %v3411 = vrot.slane %v3409, 5
      %v3412 = vsel %vm742, %v3407, %v3411
      %v3414 = vshrl.u32 %v3221, 16
      %v3416 = vrot.slane %v3414, 4
      %v3417 = vshll.u32 %v3221, 16
      %v3419 = vrot.slane %v3417, 5
      %v3420 = vor.u32 %v3416, %v3419
      %v3421 = vrot.slane %v3420, 4
      %v3423 = vshll.u32 %v3241, 16
      %v3425 = vrot.slane %v3423, 5
      %v3426 = vsel %vm742, %v3421, %v3425
      %v3428 = vshrl.u32 %v3222, 16
      %v3430 = vrot.slane %v3428, 4
      %v3431 = vshll.u32 %v3222, 16
      %v3433 = vrot.slane %v3431, 5
      %v3434 = vor.u32 %v3430, %v3433
      %v3435 = vrot.slane %v3434, 4
      %v3437 = vshll.u32 %v3242, 16
      %v3439 = vrot.slane %v3437, 5
      %v3440 = vsel %vm742, %v3435, %v3439
      %v3442 = vshrl.u32 %v3223, 16
      %v3444 = vrot.slane %v3442, 4
      %v3445 = vshll.u32 %v3223, 16
      %v3447 = vrot.slane %v3445, 5
      %v3448 = vor.u32 %v3444, %v3447
      %v3449 = vrot.slane %v3448, 4
      %v3451 = vshll.u32 %v3243, 16
      %v3453 = vrot.slane %v3451, 5
      %v3454 = vsel %vm742, %v3449, %v3453
      %v3456 = vshrl.u32 %v3224, 16
      %v3458 = vrot.slane %v3456, 4
      %v3459 = vshll.u32 %v3224, 16
      %v3461 = vrot.slane %v3459, 5
      %v3462 = vor.u32 %v3458, %v3461
      %v3463 = vrot.slane %v3462, 4
      %v3465 = vshll.u32 %v3244, 16
      %v3467 = vrot.slane %v3465, 5
      %v3468 = vsel %vm742, %v3463, %v3467
      %s3469 = scalar_lea.vmem %s327, 16
      %v3470 = vld [vmem:[%s3469] sm:$0xf]
      %v3471 = vld [vmem:[%s3469 + $0x4] sm:$0xf]
      %v3472 = vld [vmem:[%s3469 + $0x8] sm:$0xf]
      %v3473 = vld [vmem:[%s3469 + $0xc] sm:$0xf]
      %v3474 = vunpack.c.l.b16 %v3258
      %v3475 = vunpack.c.l.b16 %v3272
      %v3476 = vunpack.c.l.b16 %v3286
      %v3477 = vunpack.c.l.b16 %v3300
      %v3478 = vunpack.c.l.b16 %v3314
      %v3479 = vunpack.c.l.b16 %v3328
      %v3480 = vunpack.c.l.b16 %v3342
      %v3481 = vunpack.c.l.b16 %v3356
      %v3482 = vunpack.c.l.b16 %v3370
      %v3483 = vunpack.c.l.b16 %v3384
      %v3484 = vunpack.c.l.b16 %v3398
      %v3485 = vunpack.c.l.b16 %v3412
      %v3486 = vunpack.c.l.b16 %v3426
      %v3487 = vunpack.c.l.b16 %v3440
      %v3488 = vunpack.c.l.b16 %v3454
      %v3489 = vunpack.c.l.b16 %v3468
      %v3490 = vpack.c.b16 %v3475, %v3474
      %v3491 = vpack.c.b16 %v3477, %v3476
      %v3492 = vpack.c.b16 %v3479, %v3478
      %v3493 = vpack.c.b16 %v3481, %v3480
      %v3494 = vpack.c.b16 %v3483, %v3482
      %v3495 = vpack.c.b16 %v3485, %v3484
      %v3496 = vpack.c.b16 %v3487, %v3486
      %v3497 = vpack.c.b16 %v3489, %v3488
      %v3502 = vunpack.c.l.b16 %v3470
      %v3503 = vunpack.c.l.b16 %v3471
      %v3504 = vunpack.c.l.b16 %v3472
      %v3505 = vunpack.c.l.b16 %v3473
      %v3506 = vpack.c.b16 %v3503, %v3502
      %v3507 = vpack.c.b16 %v3505, %v3504
      %vm3510 = vcmask 261120
      %v3512 = vsel %vm3510, %v3490, 0
      %v3515 = vsel %vm3510, %v3491, 0
      %v3518 = vsel %vm3510, %v3492, 0
      %v3521 = vsel %vm3510, %v3493, 0
      %v3524 = vsel %vm3510, %v3494, 0
      %v3527 = vsel %vm3510, %v3495, 0
      %v3530 = vsel %vm3510, %v3496, 0
      %v3533 = vsel %vm3510, %v3497, 0
      %3535 = vmatprep.subr.bf16.mxu0 0
      %3536 = vmatpush1.bf16.msra.mxu0 %v3506
      %3537 = vmatprep.subr.bf16.mxu0 0
      %3538 = vmatpush1.bf16.msra.mxu0 %v3507
      %3539 = vmatprep.subr.bf16.mxu0 0
      %3540 = vmatpush1.bf16.msra.mxu0 0
      %3541 = vmatprep.subr.bf16.mxu0 0
      %3542 = vmatpush1.bf16.msra.mxu0 0
      %3543 = vmatprep.subr.bf16.mxu0 0
      %3544 = vmatpush1.bf16.msra.mxu0 0
      %3545 = vmatprep.subr.bf16.mxu0 0
      %3546 = vmatpush1.bf16.msra.mxu0 0
      %3547 = vmatprep.subr.bf16.mxu0 0
      %3548 = vmatpush1.bf16.msra.mxu0 0
      %3549 = vmatprep.subr.bf16.mxu0 0
      %3550 = vmatpush1.bf16.msra.mxu0 0
      %3551 = vmatprep.subr.bf16.mxu0 0
      %3552 = vmatpush1.bf16.msra.mxu0 0
      %3553 = vmatprep.subr.bf16.mxu0 0
      %3554 = vmatpush1.bf16.msra.mxu0 0
      %3555 = vmatprep.subr.bf16.mxu0 0
      %3556 = vmatpush1.bf16.msra.mxu0 0
      %3557 = vmatprep.subr.bf16.mxu0 0
      %3558 = vmatpush1.bf16.msra.mxu0 0
      %3559 = vmatprep.subr.bf16.mxu0 0
      %3560 = vmatpush1.bf16.msra.mxu0 0
      %3561 = vmatprep.subr.bf16.mxu0 0
      %3562 = vmatpush1.bf16.msra.mxu0 0
      %3563 = vmatprep.subr.bf16.mxu0 0
      %3564 = vmatpush1.bf16.msra.mxu0 0
      %3565 = vmatprep.subr.bf16.mxu0 0
      %3566 = vmatpush1.bf16.msra.mxu0 0
      %3567 = vmatprep.mubr.bf16.mxu0 0
      %3568 = vmatmul.mubr.bf16.gmra.mrb[0].mxu0 %v3512
      %v3569 = vpop.f32.mrb[0].mxu0
      %v3570 = vadd.f32 0.0, %v3569
      %v3571 = vpop.f32.mrb[0].mxu0
      %v3572 = vpop.f32.mrb[0].mxu0
      %v3573 = vadd.f32 0.0, %v3572
      %v3574 = vpop.f32.mrb[0].mxu0
      %3575 = vmatprep.mubr.bf16.mxu0 0
      %3576 = vmatmul.mubr.bf16.gmra.mrb[0].mxu0 %v3515
      %v3577 = vpop.f32.mrb[0].mxu0
      %v3578 = vadd.f32 0.0, %v3577
      %v3579 = vpop.f32.mrb[0].mxu0
      %v3580 = vpop.f32.mrb[0].mxu0
      %v3581 = vadd.f32 0.0, %v3580
      %v3582 = vpop.f32.mrb[0].mxu0
      %3583 = vmatprep.mubr.bf16.mxu0 0
      %3584 = vmatmul.mubr.bf16.gmra.mrb[0].mxu0 %v3518
      %v3585 = vpop.f32.mrb[0].mxu0
      %v3586 = vadd.f32 0.0, %v3585
      %v3587 = vpop.f32.mrb[0].mxu0
      %v3588 = vpop.f32.mrb[0].mxu0
      %v3589 = vadd.f32 0.0, %v3588
      %v3590 = vpop.f32.mrb[0].mxu0
      %3591 = vmatprep.mubr.bf16.mxu0 0
      %3592 = vmatmul.mubr.bf16.gmra.mrb[0].mxu0 %v3521
      %v3593 = vpop.f32.mrb[0].mxu0
      %v3594 = vadd.f32 0.0, %v3593
      %v3595 = vpop.f32.mrb[0].mxu0
      %v3596 = vpop.f32.mrb[0].mxu0
      %v3597 = vadd.f32 0.0, %v3596
      %v3598 = vpop.f32.mrb[0].mxu0
      %3599 = vmatprep.mubr.bf16.mxu0 0
      %3600 = vmatmul.mubr.bf16.gmra.mrb[0].mxu0 %v3524
      %v3601 = vpop.f32.mrb[0].mxu0
      %v3602 = vadd.f32 0.0, %v3601
      %v3603 = vpop.f32.mrb[0].mxu0
      %v3604 = vpop.f32.mrb[0].mxu0
      %v3605 = vadd.f32 0.0, %v3604
      %v3606 = vpop.f32.mrb[0].mxu0
      %3607 = vmatprep.mubr.bf16.mxu0 0
      %3608 = vmatmul.mubr.bf16.gmra.mrb[0].mxu0 %v3527
      %v3609 = vpop.f32.mrb[0].mxu0
      %v3610 = vadd.f32 0.0, %v3609
      %v3611 = vpop.f32.mrb[0].mxu0
      %v3612 = vpop.f32.mrb[0].mxu0
      %v3613 = vadd.f32 0.0, %v3612
      %v3614 = vpop.f32.mrb[0].mxu0
      %3615 = vmatprep.mubr.bf16.mxu0 0
      %3616 = vmatmul.mubr.bf16.gmra.mrb[0].mxu0 %v3530
      %v3617 = vpop.f32.mrb[0].mxu0
      %v3618 = vadd.f32 0.0, %v3617
      %v3619 = vpop.f32.mrb[0].mxu0
      %v3620 = vpop.f32.mrb[0].mxu0
      %v3621 = vadd.f32 0.0, %v3620
      %v3622 = vpop.f32.mrb[0].mxu0
      %3623 = vmatprep.mubr.bf16.mxu0 0
      %3624 = vmatmul.mubr.bf16.gmra.mrb[0].mxu0 %v3533
      %v3625 = vpop.f32.mrb[0].mxu0
      %v3626 = vadd.f32 0.0, %v3625
      %v3627 = vpop.f32.mrb[0].mxu0
      %v3628 = vpop.f32.mrb[0].mxu0
      %v3629 = vadd.f32 0.0, %v3628
      %v3630 = vpop.f32.mrb[0].mxu0
      %3631 = vdwg.mxu0
      %v3648 = vunpack.c.l.b16 %v3209
      %v3649 = vunpack.c.l.b16 %v3210
      %v3650 = vunpack.c.l.b16 %v3211
      %v3651 = vunpack.c.l.b16 %v3212
      %v3652 = vunpack.c.l.b16 %v3213
      %v3653 = vunpack.c.l.b16 %v3214
      %v3654 = vunpack.c.l.b16 %v3215
      %v3655 = vunpack.c.l.b16 %v3216
      %v3656 = vunpack.c.l.b16 %v3217
      %v3657 = vunpack.c.l.b16 %v3218
      %v3658 = vunpack.c.l.b16 %v3219
      %v3659 = vunpack.c.l.b16 %v3220
      %v3660 = vunpack.c.l.b16 %v3221
      %v3661 = vunpack.c.l.b16 %v3222
      %v3662 = vunpack.c.l.b16 %v3223
      %v3663 = vunpack.c.l.b16 %v3224
      %v3664 = vpack.c.b16 %v3649, %v3648
      %v3665 = vpack.c.b16 %v3651, %v3650
      %v3666 = vpack.c.b16 %v3653, %v3652
      %v3667 = vpack.c.b16 %v3655, %v3654
      %v3668 = vpack.c.b16 %v3657, %v3656
      %v3669 = vpack.c.b16 %v3659, %v3658
      %v3670 = vpack.c.b16 %v3661, %v3660
      %v3671 = vpack.c.b16 %v3663, %v3662
      %v3676 = vunpack.c.l.b16 %v3225
      %v3677 = vunpack.c.l.b16 %v3226
      %v3678 = vunpack.c.l.b16 %v3227
      %v3679 = vunpack.c.l.b16 %v3228
      %v3680 = vpack.c.b16 %v3677, %v3676
      %v3681 = vpack.c.b16 %v3679, %v3678
      %v3685 = vsel %vm3510, %v3664, 0
      %v3688 = vsel %vm3510, %v3665, 0
      %v3691 = vsel %vm3510, %v3666, 0
      %v3694 = vsel %vm3510, %v3667, 0
      %v3697 = vsel %vm3510, %v3668, 0
      %v3700 = vsel %vm3510, %v3669, 0
      %v3703 = vsel %vm3510, %v3670, 0
      %v3706 = vsel %vm3510, %v3671, 0
      %3708 = vmatprep.subr.bf16.mxu0 0
      %3709 = vmatpush1.bf16.msra.mxu0 %v3680
      %3710 = vmatprep.subr.bf16.mxu0 0
      %3711 = vmatpush1.bf16.msra.mxu0 %v3681
      %3712 = vmatprep.subr.bf16.mxu0 0
      %3713 = vmatpush1.bf16.msra.mxu0 0
      %3714 = vmatprep.subr.bf16.mxu0 0
      %3715 = vmatpush1.bf16.msra.mxu0 0
      %3716 = vmatprep.subr.bf16.mxu0 0
      %3717 = vmatpush1.bf16.msra.mxu0 0
      %3718 = vmatprep.subr.bf16.mxu0 0
      %3719 = vmatpush1.bf16.msra.mxu0 0
      %3720 = vmatprep.subr.bf16.mxu0 0
      %3721 = vmatpush1.bf16.msra.mxu0 0
      %3722 = vmatprep.subr.bf16.mxu0 0
      %3723 = vmatpush1.bf16.msra.mxu0 0
      %3724 = vmatprep.subr.bf16.mxu0 0
      %3725 = vmatpush1.bf16.msra.mxu0 0
      %3726 = vmatprep.subr.bf16.mxu0 0
      %3727 = vmatpush1.bf16.msra.mxu0 0
      %3728 = vmatprep.subr.bf16.mxu0 0
      %3729 = vmatpush1.bf16.msra.mxu0 0
      %3730 = vmatprep.subr.bf16.mxu0 0
      %3731 = vmatpush1.bf16.msra.mxu0 0
      %3732 = vmatprep.subr.bf16.mxu0 0
      %3733 = vmatpush1.bf16.msra.mxu0 0
      %3734 = vmatprep.subr.bf16.mxu0 0
      %3735 = vmatpush1.bf16.msra.mxu0 0
      %3736 = vmatprep.subr.bf16.mxu0 0
      %3737 = vmatpush1.bf16.msra.mxu0 0
      %3738 = vmatprep.subr.bf16.mxu0 0
      %3739 = vmatpush1.bf16.msra.mxu0 0
      %3740 = vmatprep.mubr.bf16.mxu0 0
      %3741 = vmatmul.mubr.bf16.gmra.mrb[0].mxu0 %v3685
      %v3742 = vpop.f32.mrb[0].mxu0
      %v3743 = vadd.f32 %v3570, %v3742
      %v3744 = vpop.f32.mrb[0].mxu0
      %v3745 = vpop.f32.mrb[0].mxu0
      %v3746 = vadd.f32 %v3573, %v3745
      %v3747 = vpop.f32.mrb[0].mxu0
      %3748 = vmatprep.mubr.bf16.mxu0 0
      %3749 = vmatmul.mubr.bf16.gmra.mrb[0].mxu0 %v3688
      %v3750 = vpop.f32.mrb[0].mxu0
      %v3751 = vadd.f32 %v3578, %v3750
      %v3752 = vpop.f32.mrb[0].mxu0
      %v3753 = vpop.f32.mrb[0].mxu0
      %v3754 = vadd.f32 %v3581, %v3753
      %v3755 = vpop.f32.mrb[0].mxu0
      %3756 = vmatprep.mubr.bf16.mxu0 0
      %3757 = vmatmul.mubr.bf16.gmra.mrb[0].mxu0 %v3691
      %v3758 = vpop.f32.mrb[0].mxu0
      %v3759 = vadd.f32 %v3586, %v3758
      %v3760 = vpop.f32.mrb[0].mxu0
      %v3761 = vpop.f32.mrb[0].mxu0
      %v3762 = vadd.f32 %v3589, %v3761
      %v3763 = vpop.f32.mrb[0].mxu0
      %3764 = vmatprep.mubr.bf16.mxu0 0
      %3765 = vmatmul.mubr.bf16.gmra.mrb[0].mxu0 %v3694
      %v3766 = vpop.f32.mrb[0].mxu0
      %v3767 = vadd.f32 %v3594, %v3766
      %v3768 = vpop.f32.mrb[0].mxu0
      %v3769 = vpop.f32.mrb[0].mxu0
      %v3770 = vadd.f32 %v3597, %v3769
      %v3771 = vpop.f32.mrb[0].mxu0
      %3772 = vmatprep.mubr.bf16.mxu0 0
      %3773 = vmatmul.mubr.bf16.gmra.mrb[0].mxu0 %v3697
      %v3774 = vpop.f32.mrb[0].mxu0
      %v3775 = vadd.f32 %v3602, %v3774
      %v3776 = vpop.f32.mrb[0].mxu0
      %v3777 = vpop.f32.mrb[0].mxu0
      %v3778 = vadd.f32 %v3605, %v3777
      %v3779 = vpop.f32.mrb[0].mxu0
      %3780 = vmatprep.mubr.bf16.mxu0 0
      %3781 = vmatmul.mubr.bf16.gmra.mrb[0].mxu0 %v3700
      %v3782 = vpop.f32.mrb[0].mxu0
      %v3783 = vadd.f32 %v3610, %v3782
      %v3784 = vpop.f32.mrb[0].mxu0
      %v3785 = vpop.f32.mrb[0].mxu0
      %v3786 = vadd.f32 %v3613, %v3785
      %v3787 = vpop.f32.mrb[0].mxu0
      %3788 = vmatprep.mubr.bf16.mxu0 0
      %3789 = vmatmul.mubr.bf16.gmra.mrb[0].mxu0 %v3703
      %v3790 = vpop.f32.mrb[0].mxu0
      %v3791 = vadd.f32 %v3618, %v3790
      %v3792 = vpop.f32.mrb[0].mxu0
      %v3793 = vpop.f32.mrb[0].mxu0
      %v3794 = vadd.f32 %v3621, %v3793
      %v3795 = vpop.f32.mrb[0].mxu0
      %3796 = vmatprep.mubr.bf16.mxu0 0
      %3797 = vmatmul.mubr.bf16.gmra.mrb[0].mxu0 %v3706
      %v3798 = vpop.f32.mrb[0].mxu0
      %v3799 = vadd.f32 %v3626, %v3798
      %v3800 = vpop.f32.mrb[0].mxu0
      %v3801 = vpop.f32.mrb[0].mxu0
      %v3802 = vadd.f32 %v3629, %v3801
      %v3803 = vpop.f32.mrb[0].mxu0
      %3804 = vdwg.mxu0
      %v3805 = vld [vmem:[#allocation2] sm:$0xe]
      %v3806 = vld [vmem:[#allocation2 + $0x8] sm:$0xe]
      %v3807 = vld [vmem:[#allocation2 + $0x10] sm:$0xe]
      %v3808 = vld [vmem:[#allocation2 + $0x18] sm:$0xe]
      %v3809 = vld [vmem:[#allocation2 + $0x20] sm:$0xe]
      %v3810 = vld [vmem:[#allocation2 + $0x28] sm:$0xe]
      %v3811 = vld [vmem:[#allocation2 + $0x30] sm:$0xe]
      %v3812 = vld [vmem:[#allocation2 + $0x38] sm:$0xe]
      %v3813 = vld [vmem:[#allocation2 + $0x50] sm:$0xe]
      %v3814 = vld [vmem:[#allocation2 + $0x58] sm:$0xe]
      %v3815 = vld [vmem:[#allocation2 + $0x60] sm:$0xe]
      %v3816 = vld [vmem:[#allocation2 + $0x68] sm:$0xe]
      %v3817 = vld [vmem:[#allocation2 + $0x70] sm:$0xe]
      %v3818 = vld [vmem:[#allocation2 + $0x78] sm:$0xe]
      %v3819 = vld [vmem:[#allocation2 + $0x80] sm:$0xe]
      %v3820 = vld [vmem:[#allocation2 + $0x88] sm:$0xe]
      %vm3853 = vcmask 1042432
      %vm3854 = vcmask 1046532
      %vm3855 = vmor %vm3853, %vm3854
      %v3856 = vrot.slane %v3805, 5
      %v3857 = vrot.slane %v3856, 4
      %v3858 = vrot.slane %v3229, 5
      %v3859 = vsel %vm3855, %v3857, %v3858
      %v3860 = vrot.slane %v3806, 5
      %v3861 = vrot.slane %v3860, 4
      %v3862 = vrot.slane %v3230, 5
      %v3863 = vsel %vm3855, %v3861, %v3862
      %v3864 = vrot.slane %v3807, 5
      %v3865 = vrot.slane %v3864, 4
      %v3866 = vrot.slane %v3231, 5
      %v3867 = vsel %vm3855, %v3865, %v3866
      %v3868 = vrot.slane %v3808, 5
      %v3869 = vrot.slane %v3868, 4
      %v3870 = vrot.slane %v3232, 5
      %v3871 = vsel %vm3855, %v3869, %v3870
      %v3872 = vrot.slane %v3809, 5
      %v3873 = vrot.slane %v3872, 4
      %v3874 = vrot.slane %v3233, 5
      %v3875 = vsel %vm3855, %v3873, %v3874
      %v3876 = vrot.slane %v3810, 5
      %v3877 = vrot.slane %v3876, 4
      %v3878 = vrot.slane %v3234, 5
      %v3879 = vsel %vm3855, %v3877, %v3878
      %v3880 = vrot.slane %v3811, 5
      %v3881 = vrot.slane %v3880, 4
      %v3882 = vrot.slane %v3235, 5
      %v3883 = vsel %vm3855, %v3881, %v3882
      %v3884 = vrot.slane %v3812, 5
      %v3885 = vrot.slane %v3884, 4
      %v3886 = vrot.slane %v3236, 5
      %v3887 = vsel %vm3855, %v3885, %v3886
      %v3888 = vrot.slane %v3813, 5
      %v3889 = vrot.slane %v3888, 4
      %v3890 = vrot.slane %v3237, 5
      %v3891 = vsel %vm3855, %v3889, %v3890
      %v3892 = vrot.slane %v3814, 5
      %v3893 = vrot.slane %v3892, 4
      %v3894 = vrot.slane %v3238, 5
      %v3895 = vsel %vm3855, %v3893, %v3894
      %v3896 = vrot.slane %v3815, 5
      %v3897 = vrot.slane %v3896, 4
      %v3898 = vrot.slane %v3239, 5
      %v3899 = vsel %vm3855, %v3897, %v3898
      %v3900 = vrot.slane %v3816, 5
      %v3901 = vrot.slane %v3900, 4
      %v3902 = vrot.slane %v3240, 5
      %v3903 = vsel %vm3855, %v3901, %v3902
      %v3904 = vrot.slane %v3817, 5
      %v3905 = vrot.slane %v3904, 4
      %v3906 = vrot.slane %v3241, 5
      %v3907 = vsel %vm3855, %v3905, %v3906
      %v3908 = vrot.slane %v3818, 5
      %v3909 = vrot.slane %v3908, 4
      %v3910 = vrot.slane %v3242, 5
      %v3911 = vsel %vm3855, %v3909, %v3910
      %v3912 = vrot.slane %v3819, 5
      %v3913 = vrot.slane %v3912, 4
      %v3914 = vrot.slane %v3243, 5
      %v3915 = vsel %vm3855, %v3913, %v3914
      %v3916 = vrot.slane %v3820, 5
      %v3917 = vrot.slane %v3916, 4
      %v3918 = vrot.slane %v3244, 5
      %v3919 = vsel %vm3855, %v3917, %v3918
      %s3920 = scalar_lea.vmem %s327, 32
      %v3921 = vld [vmem:[%s3920] sm:$0xf]
      %v3922 = vld [vmem:[%s3920 + $0x4] sm:$0xf]
      %v3923 = vld [vmem:[%s3920 + $0x8] sm:$0xf]
      %v3924 = vld [vmem:[%s3920 + $0xc] sm:$0xf]
      %v3925 = vunpack.c.l.b16 %v3859
      %v3926 = vunpack.c.l.b16 %v3863
      %v3927 = vunpack.c.l.b16 %v3867
      %v3928 = vunpack.c.l.b16 %v3871
      %v3929 = vunpack.c.l.b16 %v3875
      %v3930 = vunpack.c.l.b16 %v3879
      %v3931 = vunpack.c.l.b16 %v3883
      %v3932 = vunpack.c.l.b16 %v3887
      %v3933 = vunpack.c.l.b16 %v3891
      %v3934 = vunpack.c.l.b16 %v3895
      %v3935 = vunpack.c.l.b16 %v3899
      %v3936 = vunpack.c.l.b16 %v3903
      %v3937 = vunpack.c.l.b16 %v3907
      %v3938 = vunpack.c.l.b16 %v3911
      %v3939 = vunpack.c.l.b16 %v3915
      %v3940 = vunpack.c.l.b16 %v3919
      %v3941 = vpack.c.b16 %v3926, %v3925
      %v3942 = vpack.c.b16 %v3928, %v3927
      %v3943 = vpack.c.b16 %v3930, %v3929
      %v3944 = vpack.c.b16 %v3932, %v3931
      %v3945 = vpack.c.b16 %v3934, %v3933
      %v3946 = vpack.c.b16 %v3936, %v3935
      %v3947 = vpack.c.b16 %v3938, %v3937
      %v3948 = vpack.c.b16 %v3940, %v3939
      %v3953 = vunpack.c.l.b16 %v3921
      %v3954 = vunpack.c.l.b16 %v3922
      %v3955 = vunpack.c.l.b16 %v3923
      %v3956 = vunpack.c.l.b16 %v3924
      %v3957 = vpack.c.b16 %v3954, %v3953
      %v3958 = vpack.c.b16 %v3956, %v3955
      %v3962 = vsel %vm3510, %v3941, 0
      %v3965 = vsel %vm3510, %v3942, 0
      %v3968 = vsel %vm3510, %v3943, 0
      %v3971 = vsel %vm3510, %v3944, 0
      %v3974 = vsel %vm3510, %v3945, 0
      %v3977 = vsel %vm3510, %v3946, 0
      %v3980 = vsel %vm3510, %v3947, 0
      %v3983 = vsel %vm3510, %v3948, 0
      %3985 = vmatprep.subr.bf16.mxu0 0
      %3986 = vmatpush1.bf16.msra.mxu0 %v3957
      %3987 = vmatprep.subr.bf16.mxu0 0
      %3988 = vmatpush1.bf16.msra.mxu0 %v3958
      %3989 = vmatprep.subr.bf16.mxu0 0
      %3990 = vmatpush1.bf16.msra.mxu0 0
      %3991 = vmatprep.subr.bf16.mxu0 0
      %3992 = vmatpush1.bf16.msra.mxu0 0
      %3993 = vmatprep.subr.bf16.mxu0 0
      %3994 = vmatpush1.bf16.msra.mxu0 0
      %3995 = vmatprep.subr.bf16.mxu0 0
      %3996 = vmatpush1.bf16.msra.mxu0 0
      %3997 = vmatprep.subr.bf16.mxu0 0
      %3998 = vmatpush1.bf16.msra.mxu0 0
      %3999 = vmatprep.subr.bf16.mxu0 0
      %4000 = vmatpush1.bf16.msra.mxu0 0
      %4001 = vmatprep.subr.bf16.mxu0 0
      %4002 = vmatpush1.bf16.msra.mxu0 0
      %4003 = vmatprep.subr.bf16.mxu0 0
      %4004 = vmatpush1.bf16.msra.mxu0 0
      %4005 = vmatprep.subr.bf16.mxu0 0
      %4006 = vmatpush1.bf16.msra.mxu0 0
      %4007 = vmatprep.subr.bf16.mxu0 0
      %4008 = vmatpush1.bf16.msra.mxu0 0
      %4009 = vmatprep.subr.bf16.mxu0 0
      %4010 = vmatpush1.bf16.msra.mxu0 0
      %4011 = vmatprep.subr.bf16.mxu0 0
      %4012 = vmatpush1.bf16.msra.mxu0 0
      %4013 = vmatprep.subr.bf16.mxu0 0
      %4014 = vmatpush1.bf16.msra.mxu0 0
      %4015 = vmatprep.subr.bf16.mxu0 0
      %4016 = vmatpush1.bf16.msra.mxu0 0
      %4017 = vmatprep.mubr.bf16.mxu0 0
      %4018 = vmatmul.mubr.bf16.gmra.mrb[0].mxu0 %v3962
      %v4019 = vpop.f32.mrb[0].mxu0
      %v4020 = vadd.f32 0.0, %v4019
      %v4021 = vpop.f32.mrb[0].mxu0
      %v4022 = vpop.f32.mrb[0].mxu0
      %v4023 = vadd.f32 0.0, %v4022
      %v4024 = vpop.f32.mrb[0].mxu0
      %4025 = vmatprep.mubr.bf16.mxu0 0
      %4026 = vmatmul.mubr.bf16.gmra.mrb[0].mxu0 %v3965
      %v4027 = vpop.f32.mrb[0].mxu0
      %v4028 = vadd.f32 0.0, %v4027
      %v4029 = vpop.f32.mrb[0].mxu0
      %v4030 = vpop.f32.mrb[0].mxu0
      %v4031 = vadd.f32 0.0, %v4030
      %v4032 = vpop.f32.mrb[0].mxu0
      %4033 = vmatprep.mubr.bf16.mxu0 0
      %4034 = vmatmul.mubr.bf16.gmra.mrb[0].mxu0 %v3968
      %v4035 = vpop.f32.mrb[0].mxu0
      %v4036 = vadd.f32 0.0, %v4035
      %v4037 = vpop.f32.mrb[0].mxu0
      %v4038 = vpop.f32.mrb[0].mxu0
      %v4039 = vadd.f32 0.0, %v4038
      %v4040 = vpop.f32.mrb[0].mxu0
      %4041 = vmatprep.mubr.bf16.mxu0 0
      %4042 = vmatmul.mubr.bf16.gmra.mrb[0].mxu0 %v3971
      %v4043 = vpop.f32.mrb[0].mxu0
      %v4044 = vadd.f32 0.0, %v4043
      %v4045 = vpop.f32.mrb[0].mxu0
      %v4046 = vpop.f32.mrb[0].mxu0
      %v4047 = vadd.f32 0.0, %v4046
      %v4048 = vpop.f32.mrb[0].mxu0
      %4049 = vmatprep.mubr.bf16.mxu0 0
      %4050 = vmatmul.mubr.bf16.gmra.mrb[0].mxu0 %v3974
      %v4051 = vpop.f32.mrb[0].mxu0
      %v4052 = vadd.f32 0.0, %v4051
      %v4053 = vpop.f32.mrb[0].mxu0
      %v4054 = vpop.f32.mrb[0].mxu0
      %v4055 = vadd.f32 0.0, %v4054
      %v4056 = vpop.f32.mrb[0].mxu0
      %4057 = vmatprep.mubr.bf16.mxu0 0
      %4058 = vmatmul.mubr.bf16.gmra.mrb[0].mxu0 %v3977
      %v4059 = vpop.f32.mrb[0].mxu0
      %v4060 = vadd.f32 0.0, %v4059
      %v4061 = vpop.f32.mrb[0].mxu0
      %v4062 = vpop.f32.mrb[0].mxu0
      %v4063 = vadd.f32 0.0, %v4062
      %v4064 = vpop.f32.mrb[0].mxu0
      %4065 = vmatprep.mubr.bf16.mxu0 0
      %4066 = vmatmul.mubr.bf16.gmra.mrb[0].mxu0 %v3980
      %v4067 = vpop.f32.mrb[0].mxu0
      %v4068 = vadd.f32 0.0, %v4067
      %v4069 = vpop.f32.mrb[0].mxu0
      %v4070 = vpop.f32.mrb[0].mxu0
      %v4071 = vadd.f32 0.0, %v4070
      %v4072 = vpop.f32.mrb[0].mxu0
      %4073 = vmatprep.mubr.bf16.mxu0 0
      %4074 = vmatmul.mubr.bf16.gmra.mrb[0].mxu0 %v3983
      %v4075 = vpop.f32.mrb[0].mxu0
      %v4076 = vadd.f32 0.0, %v4075
      %v4077 = vpop.f32.mrb[0].mxu0
      %v4078 = vpop.f32.mrb[0].mxu0
      %v4079 = vadd.f32 0.0, %v4078
      %v4080 = vpop.f32.mrb[0].mxu0
      %4081 = vdwg.mxu0
      %v4082 = vadd.f32 %v3743, %v4020
      %v4083 = vadd.f32 %v3746, %v4023
      %v4084 = vadd.f32 %v3751, %v4028
      %v4085 = vadd.f32 %v3754, %v4031
      %v4086 = vadd.f32 %v3759, %v4036
      %v4087 = vadd.f32 %v3762, %v4039
      %v4088 = vadd.f32 %v3767, %v4044
      %v4089 = vadd.f32 %v3770, %v4047
      %v4090 = vadd.f32 %v3775, %v4052
      %v4091 = vadd.f32 %v3778, %v4055
      %v4092 = vadd.f32 %v3783, %v4060
      %v4093 = vadd.f32 %v3786, %v4063
      %v4094 = vadd.f32 %v3791, %v4068
      %v4095 = vadd.f32 %v3794, %v4071
      %v4096 = vadd.f32 %v3799, %v4076
      %v4097 = vadd.f32 %v3802, %v4079
      %v4098 = vld [vmem:[%s3106] sm:$0xf]
      %v4099 = vld [vmem:[%s3106 + $0x8] sm:$0xf]
      %v4100 = vld [vmem:[%s3106 + $0x10] sm:$0xf]
      %v4101 = vld [vmem:[%s3106 + $0x18] sm:$0xf]
      %v4102 = vld [vmem:[%s3106 + $0x20] sm:$0xf]
      %v4103 = vld [vmem:[%s3106 + $0x28] sm:$0xf]
      %v4104 = vld [vmem:[%s3106 + $0x30] sm:$0xf]
      %v4105 = vld [vmem:[%s3106 + $0x38] sm:$0xf]
      %v4106 = vld [vmem:[%s3106 + $0x50] sm:$0xf]
      %v4107 = vld [vmem:[%s3106 + $0x58] sm:$0xf]
      %v4108 = vld [vmem:[%s3106 + $0x60] sm:$0xf]
      %v4109 = vld [vmem:[%s3106 + $0x68] sm:$0xf]
      %v4110 = vld [vmem:[%s3106 + $0x70] sm:$0xf]
      %v4111 = vld [vmem:[%s3106 + $0x78] sm:$0xf]
      %v4112 = vld [vmem:[%s3106 + $0x80] sm:$0xf]
      %v4113 = vld [vmem:[%s3106 + $0x88] sm:$0xf]
      %s4114 = scalar_lea.vmem %s327, 48
      %v4115 = vld [vmem:[%s4114] sm:$0xf]
      %v4116 = vld [vmem:[%s4114 + $0x4] sm:$0xf]
      %v4117 = vld [vmem:[%s4114 + $0x8] sm:$0xf]
      %v4118 = vld [vmem:[%s4114 + $0xc] sm:$0xf]
      %v4135 = vunpack.c.l.b16 %v4098
      %v4136 = vunpack.c.l.b16 %v4099
      %v4137 = vunpack.c.l.b16 %v4100
      %v4138 = vunpack.c.l.b16 %v4101
      %v4139 = vunpack.c.l.b16 %v4102
      %v4140 = vunpack.c.l.b16 %v4103
      %v4141 = vunpack.c.l.b16 %v4104
      %v4142 = vunpack.c.l.b16 %v4105
      %v4143 = vunpack.c.l.b16 %v4106
      %v4144 = vunpack.c.l.b16 %v4107
      %v4145 = vunpack.c.l.b16 %v4108
      %v4146 = vunpack.c.l.b16 %v4109
      %v4147 = vunpack.c.l.b16 %v4110
      %v4148 = vunpack.c.l.b16 %v4111
      %v4149 = vunpack.c.l.b16 %v4112
      %v4150 = vunpack.c.l.b16 %v4113
      %v4151 = vpack.c.b16 %v4136, %v4135
      %v4152 = vpack.c.b16 %v4138, %v4137
      %v4153 = vpack.c.b16 %v4140, %v4139
      %v4154 = vpack.c.b16 %v4142, %v4141
      %v4155 = vpack.c.b16 %v4144, %v4143
      %v4156 = vpack.c.b16 %v4146, %v4145
      %v4157 = vpack.c.b16 %v4148, %v4147
      %v4158 = vpack.c.b16 %v4150, %v4149
      %v4163 = vunpack.c.l.b16 %v4115
      %v4164 = vunpack.c.l.b16 %v4116
      %v4165 = vunpack.c.l.b16 %v4117
      %v4166 = vunpack.c.l.b16 %v4118
      %v4167 = vpack.c.b16 %v4164, %v4163
      %v4168 = vpack.c.b16 %v4166, %v4165
      %v4172 = vsel %vm3510, %v4151, 0
      %v4175 = vsel %vm3510, %v4152, 0
      %v4178 = vsel %vm3510, %v4153, 0
      %v4181 = vsel %vm3510, %v4154, 0
      %v4184 = vsel %vm3510, %v4155, 0
      %v4187 = vsel %vm3510, %v4156, 0
      %v4190 = vsel %vm3510, %v4157, 0
      %v4193 = vsel %vm3510, %v4158, 0
      %4195 = vmatprep.subr.bf16.mxu0 0
      %4196 = vmatpush1.bf16.msra.mxu0 %v4167
      %4197 = vmatprep.subr.bf16.mxu0 0
      %4198 = vmatpush1.bf16.msra.mxu0 %v4168
      %4199 = vmatprep.subr.bf16.mxu0 0
      %4200 = vmatpush1.bf16.msra.mxu0 0
      %4201 = vmatprep.subr.bf16.mxu0 0
      %4202 = vmatpush1.bf16.msra.mxu0 0
      %4203 = vmatprep.subr.bf16.mxu0 0
      %4204 = vmatpush1.bf16.msra.mxu0 0
      %4205 = vmatprep.subr.bf16.mxu0 0
      %4206 = vmatpush1.bf16.msra.mxu0 0
      %4207 = vmatprep.subr.bf16.mxu0 0
      %4208 = vmatpush1.bf16.msra.mxu0 0
      %4209 = vmatprep.subr.bf16.mxu0 0
      %4210 = vmatpush1.bf16.msra.mxu0 0
      %4211 = vmatprep.subr.bf16.mxu0 0
      %4212 = vmatpush1.bf16.msra.mxu0 0
      %4213 = vmatprep.subr.bf16.mxu0 0
      %4214 = vmatpush1.bf16.msra.mxu0 0
      %4215 = vmatprep.subr.bf16.mxu0 0
      %4216 = vmatpush1.bf16.msra.mxu0 0
      %4217 = vmatprep.subr.bf16.mxu0 0
      %4218 = vmatpush1.bf16.msra.mxu0 0
      %4219 = vmatprep.subr.bf16.mxu0 0
      %4220 = vmatpush1.bf16.msra.mxu0 0
      %4221 = vmatprep.subr.bf16.mxu0 0
      %4222 = vmatpush1.bf16.msra.mxu0 0
      %4223 = vmatprep.subr.bf16.mxu0 0
      %4224 = vmatpush1.bf16.msra.mxu0 0
      %4225 = vmatprep.subr.bf16.mxu0 0
      %4226 = vmatpush1.bf16.msra.mxu0 0
      %4227 = vmatprep.mubr.bf16.mxu0 0
      %4228 = vmatmul.mubr.bf16.gmra.mrb[0].mxu0 %v4172
      %v4229 = vpop.f32.mrb[0].mxu0
      %v4230 = vadd.f32 0.0, %v4229
      %v4231 = vpop.f32.mrb[0].mxu0
      %v4232 = vpop.f32.mrb[0].mxu0
      %v4233 = vadd.f32 0.0, %v4232
      %v4234 = vpop.f32.mrb[0].mxu0
      %4235 = vmatprep.mubr.bf16.mxu0 0
      %4236 = vmatmul.mubr.bf16.gmra.mrb[0].mxu0 %v4175
      %v4237 = vpop.f32.mrb[0].mxu0
      %v4238 = vadd.f32 0.0, %v4237
      %v4239 = vpop.f32.mrb[0].mxu0
      %v4240 = vpop.f32.mrb[0].mxu0
      %v4241 = vadd.f32 0.0, %v4240
      %v4242 = vpop.f32.mrb[0].mxu0
      %4243 = vmatprep.mubr.bf16.mxu0 0
      %4244 = vmatmul.mubr.bf16.gmra.mrb[0].mxu0 %v4178
      %v4245 = vpop.f32.mrb[0].mxu0
      %v4246 = vadd.f32 0.0, %v4245
      %v4247 = vpop.f32.mrb[0].mxu0
      %v4248 = vpop.f32.mrb[0].mxu0
      %v4249 = vadd.f32 0.0, %v4248
      %v4250 = vpop.f32.mrb[0].mxu0
      %4251 = vmatprep.mubr.bf16.mxu0 0
      %4252 = vmatmul.mubr.bf16.gmra.mrb[0].mxu0 %v4181
      %v4253 = vpop.f32.mrb[0].mxu0
      %v4254 = vadd.f32 0.0, %v4253
      %v4255 = vpop.f32.mrb[0].mxu0
      %v4256 = vpop.f32.mrb[0].mxu0
      %v4257 = vadd.f32 0.0, %v4256
      %v4258 = vpop.f32.mrb[0].mxu0
      %4259 = vmatprep.mubr.bf16.mxu0 0
      %4260 = vmatmul.mubr.bf16.gmra.mrb[0].mxu0 %v4184
      %v4261 = vpop.f32.mrb[0].mxu0
      %v4262 = vadd.f32 0.0, %v4261
      %v4263 = vpop.f32.mrb[0].mxu0
      %v4264 = vpop.f32.mrb[0].mxu0
      %v4265 = vadd.f32 0.0, %v4264
      %v4266 = vpop.f32.mrb[0].mxu0
      %4267 = vmatprep.mubr.bf16.mxu0 0
      %4268 = vmatmul.mubr.bf16.gmra.mrb[0].mxu0 %v4187
      %v4269 = vpop.f32.mrb[0].mxu0
      %v4270 = vadd.f32 0.0, %v4269
      %v4271 = vpop.f32.mrb[0].mxu0
      %v4272 = vpop.f32.mrb[0].mxu0
      %v4273 = vadd.f32 0.0, %v4272
      %v4274 = vpop.f32.mrb[0].mxu0
      %4275 = vmatprep.mubr.bf16.mxu0 0
      %4276 = vmatmul.mubr.bf16.gmra.mrb[0].mxu0 %v4190
      %v4277 = vpop.f32.mrb[0].mxu0
      %v4278 = vadd.f32 0.0, %v4277
      %v4279 = vpop.f32.mrb[0].mxu0
      %v4280 = vpop.f32.mrb[0].mxu0
      %v4281 = vadd.f32 0.0, %v4280
      %v4282 = vpop.f32.mrb[0].mxu0
      %4283 = vmatprep.mubr.bf16.mxu0 0
      %4284 = vmatmul.mubr.bf16.gmra.mrb[0].mxu0 %v4193
      %v4285 = vpop.f32.mrb[0].mxu0
      %v4286 = vadd.f32 0.0, %v4285
      %v4287 = vpop.f32.mrb[0].mxu0
      %v4288 = vpop.f32.mrb[0].mxu0
      %v4289 = vadd.f32 0.0, %v4288
      %v4290 = vpop.f32.mrb[0].mxu0
      %4291 = vdwg.mxu0
      %v4292 = vadd.f32 %v4082, %v4230
      %v4293 = vadd.f32 %v4083, %v4233
      %v4294 = vadd.f32 %v4084, %v4238
      %v4295 = vadd.f32 %v4085, %v4241
      %v4296 = vadd.f32 %v4086, %v4246
      %v4297 = vadd.f32 %v4087, %v4249
      %v4298 = vadd.f32 %v4088, %v4254
      %v4299 = vadd.f32 %v4089, %v4257
      %v4300 = vadd.f32 %v4090, %v4262
      %v4301 = vadd.f32 %v4091, %v4265
      %v4302 = vadd.f32 %v4092, %v4270
      %v4303 = vadd.f32 %v4093, %v4273
      %v4304 = vadd.f32 %v4094, %v4278
      %v4305 = vadd.f32 %v4095, %v4281
      %v4306 = vadd.f32 %v4096, %v4286
      %v4307 = vadd.f32 %v4097, %v4289
      %v4308 = vld [vmem:[%s3106] sm:$0xf]
      %v4309 = vld [vmem:[%s3106 + $0x4] sm:$0x1]
      %v4310 = vld [vmem:[%s3106 + $0x8] sm:$0xf]
      %v4311 = vld [vmem:[%s3106 + $0xc] sm:$0x1]
      %v4312 = vld [vmem:[%s3106 + $0x10] sm:$0xf]
      %v4313 = vld [vmem:[%s3106 + $0x14] sm:$0x1]
      %v4314 = vld [vmem:[%s3106 + $0x18] sm:$0xf]
      %v4315 = vld [vmem:[%s3106 + $0x1c] sm:$0x1]
      %v4316 = vld [vmem:[%s3106 + $0x20] sm:$0xf]
      %v4317 = vld [vmem:[%s3106 + $0x24] sm:$0x1]
      %v4318 = vld [vmem:[%s3106 + $0x28] sm:$0xf]
      %v4319 = vld [vmem:[%s3106 + $0x2c] sm:$0x1]
      %v4320 = vld [vmem:[%s3106 + $0x30] sm:$0xf]
      %v4321 = vld [vmem:[%s3106 + $0x34] sm:$0x1]
      %v4322 = vld [vmem:[%s3106 + $0x38] sm:$0xf]
      %v4323 = vld [vmem:[%s3106 + $0x3c] sm:$0x1]
      %v4324 = vld [vmem:[%s3106 + $0x50] sm:$0xf]
      %v4325 = vld [vmem:[%s3106 + $0x54] sm:$0x1]
      %v4326 = vld [vmem:[%s3106 + $0x58] sm:$0xf]
      %v4327 = vld [vmem:[%s3106 + $0x5c] sm:$0x1]
      %v4328 = vld [vmem:[%s3106 + $0x60] sm:$0xf]
      %v4329 = vld [vmem:[%s3106 + $0x64] sm:$0x1]
      %v4330 = vld [vmem:[%s3106 + $0x68] sm:$0xf]
      %v4331 = vld [vmem:[%s3106 + $0x6c] sm:$0x1]
      %v4332 = vld [vmem:[%s3106 + $0x70] sm:$0xf]
      %v4333 = vld [vmem:[%s3106 + $0x74] sm:$0x1]
      %v4334 = vld [vmem:[%s3106 + $0x78] sm:$0xf]
      %v4335 = vld [vmem:[%s3106 + $0x7c] sm:$0x1]
      %v4336 = vld [vmem:[%s3106 + $0x80] sm:$0xf]
      %v4337 = vld [vmem:[%s3106 + $0x84] sm:$0x1]
      %v4338 = vld [vmem:[%s3106 + $0x88] sm:$0xf]
      %v4339 = vld [vmem:[%s3106 + $0x8c] sm:$0x1]
      %v4341 = vshrl.u32 %v4308, 16
      %v4343 = vrot.slane %v4341, 4
      %v4344 = vshll.u32 %v4308, 16
      %v4346 = vrot.slane %v4344, 5
      %v4347 = vor.u32 %v4343, %v4346
      %v4348 = vrot.slane %v4347, 4
      %v4350 = vshll.u32 %v4309, 16
      %v4352 = vrot.slane %v4350, 5
      %v4353 = vsel %vm742, %v4348, %v4352
      %v4355 = vshrl.u32 %v4310, 16
      %v4357 = vrot.slane %v4355, 4
      %v4358 = vshll.u32 %v4310, 16
      %v4360 = vrot.slane %v4358, 5
      %v4361 = vor.u32 %v4357, %v4360
      %v4362 = vrot.slane %v4361, 4
      %v4364 = vshll.u32 %v4311, 16
      %v4366 = vrot.slane %v4364, 5
      %v4367 = vsel %vm742, %v4362, %v4366
      %v4369 = vshrl.u32 %v4312, 16
      %v4371 = vrot.slane %v4369, 4
      %v4372 = vshll.u32 %v4312, 16
      %v4374 = vrot.slane %v4372, 5
      %v4375 = vor.u32 %v4371, %v4374
      %v4376 = vrot.slane %v4375, 4
      %v4378 = vshll.u32 %v4313, 16
      %v4380 = vrot.slane %v4378, 5
      %v4381 = vsel %vm742, %v4376, %v4380
      %v4383 = vshrl.u32 %v4314, 16
      %v4385 = vrot.slane %v4383, 4
      %v4386 = vshll.u32 %v4314, 16
      %v4388 = vrot.slane %v4386, 5
      %v4389 = vor.u32 %v4385, %v4388
      %v4390 = vrot.slane %v4389, 4
      %v4392 = vshll.u32 %v4315, 16
      %v4394 = vrot.slane %v4392, 5
      %v4395 = vsel %vm742, %v4390, %v4394
      %v4397 = vshrl.u32 %v4316, 16
      %v4399 = vrot.slane %v4397, 4
      %v4400 = vshll.u32 %v4316, 16
      %v4402 = vrot.slane %v4400, 5
      %v4403 = vor.u32 %v4399, %v4402
      %v4404 = vrot.slane %v4403, 4
      %v4406 = vshll.u32 %v4317, 16
      %v4408 = vrot.slane %v4406, 5
      %v4409 = vsel %vm742, %v4404, %v4408
      %v4411 = vshrl.u32 %v4318, 16
      %v4413 = vrot.slane %v4411, 4
      %v4414 = vshll.u32 %v4318, 16
      %v4416 = vrot.slane %v4414, 5
      %v4417 = vor.u32 %v4413, %v4416
      %v4418 = vrot.slane %v4417, 4
      %v4420 = vshll.u32 %v4319, 16
      %v4422 = vrot.slane %v4420, 5
      %v4423 = vsel %vm742, %v4418, %v4422
      %v4425 = vshrl.u32 %v4320, 16
      %v4427 = vrot.slane %v4425, 4
      %v4428 = vshll.u32 %v4320, 16
      %v4430 = vrot.slane %v4428, 5
      %v4431 = vor.u32 %v4427, %v4430
      %v4432 = vrot.slane %v4431, 4
      %v4434 = vshll.u32 %v4321, 16
      %v4436 = vrot.slane %v4434, 5
      %v4437 = vsel %vm742, %v4432, %v4436
      %v4439 = vshrl.u32 %v4322, 16
      %v4441 = vrot.slane %v4439, 4
      %v4442 = vshll.u32 %v4322, 16
      %v4444 = vrot.slane %v4442, 5
      %v4445 = vor.u32 %v4441, %v4444
      %v4446 = vrot.slane %v4445, 4
      %v4448 = vshll.u32 %v4323, 16
      %v4450 = vrot.slane %v4448, 5
      %v4451 = vsel %vm742, %v4446, %v4450
      %v4453 = vshrl.u32 %v4324, 16
      %v4455 = vrot.slane %v4453, 4
      %v4456 = vshll.u32 %v4324, 16
      %v4458 = vrot.slane %v4456, 5
      %v4459 = vor.u32 %v4455, %v4458
      %v4460 = vrot.slane %v4459, 4
      %v4462 = vshll.u32 %v4325, 16
      %v4464 = vrot.slane %v4462, 5
      %v4465 = vsel %vm742, %v4460, %v4464
      %v4467 = vshrl.u32 %v4326, 16
      %v4469 = vrot.slane %v4467, 4
      %v4470 = vshll.u32 %v4326, 16
      %v4472 = vrot.slane %v4470, 5
      %v4473 = vor.u32 %v4469, %v4472
      %v4474 = vrot.slane %v4473, 4
      %v4476 = vshll.u32 %v4327, 16
      %v4478 = vrot.slane %v4476, 5
      %v4479 = vsel %vm742, %v4474, %v4478
      %v4481 = vshrl.u32 %v4328, 16
      %v4483 = vrot.slane %v4481, 4
      %v4484 = vshll.u32 %v4328, 16
      %v4486 = vrot.slane %v4484, 5
      %v4487 = vor.u32 %v4483, %v4486
      %v4488 = vrot.slane %v4487, 4
      %v4490 = vshll.u32 %v4329, 16
      %v4492 = vrot.slane %v4490, 5
      %v4493 = vsel %vm742, %v4488, %v4492
      %v4495 = vshrl.u32 %v4330, 16
      %v4497 = vrot.slane %v4495, 4
      %v4498 = vshll.u32 %v4330, 16
      %v4500 = vrot.slane %v4498, 5
      %v4501 = vor.u32 %v4497, %v4500
      %v4502 = vrot.slane %v4501, 4
      %v4504 = vshll.u32 %v4331, 16
      %v4506 = vrot.slane %v4504, 5
      %v4507 = vsel %vm742, %v4502, %v4506
      %v4509 = vshrl.u32 %v4332, 16
      %v4511 = vrot.slane %v4509, 4
      %v4512 = vshll.u32 %v4332, 16
      %v4514 = vrot.slane %v4512, 5
      %v4515 = vor.u32 %v4511, %v4514
      %v4516 = vrot.slane %v4515, 4
      %v4518 = vshll.u32 %v4333, 16
      %v4520 = vrot.slane %v4518, 5
      %v4521 = vsel %vm742, %v4516, %v4520
      %v4523 = vshrl.u32 %v4334, 16
      %v4525 = vrot.slane %v4523, 4
      %v4526 = vshll.u32 %v4334, 16
      %v4528 = vrot.slane %v4526, 5
      %v4529 = vor.u32 %v4525, %v4528
      %v4530 = vrot.slane %v4529, 4
      %v4532 = vshll.u32 %v4335, 16
      %v4534 = vrot.slane %v4532, 5
      %v4535 = vsel %vm742, %v4530, %v4534
      %v4537 = vshrl.u32 %v4336, 16
      %v4539 = vrot.slane %v4537, 4
      %v4540 = vshll.u32 %v4336, 16
      %v4542 = vrot.slane %v4540, 5
      %v4543 = vor.u32 %v4539, %v4542
      %v4544 = vrot.slane %v4543, 4
      %v4546 = vshll.u32 %v4337, 16
      %v4548 = vrot.slane %v4546, 5
      %v4549 = vsel %vm742, %v4544, %v4548
      %v4551 = vshrl.u32 %v4338, 16
      %v4553 = vrot.slane %v4551, 4
      %v4554 = vshll.u32 %v4338, 16
      %v4556 = vrot.slane %v4554, 5
      %v4557 = vor.u32 %v4553, %v4556
      %v4558 = vrot.slane %v4557, 4
      %v4560 = vshll.u32 %v4339, 16
      %v4562 = vrot.slane %v4560, 5
      %v4563 = vsel %vm742, %v4558, %v4562
      %s4564 = scalar_lea.vmem %s327, 64
      %v4565 = vld [vmem:[%s4564] sm:$0xf]
      %v4566 = vld [vmem:[%s4564 + $0x4] sm:$0xf]
      %v4567 = vld [vmem:[%s4564 + $0x8] sm:$0xf]
      %v4568 = vld [vmem:[%s4564 + $0xc] sm:$0xf]
      %v4569 = vunpack.c.l.b16 %v4353
      %v4570 = vunpack.c.l.b16 %v4367
      %v4571 = vunpack.c.l.b16 %v4381
      %v4572 = vunpack.c.l.b16 %v4395
      %v4573 = vunpack.c.l.b16 %v4409
      %v4574 = vunpack.c.l.b16 %v4423
      %v4575 = vunpack.c.l.b16 %v4437
      %v4576 = vunpack.c.l.b16 %v4451
      %v4577 = vunpack.c.l.b16 %v4465
      %v4578 = vunpack.c.l.b16 %v4479
      %v4579 = vunpack.c.l.b16 %v4493
      %v4580 = vunpack.c.l.b16 %v4507
      %v4581 = vunpack.c.l.b16 %v4521
      %v4582 = vunpack.c.l.b16 %v4535
      %v4583 = vunpack.c.l.b16 %v4549
      %v4584 = vunpack.c.l.b16 %v4563
      %v4585 = vpack.c.b16 %v4570, %v4569
      %v4586 = vpack.c.b16 %v4572, %v4571
      %v4587 = vpack.c.b16 %v4574, %v4573
      %v4588 = vpack.c.b16 %v4576, %v4575
      %v4589 = vpack.c.b16 %v4578, %v4577
      %v4590 = vpack.c.b16 %v4580, %v4579
      %v4591 = vpack.c.b16 %v4582, %v4581
      %v4592 = vpack.c.b16 %v4584, %v4583
      %v4597 = vunpack.c.l.b16 %v4565
      %v4598 = vunpack.c.l.b16 %v4566
      %v4599 = vunpack.c.l.b16 %v4567
      %v4600 = vunpack.c.l.b16 %v4568
      %v4601 = vpack.c.b16 %v4598, %v4597
      %v4602 = vpack.c.b16 %v4600, %v4599
      %v4606 = vsel %vm3510, %v4585, 0
      %v4609 = vsel %vm3510, %v4586, 0
      %v4612 = vsel %vm3510, %v4587, 0
      %v4615 = vsel %vm3510, %v4588, 0
      %v4618 = vsel %vm3510, %v4589, 0
      %v4621 = vsel %vm3510, %v4590, 0
      %v4624 = vsel %vm3510, %v4591, 0
      %v4627 = vsel %vm3510, %v4592, 0
      %4629 = vmatprep.subr.bf16.mxu0 0
      %4630 = vmatpush1.bf16.msra.mxu0 %v4601
      %4631 = vmatprep.subr.bf16.mxu0 0
      %4632 = vmatpush1.bf16.msra.mxu0 %v4602
      %4633 = vmatprep.subr.bf16.mxu0 0
      %4634 = vmatpush1.bf16.msra.mxu0 0
      %4635 = vmatprep.subr.bf16.mxu0 0
      %4636 = vmatpush1.bf16.msra.mxu0 0
      %4637 = vmatprep.subr.bf16.mxu0 0
      %4638 = vmatpush1.bf16.msra.mxu0 0
      %4639 = vmatprep.subr.bf16.mxu0 0
      %4640 = vmatpush1.bf16.msra.mxu0 0
      %4641 = vmatprep.subr.bf16.mxu0 0
      %4642 = vmatpush1.bf16.msra.mxu0 0
      %4643 = vmatprep.subr.bf16.mxu0 0
      %4644 = vmatpush1.bf16.msra.mxu0 0
      %4645 = vmatprep.subr.bf16.mxu0 0
      %4646 = vmatpush1.bf16.msra.mxu0 0
      %4647 = vmatprep.subr.bf16.mxu0 0
      %4648 = vmatpush1.bf16.msra.mxu0 0
      %4649 = vmatprep.subr.bf16.mxu0 0
      %4650 = vmatpush1.bf16.msra.mxu0 0
      %4651 = vmatprep.subr.bf16.mxu0 0
      %4652 = vmatpush1.bf16.msra.mxu0 0
      %4653 = vmatprep.subr.bf16.mxu0 0
      %4654 = vmatpush1.bf16.msra.mxu0 0
      %4655 = vmatprep.subr.bf16.mxu0 0
      %4656 = vmatpush1.bf16.msra.mxu0 0
      %4657 = vmatprep.subr.bf16.mxu0 0
      %4658 = vmatpush1.bf16.msra.mxu0 0
      %4659 = vmatprep.subr.bf16.mxu0 0
      %4660 = vmatpush1.bf16.msra.mxu0 0
      %4661 = vmatprep.mubr.bf16.mxu0 0
      %4662 = vmatmul.mubr.bf16.gmra.mrb[0].mxu0 %v4606
      %v4663 = vpop.f32.mrb[0].mxu0
      %v4664 = vadd.f32 0.0, %v4663
      %v4665 = vpop.f32.mrb[0].mxu0
      %v4666 = vpop.f32.mrb[0].mxu0
      %v4667 = vadd.f32 0.0, %v4666
      %v4668 = vpop.f32.mrb[0].mxu0
      %4669 = vmatprep.mubr.bf16.mxu0 0
      %4670 = vmatmul.mubr.bf16.gmra.mrb[0].mxu0 %v4609
      %v4671 = vpop.f32.mrb[0].mxu0
      %v4672 = vadd.f32 0.0, %v4671
      %v4673 = vpop.f32.mrb[0].mxu0
      %v4674 = vpop.f32.mrb[0].mxu0
      %v4675 = vadd.f32 0.0, %v4674
      %v4676 = vpop.f32.mrb[0].mxu0
      %4677 = vmatprep.mubr.bf16.mxu0 0
      %4678 = vmatmul.mubr.bf16.gmra.mrb[0].mxu0 %v4612
      %v4679 = vpop.f32.mrb[0].mxu0
      %v4680 = vadd.f32 0.0, %v4679
      %v4681 = vpop.f32.mrb[0].mxu0
      %v4682 = vpop.f32.mrb[0].mxu0
      %v4683 = vadd.f32 0.0, %v4682
      %v4684 = vpop.f32.mrb[0].mxu0
      %4685 = vmatprep.mubr.bf16.mxu0 0
      %4686 = vmatmul.mubr.bf16.gmra.mrb[0].mxu0 %v4615
      %v4687 = vpop.f32.mrb[0].mxu0
      %v4688 = vadd.f32 0.0, %v4687
      %v4689 = vpop.f32.mrb[0].mxu0
      %v4690 = vpop.f32.mrb[0].mxu0
      %v4691 = vadd.f32 0.0, %v4690
      %v4692 = vpop.f32.mrb[0].mxu0
      %4693 = vmatprep.mubr.bf16.mxu0 0
      %4694 = vmatmul.mubr.bf16.gmra.mrb[0].mxu0 %v4618
      %v4695 = vpop.f32.mrb[0].mxu0
      %v4696 = vadd.f32 0.0, %v4695
      %v4697 = vpop.f32.mrb[0].mxu0
      %v4698 = vpop.f32.mrb[0].mxu0
      %v4699 = vadd.f32 0.0, %v4698
      %v4700 = vpop.f32.mrb[0].mxu0
      %4701 = vmatprep.mubr.bf16.mxu0 0
      %4702 = vmatmul.mubr.bf16.gmra.mrb[0].mxu0 %v4621
      %v4703 = vpop.f32.mrb[0].mxu0
      %v4704 = vadd.f32 0.0, %v4703
      %v4705 = vpop.f32.mrb[0].mxu0
      %v4706 = vpop.f32.mrb[0].mxu0
      %v4707 = vadd.f32 0.0, %v4706
      %v4708 = vpop.f32.mrb[0].mxu0
      %4709 = vmatprep.mubr.bf16.mxu0 0
      %4710 = vmatmul.mubr.bf16.gmra.mrb[0].mxu0 %v4624
      %v4711 = vpop.f32.mrb[0].mxu0
      %v4712 = vadd.f32 0.0, %v4711
      %v4713 = vpop.f32.mrb[0].mxu0
      %v4714 = vpop.f32.mrb[0].mxu0
      %v4715 = vadd.f32 0.0, %v4714
      %v4716 = vpop.f32.mrb[0].mxu0
      %4717 = vmatprep.mubr.bf16.mxu0 0
      %4718 = vmatmul.mubr.bf16.gmra.mrb[0].mxu0 %v4627
      %v4719 = vpop.f32.mrb[0].mxu0
      %v4720 = vadd.f32 0.0, %v4719
      %v4721 = vpop.f32.mrb[0].mxu0
      %v4722 = vpop.f32.mrb[0].mxu0
      %v4723 = vadd.f32 0.0, %v4722
      %v4724 = vpop.f32.mrb[0].mxu0
      %4725 = vdwg.mxu0
      %v4726 = vadd.f32 %v4292, %v4664
      %v4727 = vadd.f32 %v4293, %v4667
      %v4728 = vadd.f32 %v4294, %v4672
      %v4729 = vadd.f32 %v4295, %v4675
      %v4730 = vadd.f32 %v4296, %v4680
      %v4731 = vadd.f32 %v4297, %v4683
      %v4732 = vadd.f32 %v4298, %v4688
      %v4733 = vadd.f32 %v4299, %v4691
      %v4734 = vadd.f32 %v4300, %v4696
      %v4735 = vadd.f32 %v4301, %v4699
      %v4736 = vadd.f32 %v4302, %v4704
      %v4737 = vadd.f32 %v4303, %v4707
      %v4738 = vadd.f32 %v4304, %v4712
      %v4739 = vadd.f32 %v4305, %v4715
      %v4740 = vadd.f32 %v4306, %v4720
      %v4741 = vadd.f32 %v4307, %v4723
      %v4742 = vld [vmem:[%s3106] sm:$0xe]
      %v4743 = vld [vmem:[%s3106 + $0x8] sm:$0xe]
      %v4744 = vld [vmem:[%s3106 + $0x10] sm:$0xe]
      %v4745 = vld [vmem:[%s3106 + $0x18] sm:$0xe]
      %v4746 = vld [vmem:[%s3106 + $0x20] sm:$0xe]
      %v4747 = vld [vmem:[%s3106 + $0x28] sm:$0xe]
      %v4748 = vld [vmem:[%s3106 + $0x30] sm:$0xe]
      %v4749 = vld [vmem:[%s3106 + $0x38] sm:$0xe]
      %v4750 = vld [vmem:[%s3106 + $0x50] sm:$0xe]
      %v4751 = vld [vmem:[%s3106 + $0x58] sm:$0xe]
      %v4752 = vld [vmem:[%s3106 + $0x60] sm:$0xe]
      %v4753 = vld [vmem:[%s3106 + $0x68] sm:$0xe]
      %v4754 = vld [vmem:[%s3106 + $0x70] sm:$0xe]
      %v4755 = vld [vmem:[%s3106 + $0x78] sm:$0xe]
      %v4756 = vld [vmem:[%s3106 + $0x80] sm:$0xe]
      %v4757 = vld [vmem:[%s3106 + $0x88] sm:$0xe]
      %v4790 = vrot.slane %v4742, 5
      %v4791 = vrot.slane %v4790, 4
      %v4792 = vrot.slane %v4309, 5
      %v4793 = vsel %vm3855, %v4791, %v4792
      %v4794 = vrot.slane %v4743, 5
      %v4795 = vrot.slane %v4794, 4
      %v4796 = vrot.slane %v4311, 5
      %v4797 = vsel %vm3855, %v4795, %v4796
      %v4798 = vrot.slane %v4744, 5
      %v4799 = vrot.slane %v4798, 4
      %v4800 = vrot.slane %v4313, 5
      %v4801 = vsel %vm3855, %v4799, %v4800
      %v4802 = vrot.slane %v4745, 5
      %v4803 = vrot.slane %v4802, 4
      %v4804 = vrot.slane %v4315, 5
      %v4805 = vsel %vm3855, %v4803, %v4804
      %v4806 = vrot.slane %v4746, 5
      %v4807 = vrot.slane %v4806, 4
      %v4808 = vrot.slane %v4317, 5
      %v4809 = vsel %vm3855, %v4807, %v4808
      %v4810 = vrot.slane %v4747, 5
      %v4811 = vrot.slane %v4810, 4
      %v4812 = vrot.slane %v4319, 5
      %v4813 = vsel %vm3855, %v4811, %v4812
      %v4814 = vrot.slane %v4748, 5
      %v4815 = vrot.slane %v4814, 4
      %v4816 = vrot.slane %v4321, 5
      %v4817 = vsel %vm3855, %v4815, %v4816
      %v4818 = vrot.slane %v4749, 5
      %v4819 = vrot.slane %v4818, 4
      %v4820 = vrot.slane %v4323, 5
      %v4821 = vsel %vm3855, %v4819, %v4820
      %v4822 = vrot.slane %v4750, 5
      %v4823 = vrot.slane %v4822, 4
      %v4824 = vrot.slane %v4325, 5
      %v4825 = vsel %vm3855, %v4823, %v4824
      %v4826 = vrot.slane %v4751, 5
      %v4827 = vrot.slane %v4826, 4
      %v4828 = vrot.slane %v4327, 5
      %v4829 = vsel %vm3855, %v4827, %v4828
      %v4830 = vrot.slane %v4752, 5
      %v4831 = vrot.slane %v4830, 4
      %v4832 = vrot.slane %v4329, 5
      %v4833 = vsel %vm3855, %v4831, %v4832
      %v4834 = vrot.slane %v4753, 5
      %v4835 = vrot.slane %v4834, 4
      %v4836 = vrot.slane %v4331, 5
      %v4837 = vsel %vm3855, %v4835, %v4836
      %v4838 = vrot.slane %v4754, 5
      %v4839 = vrot.slane %v4838, 4
      %v4840 = vrot.slane %v4333, 5
      %v4841 = vsel %vm3855, %v4839, %v4840
      %v4842 = vrot.slane %v4755, 5
      %v4843 = vrot.slane %v4842, 4
      %v4844 = vrot.slane %v4335, 5
      %v4845 = vsel %vm3855, %v4843, %v4844
      %v4846 = vrot.slane %v4756, 5
      %v4847 = vrot.slane %v4846, 4
      %v4848 = vrot.slane %v4337, 5
      %v4849 = vsel %vm3855, %v4847, %v4848
      %v4850 = vrot.slane %v4757, 5
      %v4851 = vrot.slane %v4850, 4
      %v4852 = vrot.slane %v4339, 5
      %v4853 = vsel %vm3855, %v4851, %v4852
      %s4854 = scalar_lea.vmem %s327, 80
      %v4855 = vld [vmem:[%s4854] sm:$0xf]
      %v4856 = vld [vmem:[%s4854 + $0x4] sm:$0xf]
      %v4857 = vld [vmem:[%s4854 + $0x8] sm:$0xf]
      %v4858 = vld [vmem:[%s4854 + $0xc] sm:$0xf]
      %v4859 = vunpack.c.l.b16 %v4793
      %v4860 = vunpack.c.l.b16 %v4797
      %v4861 = vunpack.c.l.b16 %v4801
      %v4862 = vunpack.c.l.b16 %v4805
      %v4863 = vunpack.c.l.b16 %v4809
      %v4864 = vunpack.c.l.b16 %v4813
      %v4865 = vunpack.c.l.b16 %v4817
      %v4866 = vunpack.c.l.b16 %v4821
      %v4867 = vunpack.c.l.b16 %v4825
      %v4868 = vunpack.c.l.b16 %v4829
      %v4869 = vunpack.c.l.b16 %v4833
      %v4870 = vunpack.c.l.b16 %v4837
      %v4871 = vunpack.c.l.b16 %v4841
      %v4872 = vunpack.c.l.b16 %v4845
      %v4873 = vunpack.c.l.b16 %v4849
      %v4874 = vunpack.c.l.b16 %v4853
      %v4875 = vpack.c.b16 %v4860, %v4859
      %v4876 = vpack.c.b16 %v4862, %v4861
      %v4877 = vpack.c.b16 %v4864, %v4863
      %v4878 = vpack.c.b16 %v4866, %v4865
      %v4879 = vpack.c.b16 %v4868, %v4867
      %v4880 = vpack.c.b16 %v4870, %v4869
      %v4881 = vpack.c.b16 %v4872, %v4871
      %v4882 = vpack.c.b16 %v4874, %v4873
      %v4887 = vunpack.c.l.b16 %v4855
      %v4888 = vunpack.c.l.b16 %v4856
      %v4889 = vunpack.c.l.b16 %v4857
      %v4890 = vunpack.c.l.b16 %v4858
      %v4891 = vpack.c.b16 %v4888, %v4887
      %v4892 = vpack.c.b16 %v4890, %v4889
      %v4896 = vsel %vm3510, %v4875, 0
      %v4899 = vsel %vm3510, %v4876, 0
      %v4902 = vsel %vm3510, %v4877, 0
      %v4905 = vsel %vm3510, %v4878, 0
      %v4908 = vsel %vm3510, %v4879, 0
      %v4911 = vsel %vm3510, %v4880, 0
      %v4914 = vsel %vm3510, %v4881, 0
      %v4917 = vsel %vm3510, %v4882, 0
      %4919 = vmatprep.subr.bf16.mxu0 0
      %4920 = vmatpush1.bf16.msra.mxu0 %v4891
      %4921 = vmatprep.subr.bf16.mxu0 0
      %4922 = vmatpush1.bf16.msra.mxu0 %v4892
      %4923 = vmatprep.subr.bf16.mxu0 0
      %4924 = vmatpush1.bf16.msra.mxu0 0
      %4925 = vmatprep.subr.bf16.mxu0 0
      %4926 = vmatpush1.bf16.msra.mxu0 0
      %4927 = vmatprep.subr.bf16.mxu0 0
      %4928 = vmatpush1.bf16.msra.mxu0 0
      %4929 = vmatprep.subr.bf16.mxu0 0
      %4930 = vmatpush1.bf16.msra.mxu0 0
      %4931 = vmatprep.subr.bf16.mxu0 0
      %4932 = vmatpush1.bf16.msra.mxu0 0
      %4933 = vmatprep.subr.bf16.mxu0 0
      %4934 = vmatpush1.bf16.msra.mxu0 0
      %4935 = vmatprep.subr.bf16.mxu0 0
      %4936 = vmatpush1.bf16.msra.mxu0 0
      %4937 = vmatprep.subr.bf16.mxu0 0
      %4938 = vmatpush1.bf16.msra.mxu0 0
      %4939 = vmatprep.subr.bf16.mxu0 0
      %4940 = vmatpush1.bf16.msra.mxu0 0
      %4941 = vmatprep.subr.bf16.mxu0 0
      %4942 = vmatpush1.bf16.msra.mxu0 0
      %4943 = vmatprep.subr.bf16.mxu0 0
      %4944 = vmatpush1.bf16.msra.mxu0 0
      %4945 = vmatprep.subr.bf16.mxu0 0
      %4946 = vmatpush1.bf16.msra.mxu0 0
      %4947 = vmatprep.subr.bf16.mxu0 0
      %4948 = vmatpush1.bf16.msra.mxu0 0
      %4949 = vmatprep.subr.bf16.mxu0 0
      %4950 = vmatpush1.bf16.msra.mxu0 0
      %4951 = vmatprep.mubr.bf16.mxu0 0
      %4952 = vmatmul.mubr.bf16.gmra.mrb[0].mxu0 %v4896
      %v4953 = vpop.f32.mrb[0].mxu0
      %v4954 = vadd.f32 0.0, %v4953
      %v4955 = vpop.f32.mrb[0].mxu0
      %v4956 = vpop.f32.mrb[0].mxu0
      %v4957 = vadd.f32 0.0, %v4956
      %v4958 = vpop.f32.mrb[0].mxu0
      %4959 = vmatprep.mubr.bf16.mxu0 0
      %4960 = vmatmul.mubr.bf16.gmra.mrb[0].mxu0 %v4899
      %v4961 = vpop.f32.mrb[0].mxu0
      %v4962 = vadd.f32 0.0, %v4961
      %v4963 = vpop.f32.mrb[0].mxu0
      %v4964 = vpop.f32.mrb[0].mxu0
      %v4965 = vadd.f32 0.0, %v4964
      %v4966 = vpop.f32.mrb[0].mxu0
      %4967 = vmatprep.mubr.bf16.mxu0 0
      %4968 = vmatmul.mubr.bf16.gmra.mrb[0].mxu0 %v4902
      %v4969 = vpop.f32.mrb[0].mxu0
      %v4970 = vadd.f32 0.0, %v4969
      %v4971 = vpop.f32.mrb[0].mxu0
      %v4972 = vpop.f32.mrb[0].mxu0
      %v4973 = vadd.f32 0.0, %v4972
      %v4974 = vpop.f32.mrb[0].mxu0
      %4975 = vmatprep.mubr.bf16.mxu0 0
      %4976 = vmatmul.mubr.bf16.gmra.mrb[0].mxu0 %v4905
      %v4977 = vpop.f32.mrb[0].mxu0
      %v4978 = vadd.f32 0.0, %v4977
      %v4979 = vpop.f32.mrb[0].mxu0
      %v4980 = vpop.f32.mrb[0].mxu0
      %v4981 = vadd.f32 0.0, %v4980
      %v4982 = vpop.f32.mrb[0].mxu0
      %4983 = vmatprep.mubr.bf16.mxu0 0
      %4984 = vmatmul.mubr.bf16.gmra.mrb[0].mxu0 %v4908
      %v4985 = vpop.f32.mrb[0].mxu0
      %v4986 = vadd.f32 0.0, %v4985
      %v4987 = vpop.f32.mrb[0].mxu0
      %v4988 = vpop.f32.mrb[0].mxu0
      %v4989 = vadd.f32 0.0, %v4988
      %v4990 = vpop.f32.mrb[0].mxu0
      %4991 = vmatprep.mubr.bf16.mxu0 0
      %4992 = vmatmul.mubr.bf16.gmra.mrb[0].mxu0 %v4911
      %v4993 = vpop.f32.mrb[0].mxu0
      %v4994 = vadd.f32 0.0, %v4993
      %v4995 = vpop.f32.mrb[0].mxu0
      %v4996 = vpop.f32.mrb[0].mxu0
      %v4997 = vadd.f32 0.0, %v4996
      %v4998 = vpop.f32.mrb[0].mxu0
      %4999 = vmatprep.mubr.bf16.mxu0 0
      %5000 = vmatmul.mubr.bf16.gmra.mrb[0].mxu0 %v4914
      %v5001 = vpop.f32.mrb[0].mxu0
      %v5002 = vadd.f32 0.0, %v5001
      %v5003 = vpop.f32.mrb[0].mxu0
      %v5004 = vpop.f32.mrb[0].mxu0
      %v5005 = vadd.f32 0.0, %v5004
      %v5006 = vpop.f32.mrb[0].mxu0
      %5007 = vmatprep.mubr.bf16.mxu0 0
      %5008 = vmatmul.mubr.bf16.gmra.mrb[0].mxu0 %v4917
      %v5009 = vpop.f32.mrb[0].mxu0
      %v5010 = vadd.f32 0.0, %v5009
      %v5011 = vpop.f32.mrb[0].mxu0
      %v5012 = vpop.f32.mrb[0].mxu0
      %v5013 = vadd.f32 0.0, %v5012
      %v5014 = vpop.f32.mrb[0].mxu0
      %5015 = vdwg.mxu0
      %v5016 = vadd.f32 %v4726, %v4954
      %v5017 = vadd.f32 %v4727, %v4957
      %v5018 = vadd.f32 %v4728, %v4962
      %v5019 = vadd.f32 %v4729, %v4965
      %v5020 = vadd.f32 %v4730, %v4970
      %v5021 = vadd.f32 %v4731, %v4973
      %v5022 = vadd.f32 %v4732, %v4978
      %v5023 = vadd.f32 %v4733, %v4981
      %v5024 = vadd.f32 %v4734, %v4986
      %v5025 = vadd.f32 %v4735, %v4989
      %v5026 = vadd.f32 %v4736, %v4994
      %v5027 = vadd.f32 %v4737, %v4997
      %v5028 = vadd.f32 %v4738, %v5002
      %v5029 = vadd.f32 %v4739, %v5005
      %v5030 = vadd.f32 %v4740, %v5010
      %v5031 = vadd.f32 %v4741, %v5013
      %s5032 = scalar_lea.vmem [#allocation2], 16
      %v5033 = vld [vmem:[%s5032] sm:$0xf]
      %v5034 = vld [vmem:[%s5032 + $0x8] sm:$0xf]
      %v5035 = vld [vmem:[%s5032 + $0x10] sm:$0xf]
      %v5036 = vld [vmem:[%s5032 + $0x18] sm:$0xf]
      %v5037 = vld [vmem:[%s5032 + $0x20] sm:$0xf]
      %v5038 = vld [vmem:[%s5032 + $0x28] sm:$0xf]
      %v5039 = vld [vmem:[%s5032 + $0x30] sm:$0xf]
      %v5040 = vld [vmem:[%s5032 + $0x38] sm:$0xf]
      %v5041 = vld [vmem:[%s5032 + $0x50] sm:$0xf]
      %v5042 = vld [vmem:[%s5032 + $0x58] sm:$0xf]
      %v5043 = vld [vmem:[%s5032 + $0x60] sm:$0xf]
      %v5044 = vld [vmem:[%s5032 + $0x68] sm:$0xf]
      %v5045 = vld [vmem:[%s5032 + $0x70] sm:$0xf]
      %v5046 = vld [vmem:[%s5032 + $0x78] sm:$0xf]
      %v5047 = vld [vmem:[%s5032 + $0x80] sm:$0xf]
      %v5048 = vld [vmem:[%s5032 + $0x88] sm:$0xf]
      %s5049 = scalar_lea.vmem %s327, 96
      %v5050 = vld [vmem:[%s5049] sm:$0xf]
      %v5051 = vld [vmem:[%s5049 + $0x4] sm:$0xf]
      %v5052 = vld [vmem:[%s5049 + $0x8] sm:$0xf]
      %v5053 = vld [vmem:[%s5049 + $0xc] sm:$0xf]
      %v5070 = vunpack.c.l.b16 %v5033
      %v5071 = vunpack.c.l.b16 %v5034
      %v5072 = vunpack.c.l.b16 %v5035
      %v5073 = vunpack.c.l.b16 %v5036
      %v5074 = vunpack.c.l.b16 %v5037
      %v5075 = vunpack.c.l.b16 %v5038
      %v5076 = vunpack.c.l.b16 %v5039
      %v5077 = vunpack.c.l.b16 %v5040
      %v5078 = vunpack.c.l.b16 %v5041
      %v5079 = vunpack.c.l.b16 %v5042
      %v5080 = vunpack.c.l.b16 %v5043
      %v5081 = vunpack.c.l.b16 %v5044
      %v5082 = vunpack.c.l.b16 %v5045
      %v5083 = vunpack.c.l.b16 %v5046
      %v5084 = vunpack.c.l.b16 %v5047
      %v5085 = vunpack.c.l.b16 %v5048
      %v5086 = vpack.c.b16 %v5071, %v5070
      %v5087 = vpack.c.b16 %v5073, %v5072
      %v5088 = vpack.c.b16 %v5075, %v5074
      %v5089 = vpack.c.b16 %v5077, %v5076
      %v5090 = vpack.c.b16 %v5079, %v5078
      %v5091 = vpack.c.b16 %v5081, %v5080
      %v5092 = vpack.c.b16 %v5083, %v5082
      %v5093 = vpack.c.b16 %v5085, %v5084
      %v5098 = vunpack.c.l.b16 %v5050
      %v5099 = vunpack.c.l.b16 %v5051
      %v5100 = vunpack.c.l.b16 %v5052
      %v5101 = vunpack.c.l.b16 %v5053
      %v5102 = vpack.c.b16 %v5099, %v5098
      %v5103 = vpack.c.b16 %v5101, %v5100
      %v5107 = vsel %vm3510, %v5086, 0
      %v5110 = vsel %vm3510, %v5087, 0
      %v5113 = vsel %vm3510, %v5088, 0
      %v5116 = vsel %vm3510, %v5089, 0
      %v5119 = vsel %vm3510, %v5090, 0
      %v5122 = vsel %vm3510, %v5091, 0
      %v5125 = vsel %vm3510, %v5092, 0
      %v5128 = vsel %vm3510, %v5093, 0
      %5130 = vmatprep.subr.bf16.mxu0 0
      %5131 = vmatpush1.bf16.msra.mxu0 %v5102
      %5132 = vmatprep.subr.bf16.mxu0 0
      %5133 = vmatpush1.bf16.msra.mxu0 %v5103
      %5134 = vmatprep.subr.bf16.mxu0 0
      %5135 = vmatpush1.bf16.msra.mxu0 0
      %5136 = vmatprep.subr.bf16.mxu0 0
      %5137 = vmatpush1.bf16.msra.mxu0 0
      %5138 = vmatprep.subr.bf16.mxu0 0
      %5139 = vmatpush1.bf16.msra.mxu0 0
      %5140 = vmatprep.subr.bf16.mxu0 0
      %5141 = vmatpush1.bf16.msra.mxu0 0
      %5142 = vmatprep.subr.bf16.mxu0 0
      %5143 = vmatpush1.bf16.msra.mxu0 0
      %5144 = vmatprep.subr.bf16.mxu0 0
      %5145 = vmatpush1.bf16.msra.mxu0 0
      %5146 = vmatprep.subr.bf16.mxu0 0
      %5147 = vmatpush1.bf16.msra.mxu0 0
      %5148 = vmatprep.subr.bf16.mxu0 0
      %5149 = vmatpush1.bf16.msra.mxu0 0
      %5150 = vmatprep.subr.bf16.mxu0 0
      %5151 = vmatpush1.bf16.msra.mxu0 0
      %5152 = vmatprep.subr.bf16.mxu0 0
      %5153 = vmatpush1.bf16.msra.mxu0 0
      %5154 = vmatprep.subr.bf16.mxu0 0
      %5155 = vmatpush1.bf16.msra.mxu0 0
      %5156 = vmatprep.subr.bf16.mxu0 0
      %5157 = vmatpush1.bf16.msra.mxu0 0
      %5158 = vmatprep.subr.bf16.mxu0 0
      %5159 = vmatpush1.bf16.msra.mxu0 0
      %5160 = vmatprep.subr.bf16.mxu0 0
      %5161 = vmatpush1.bf16.msra.mxu0 0
      %5162 = vmatprep.mubr.bf16.mxu0 0
      %5163 = vmatmul.mubr.bf16.gmra.mrb[0].mxu0 %v5107
      %v5164 = vpop.f32.mrb[0].mxu0
      %v5165 = vadd.f32 0.0, %v5164
      %v5166 = vpop.f32.mrb[0].mxu0
      %v5167 = vpop.f32.mrb[0].mxu0
      %v5168 = vadd.f32 0.0, %v5167
      %v5169 = vpop.f32.mrb[0].mxu0
      %5170 = vmatprep.mubr.bf16.mxu0 0
      %5171 = vmatmul.mubr.bf16.gmra.mrb[0].mxu0 %v5110
      %v5172 = vpop.f32.mrb[0].mxu0
      %v5173 = vadd.f32 0.0, %v5172
      %v5174 = vpop.f32.mrb[0].mxu0
      %v5175 = vpop.f32.mrb[0].mxu0
      %v5176 = vadd.f32 0.0, %v5175
      %v5177 = vpop.f32.mrb[0].mxu0
      %5178 = vmatprep.mubr.bf16.mxu0 0
      %5179 = vmatmul.mubr.bf16.gmra.mrb[0].mxu0 %v5113
      %v5180 = vpop.f32.mrb[0].mxu0
      %v5181 = vadd.f32 0.0, %v5180
      %v5182 = vpop.f32.mrb[0].mxu0
      %v5183 = vpop.f32.mrb[0].mxu0
      %v5184 = vadd.f32 0.0, %v5183
      %v5185 = vpop.f32.mrb[0].mxu0
      %5186 = vmatprep.mubr.bf16.mxu0 0
      %5187 = vmatmul.mubr.bf16.gmra.mrb[0].mxu0 %v5116
      %v5188 = vpop.f32.mrb[0].mxu0
      %v5189 = vadd.f32 0.0, %v5188
      %v5190 = vpop.f32.mrb[0].mxu0
      %v5191 = vpop.f32.mrb[0].mxu0
      %v5192 = vadd.f32 0.0, %v5191
      %v5193 = vpop.f32.mrb[0].mxu0
      %5194 = vmatprep.mubr.bf16.mxu0 0
      %5195 = vmatmul.mubr.bf16.gmra.mrb[0].mxu0 %v5119
      %v5196 = vpop.f32.mrb[0].mxu0
      %v5197 = vadd.f32 0.0, %v5196
      %v5198 = vpop.f32.mrb[0].mxu0
      %v5199 = vpop.f32.mrb[0].mxu0
      %v5200 = vadd.f32 0.0, %v5199
      %v5201 = vpop.f32.mrb[0].mxu0
      %5202 = vmatprep.mubr.bf16.mxu0 0
      %5203 = vmatmul.mubr.bf16.gmra.mrb[0].mxu0 %v5122
      %v5204 = vpop.f32.mrb[0].mxu0
      %v5205 = vadd.f32 0.0, %v5204
      %v5206 = vpop.f32.mrb[0].mxu0
      %v5207 = vpop.f32.mrb[0].mxu0
      %v5208 = vadd.f32 0.0, %v5207
      %v5209 = vpop.f32.mrb[0].mxu0
      %5210 = vmatprep.mubr.bf16.mxu0 0
      %5211 = vmatmul.mubr.bf16.gmra.mrb[0].mxu0 %v5125
      %v5212 = vpop.f32.mrb[0].mxu0
      %v5213 = vadd.f32 0.0, %v5212
      %v5214 = vpop.f32.mrb[0].mxu0
      %v5215 = vpop.f32.mrb[0].mxu0
      %v5216 = vadd.f32 0.0, %v5215
      %v5217 = vpop.f32.mrb[0].mxu0
      %5218 = vmatprep.mubr.bf16.mxu0 0
      %5219 = vmatmul.mubr.bf16.gmra.mrb[0].mxu0 %v5128
      %v5220 = vpop.f32.mrb[0].mxu0
      %v5221 = vadd.f32 0.0, %v5220
      %v5222 = vpop.f32.mrb[0].mxu0
      %v5223 = vpop.f32.mrb[0].mxu0
      %v5224 = vadd.f32 0.0, %v5223
      %v5225 = vpop.f32.mrb[0].mxu0
      %5226 = vdwg.mxu0
      %v5227 = vadd.f32 %v5016, %v5165
      %v5228 = vadd.f32 %v5017, %v5168
      %v5229 = vadd.f32 %v5018, %v5173
      %v5230 = vadd.f32 %v5019, %v5176
      %v5231 = vadd.f32 %v5020, %v5181
      %v5232 = vadd.f32 %v5021, %v5184
      %v5233 = vadd.f32 %v5022, %v5189
      %v5234 = vadd.f32 %v5023, %v5192
      %v5235 = vadd.f32 %v5024, %v5197
      %v5236 = vadd.f32 %v5025, %v5200
      %v5237 = vadd.f32 %v5026, %v5205
      %v5238 = vadd.f32 %v5027, %v5208
      %v5239 = vadd.f32 %v5028, %v5213
      %v5240 = vadd.f32 %v5029, %v5216
      %v5241 = vadd.f32 %v5030, %v5221
      %v5242 = vadd.f32 %v5031, %v5224
      %v5243 = vld [vmem:[%s5032] sm:$0xf]
      %v5244 = vld [vmem:[%s5032 + $0x4] sm:$0x1]
      %v5245 = vld [vmem:[%s5032 + $0x8] sm:$0xf]
      %v5246 = vld [vmem:[%s5032 + $0xc] sm:$0x1]
      %v5247 = vld [vmem:[%s5032 + $0x10] sm:$0xf]
      %v5248 = vld [vmem:[%s5032 + $0x14] sm:$0x1]
      %v5249 = vld [vmem:[%s5032 + $0x18] sm:$0xf]
      %v5250 = vld [vmem:[%s5032 + $0x1c] sm:$0x1]
      %v5251 = vld [vmem:[%s5032 + $0x20] sm:$0xf]
      %v5252 = vld [vmem:[%s5032 + $0x24] sm:$0x1]
      %v5253 = vld [vmem:[%s5032 + $0x28] sm:$0xf]
      %v5254 = vld [vmem:[%s5032 + $0x2c] sm:$0x1]
      %v5255 = vld [vmem:[%s5032 + $0x30] sm:$0xf]
      %v5256 = vld [vmem:[%s5032 + $0x34] sm:$0x1]
      %v5257 = vld [vmem:[%s5032 + $0x38] sm:$0xf]
      %v5258 = vld [vmem:[%s5032 + $0x3c] sm:$0x1]
      %v5259 = vld [vmem:[%s5032 + $0x50] sm:$0xf]
      %v5260 = vld [vmem:[%s5032 + $0x54] sm:$0x1]
      %v5261 = vld [vmem:[%s5032 + $0x58] sm:$0xf]
      %v5262 = vld [vmem:[%s5032 + $0x5c] sm:$0x1]
      %v5263 = vld [vmem:[%s5032 + $0x60] sm:$0xf]
      %v5264 = vld [vmem:[%s5032 + $0x64] sm:$0x1]
      %v5265 = vld [vmem:[%s5032 + $0x68] sm:$0xf]
      %v5266 = vld [vmem:[%s5032 + $0x6c] sm:$0x1]
      %v5267 = vld [vmem:[%s5032 + $0x70] sm:$0xf]
      %v5268 = vld [vmem:[%s5032 + $0x74] sm:$0x1]
      %v5269 = vld [vmem:[%s5032 + $0x78] sm:$0xf]
      %v5270 = vld [vmem:[%s5032 + $0x7c] sm:$0x1]
      %v5271 = vld [vmem:[%s5032 + $0x80] sm:$0xf]
      %v5272 = vld [vmem:[%s5032 + $0x84] sm:$0x1]
      %v5273 = vld [vmem:[%s5032 + $0x88] sm:$0xf]
      %v5274 = vld [vmem:[%s5032 + $0x8c] sm:$0x1]
      %v5276 = vshrl.u32 %v5243, 16
      %v5278 = vrot.slane %v5276, 4
      %v5279 = vshll.u32 %v5243, 16
      %v5281 = vrot.slane %v5279, 5
      %v5282 = vor.u32 %v5278, %v5281
      %v5283 = vrot.slane %v5282, 4
      %v5285 = vshll.u32 %v5244, 16
      %v5287 = vrot.slane %v5285, 5
      %v5288 = vsel %vm742, %v5283, %v5287
      %v5290 = vshrl.u32 %v5245, 16
      %v5292 = vrot.slane %v5290, 4
      %v5293 = vshll.u32 %v5245, 16
      %v5295 = vrot.slane %v5293, 5
      %v5296 = vor.u32 %v5292, %v5295
      %v5297 = vrot.slane %v5296, 4
      %v5299 = vshll.u32 %v5246, 16
      %v5301 = vrot.slane %v5299, 5
      %v5302 = vsel %vm742, %v5297, %v5301
      %v5304 = vshrl.u32 %v5247, 16
      %v5306 = vrot.slane %v5304, 4
      %v5307 = vshll.u32 %v5247, 16
      %v5309 = vrot.slane %v5307, 5
      %v5310 = vor.u32 %v5306, %v5309
      %v5311 = vrot.slane %v5310, 4
      %v5313 = vshll.u32 %v5248, 16
      %v5315 = vrot.slane %v5313, 5
      %v5316 = vsel %vm742, %v5311, %v5315
      %v5318 = vshrl.u32 %v5249, 16
      %v5320 = vrot.slane %v5318, 4
      %v5321 = vshll.u32 %v5249, 16
      %v5323 = vrot.slane %v5321, 5
      %v5324 = vor.u32 %v5320, %v5323
      %v5325 = vrot.slane %v5324, 4
      %v5327 = vshll.u32 %v5250, 16
      %v5329 = vrot.slane %v5327, 5
      %v5330 = vsel %vm742, %v5325, %v5329
      %v5332 = vshrl.u32 %v5251, 16
      %v5334 = vrot.slane %v5332, 4
      %v5335 = vshll.u32 %v5251, 16
      %v5337 = vrot.slane %v5335, 5
      %v5338 = vor.u32 %v5334, %v5337
      %v5339 = vrot.slane %v5338, 4
      %v5341 = vshll.u32 %v5252, 16
      %v5343 = vrot.slane %v5341, 5
      %v5344 = vsel %vm742, %v5339, %v5343
      %v5346 = vshrl.u32 %v5253, 16
      %v5348 = vrot.slane %v5346, 4
      %v5349 = vshll.u32 %v5253, 16
      %v5351 = vrot.slane %v5349, 5
      %v5352 = vor.u32 %v5348, %v5351
      %v5353 = vrot.slane %v5352, 4
      %v5355 = vshll.u32 %v5254, 16
      %v5357 = vrot.slane %v5355, 5
      %v5358 = vsel %vm742, %v5353, %v5357
      %v5360 = vshrl.u32 %v5255, 16
      %v5362 = vrot.slane %v5360, 4
      %v5363 = vshll.u32 %v5255, 16
      %v5365 = vrot.slane %v5363, 5
      %v5366 = vor.u32 %v5362, %v5365
      %v5367 = vrot.slane %v5366, 4
      %v5369 = vshll.u32 %v5256, 16
      %v5371 = vrot.slane %v5369, 5
      %v5372 = vsel %vm742, %v5367, %v5371
      %v5374 = vshrl.u32 %v5257, 16
      %v5376 = vrot.slane %v5374, 4
      %v5377 = vshll.u32 %v5257, 16
      %v5379 = vrot.slane %v5377, 5
      %v5380 = vor.u32 %v5376, %v5379
      %v5381 = vrot.slane %v5380, 4
      %v5383 = vshll.u32 %v5258, 16
      %v5385 = vrot.slane %v5383, 5
      %v5386 = vsel %vm742, %v5381, %v5385
      %v5388 = vshrl.u32 %v5259, 16
      %v5390 = vrot.slane %v5388, 4
      %v5391 = vshll.u32 %v5259, 16
      %v5393 = vrot.slane %v5391, 5
      %v5394 = vor.u32 %v5390, %v5393
      %v5395 = vrot.slane %v5394, 4
      %v5397 = vshll.u32 %v5260, 16
      %v5399 = vrot.slane %v5397, 5
      %v5400 = vsel %vm742, %v5395, %v5399
      %v5402 = vshrl.u32 %v5261, 16
      %v5404 = vrot.slane %v5402, 4
      %v5405 = vshll.u32 %v5261, 16
      %v5407 = vrot.slane %v5405, 5
      %v5408 = vor.u32 %v5404, %v5407
      %v5409 = vrot.slane %v5408, 4
      %v5411 = vshll.u32 %v5262, 16
      %v5413 = vrot.slane %v5411, 5
      %v5414 = vsel %vm742, %v5409, %v5413
      %v5416 = vshrl.u32 %v5263, 16
      %v5418 = vrot.slane %v5416, 4
      %v5419 = vshll.u32 %v5263, 16
      %v5421 = vrot.slane %v5419, 5
      %v5422 = vor.u32 %v5418, %v5421
      %v5423 = vrot.slane %v5422, 4
      %v5425 = vshll.u32 %v5264, 16
      %v5427 = vrot.slane %v5425, 5
      %v5428 = vsel %vm742, %v5423, %v5427
      %v5430 = vshrl.u32 %v5265, 16
      %v5432 = vrot.slane %v5430, 4
      %v5433 = vshll.u32 %v5265, 16
      %v5435 = vrot.slane %v5433, 5
      %v5436 = vor.u32 %v5432, %v5435
      %v5437 = vrot.slane %v5436, 4
      %v5439 = vshll.u32 %v5266, 16
      %v5441 = vrot.slane %v5439, 5
      %v5442 = vsel %vm742, %v5437, %v5441
      %v5444 = vshrl.u32 %v5267, 16
      %v5446 = vrot.slane %v5444, 4
      %v5447 = vshll.u32 %v5267, 16
      %v5449 = vrot.slane %v5447, 5
      %v5450 = vor.u32 %v5446, %v5449
      %v5451 = vrot.slane %v5450, 4
      %v5453 = vshll.u32 %v5268, 16
      %v5455 = vrot.slane %v5453, 5
      %v5456 = vsel %vm742, %v5451, %v5455
      %v5458 = vshrl.u32 %v5269, 16
      %v5460 = vrot.slane %v5458, 4
      %v5461 = vshll.u32 %v5269, 16
      %v5463 = vrot.slane %v5461, 5
      %v5464 = vor.u32 %v5460, %v5463
      %v5465 = vrot.slane %v5464, 4
      %v5467 = vshll.u32 %v5270, 16
      %v5469 = vrot.slane %v5467, 5
      %v5470 = vsel %vm742, %v5465, %v5469
      %v5472 = vshrl.u32 %v5271, 16
      %v5474 = vrot.slane %v5472, 4
      %v5475 = vshll.u32 %v5271, 16
      %v5477 = vrot.slane %v5475, 5
      %v5478 = vor.u32 %v5474, %v5477
      %v5479 = vrot.slane %v5478, 4
      %v5481 = vshll.u32 %v5272, 16
      %v5483 = vrot.slane %v5481, 5
      %v5484 = vsel %vm742, %v5479, %v5483
      %v5486 = vshrl.u32 %v5273, 16
      %v5488 = vrot.slane %v5486, 4
      %v5489 = vshll.u32 %v5273, 16
      %v5491 = vrot.slane %v5489, 5
      %v5492 = vor.u32 %v5488, %v5491
      %v5493 = vrot.slane %v5492, 4
      %v5495 = vshll.u32 %v5274, 16
      %v5497 = vrot.slane %v5495, 5
      %v5498 = vsel %vm742, %v5493, %v5497
      %s5499 = scalar_lea.vmem %s327, 112
      %v5500 = vld [vmem:[%s5499] sm:$0xf]
      %v5501 = vld [vmem:[%s5499 + $0x4] sm:$0xf]
      %v5502 = vld [vmem:[%s5499 + $0x8] sm:$0xf]
      %v5503 = vld [vmem:[%s5499 + $0xc] sm:$0xf]
      %v5504 = vunpack.c.l.b16 %v5288
      %v5505 = vunpack.c.l.b16 %v5302
      %v5506 = vunpack.c.l.b16 %v5316
      %v5507 = vunpack.c.l.b16 %v5330
      %v5508 = vunpack.c.l.b16 %v5344
      %v5509 = vunpack.c.l.b16 %v5358
      %v5510 = vunpack.c.l.b16 %v5372
      %v5511 = vunpack.c.l.b16 %v5386
      %v5512 = vunpack.c.l.b16 %v5400
      %v5513 = vunpack.c.l.b16 %v5414
      %v5514 = vunpack.c.l.b16 %v5428
      %v5515 = vunpack.c.l.b16 %v5442
      %v5516 = vunpack.c.l.b16 %v5456
      %v5517 = vunpack.c.l.b16 %v5470
      %v5518 = vunpack.c.l.b16 %v5484
      %v5519 = vunpack.c.l.b16 %v5498
      %v5520 = vpack.c.b16 %v5505, %v5504
      %v5521 = vpack.c.b16 %v5507, %v5506
      %v5522 = vpack.c.b16 %v5509, %v5508
      %v5523 = vpack.c.b16 %v5511, %v5510
      %v5524 = vpack.c.b16 %v5513, %v5512
      %v5525 = vpack.c.b16 %v5515, %v5514
      %v5526 = vpack.c.b16 %v5517, %v5516
      %v5527 = vpack.c.b16 %v5519, %v5518
      %v5532 = vunpack.c.l.b16 %v5500
      %v5533 = vunpack.c.l.b16 %v5501
      %v5534 = vunpack.c.l.b16 %v5502
      %v5535 = vunpack.c.l.b16 %v5503
      %v5536 = vpack.c.b16 %v5533, %v5532
      %v5537 = vpack.c.b16 %v5535, %v5534
      %v5541 = vsel %vm3510, %v5520, 0
      %v5544 = vsel %vm3510, %v5521, 0
      %v5547 = vsel %vm3510, %v5522, 0
      %v5550 = vsel %vm3510, %v5523, 0
      %v5553 = vsel %vm3510, %v5524, 0
      %v5556 = vsel %vm3510, %v5525, 0
      %v5559 = vsel %vm3510, %v5526, 0
      %v5562 = vsel %vm3510, %v5527, 0
      %5564 = vmatprep.subr.bf16.mxu0 0
      %5565 = vmatpush1.bf16.msra.mxu0 %v5536
      %5566 = vmatprep.subr.bf16.mxu0 0
      %5567 = vmatpush1.bf16.msra.mxu0 %v5537
      %5568 = vmatprep.subr.bf16.mxu0 0
      %5569 = vmatpush1.bf16.msra.mxu0 0
      %5570 = vmatprep.subr.bf16.mxu0 0
      %5571 = vmatpush1.bf16.msra.mxu0 0
      %5572 = vmatprep.subr.bf16.mxu0 0
      %5573 = vmatpush1.bf16.msra.mxu0 0
      %5574 = vmatprep.subr.bf16.mxu0 0
      %5575 = vmatpush1.bf16.msra.mxu0 0
      %5576 = vmatprep.subr.bf16.mxu0 0
      %5577 = vmatpush1.bf16.msra.mxu0 0
      %5578 = vmatprep.subr.bf16.mxu0 0
      %5579 = vmatpush1.bf16.msra.mxu0 0
      %5580 = vmatprep.subr.bf16.mxu0 0
      %5581 = vmatpush1.bf16.msra.mxu0 0
      %5582 = vmatprep.subr.bf16.mxu0 0
      %5583 = vmatpush1.bf16.msra.mxu0 0
      %5584 = vmatprep.subr.bf16.mxu0 0
      %5585 = vmatpush1.bf16.msra.mxu0 0
      %5586 = vmatprep.subr.bf16.mxu0 0
      %5587 = vmatpush1.bf16.msra.mxu0 0
      %5588 = vmatprep.subr.bf16.mxu0 0
      %5589 = vmatpush1.bf16.msra.mxu0 0
      %5590 = vmatprep.subr.bf16.mxu0 0
      %5591 = vmatpush1.bf16.msra.mxu0 0
      %5592 = vmatprep.subr.bf16.mxu0 0
      %5593 = vmatpush1.bf16.msra.mxu0 0
      %5594 = vmatprep.subr.bf16.mxu0 0
      %5595 = vmatpush1.bf16.msra.mxu0 0
      %5596 = vmatprep.mubr.bf16.mxu0 0
      %5597 = vmatmul.mubr.bf16.gmra.mrb[0].mxu0 %v5541
      %v5598 = vpop.f32.mrb[0].mxu0
      %v5599 = vadd.f32 0.0, %v5598
      %v5600 = vpop.f32.mrb[0].mxu0
      %v5601 = vpop.f32.mrb[0].mxu0
      %v5602 = vadd.f32 0.0, %v5601
      %v5603 = vpop.f32.mrb[0].mxu0
      %5604 = vmatprep.mubr.bf16.mxu0 0
      %5605 = vmatmul.mubr.bf16.gmra.mrb[0].mxu0 %v5544
      %v5606 = vpop.f32.mrb[0].mxu0
      %v5607 = vadd.f32 0.0, %v5606
      %v5608 = vpop.f32.mrb[0].mxu0
      %v5609 = vpop.f32.mrb[0].mxu0
      %v5610 = vadd.f32 0.0, %v5609
      %v5611 = vpop.f32.mrb[0].mxu0
      %5612 = vmatprep.mubr.bf16.mxu0 0
      %5613 = vmatmul.mubr.bf16.gmra.mrb[0].mxu0 %v5547
      %v5614 = vpop.f32.mrb[0].mxu0
      %v5615 = vadd.f32 0.0, %v5614
      %v5616 = vpop.f32.mrb[0].mxu0
      %v5617 = vpop.f32.mrb[0].mxu0
      %v5618 = vadd.f32 0.0, %v5617
      %v5619 = vpop.f32.mrb[0].mxu0
      %5620 = vmatprep.mubr.bf16.mxu0 0
      %5621 = vmatmul.mubr.bf16.gmra.mrb[0].mxu0 %v5550
      %v5622 = vpop.f32.mrb[0].mxu0
      %v5623 = vadd.f32 0.0, %v5622
      %v5624 = vpop.f32.mrb[0].mxu0
      %v5625 = vpop.f32.mrb[0].mxu0
      %v5626 = vadd.f32 0.0, %v5625
      %v5627 = vpop.f32.mrb[0].mxu0
      %5628 = vmatprep.mubr.bf16.mxu0 0
      %5629 = vmatmul.mubr.bf16.gmra.mrb[0].mxu0 %v5553
      %v5630 = vpop.f32.mrb[0].mxu0
      %v5631 = vadd.f32 0.0, %v5630
      %v5632 = vpop.f32.mrb[0].mxu0
      %v5633 = vpop.f32.mrb[0].mxu0
      %v5634 = vadd.f32 0.0, %v5633
      %v5635 = vpop.f32.mrb[0].mxu0
      %5636 = vmatprep.mubr.bf16.mxu0 0
      %5637 = vmatmul.mubr.bf16.gmra.mrb[0].mxu0 %v5556
      %v5638 = vpop.f32.mrb[0].mxu0
      %v5639 = vadd.f32 0.0, %v5638
      %v5640 = vpop.f32.mrb[0].mxu0
      %v5641 = vpop.f32.mrb[0].mxu0
      %v5642 = vadd.f32 0.0, %v5641
      %v5643 = vpop.f32.mrb[0].mxu0
      %5644 = vmatprep.mubr.bf16.mxu0 0
      %5645 = vmatmul.mubr.bf16.gmra.mrb[0].mxu0 %v5559
      %v5646 = vpop.f32.mrb[0].mxu0
      %v5647 = vadd.f32 0.0, %v5646
      %v5648 = vpop.f32.mrb[0].mxu0
      %v5649 = vpop.f32.mrb[0].mxu0
      %v5650 = vadd.f32 0.0, %v5649
      %v5651 = vpop.f32.mrb[0].mxu0
      %5652 = vmatprep.mubr.bf16.mxu0 0
      %5653 = vmatmul.mubr.bf16.gmra.mrb[0].mxu0 %v5562
      %v5654 = vpop.f32.mrb[0].mxu0
      %v5655 = vadd.f32 0.0, %v5654
      %v5656 = vpop.f32.mrb[0].mxu0
      %v5657 = vpop.f32.mrb[0].mxu0
      %v5658 = vadd.f32 0.0, %v5657
      %v5659 = vpop.f32.mrb[0].mxu0
      %5660 = vdwg.mxu0
      %v5661 = vadd.f32 %v5227, %v5599
      %v5662 = vadd.f32 %v5228, %v5602
      %v5663 = vadd.f32 %v5229, %v5607
      %v5664 = vadd.f32 %v5230, %v5610
      %v5665 = vadd.f32 %v5231, %v5615
      %v5666 = vadd.f32 %v5232, %v5618
      %v5667 = vadd.f32 %v5233, %v5623
      %v5668 = vadd.f32 %v5234, %v5626
      %v5669 = vadd.f32 %v5235, %v5631
      %v5670 = vadd.f32 %v5236, %v5634
      %v5671 = vadd.f32 %v5237, %v5639
      %v5672 = vadd.f32 %v5238, %v5642
      %v5673 = vadd.f32 %v5239, %v5647
      %v5674 = vadd.f32 %v5240, %v5650
      %v5675 = vadd.f32 %v5241, %v5655
      %v5676 = vadd.f32 %v5242, %v5658
      %v5677 = vld [vmem:[%s5032] sm:$0xe]
      %v5678 = vld [vmem:[%s5032 + $0x8] sm:$0xe]
      %v5679 = vld [vmem:[%s5032 + $0x10] sm:$0xe]
      %v5680 = vld [vmem:[%s5032 + $0x18] sm:$0xe]
      %v5681 = vld [vmem:[%s5032 + $0x20] sm:$0xe]
      %v5682 = vld [vmem:[%s5032 + $0x28] sm:$0xe]
      %v5683 = vld [vmem:[%s5032 + $0x30] sm:$0xe]
      %v5684 = vld [vmem:[%s5032 + $0x38] sm:$0xe]
      %v5685 = vld [vmem:[%s5032 + $0x50] sm:$0xe]
      %v5686 = vld [vmem:[%s5032 + $0x58] sm:$0xe]
      %v5687 = vld [vmem:[%s5032 + $0x60] sm:$0xe]
      %v5688 = vld [vmem:[%s5032 + $0x68] sm:$0xe]
      %v5689 = vld [vmem:[%s5032 + $0x70] sm:$0xe]
      %v5690 = vld [vmem:[%s5032 + $0x78] sm:$0xe]
      %v5691 = vld [vmem:[%s5032 + $0x80] sm:$0xe]
      %v5692 = vld [vmem:[%s5032 + $0x88] sm:$0xe]
      %v5725 = vrot.slane %v5677, 5
      %v5726 = vrot.slane %v5725, 4
      %v5727 = vrot.slane %v5244, 5
      %v5728 = vsel %vm3855, %v5726, %v5727
      %v5729 = vrot.slane %v5678, 5
      %v5730 = vrot.slane %v5729, 4
      %v5731 = vrot.slane %v5246, 5
      %v5732 = vsel %vm3855, %v5730, %v5731
      %v5733 = vrot.slane %v5679, 5
      %v5734 = vrot.slane %v5733, 4
      %v5735 = vrot.slane %v5248, 5
      %v5736 = vsel %vm3855, %v5734, %v5735
      %v5737 = vrot.slane %v5680, 5
      %v5738 = vrot.slane %v5737, 4
      %v5739 = vrot.slane %v5250, 5
      %v5740 = vsel %vm3855, %v5738, %v5739
      %v5741 = vrot.slane %v5681, 5
      %v5742 = vrot.slane %v5741, 4
      %v5743 = vrot.slane %v5252, 5
      %v5744 = vsel %vm3855, %v5742, %v5743
      %v5745 = vrot.slane %v5682, 5
      %v5746 = vrot.slane %v5745, 4
      %v5747 = vrot.slane %v5254, 5
      %v5748 = vsel %vm3855, %v5746, %v5747
      %v5749 = vrot.slane %v5683, 5
      %v5750 = vrot.slane %v5749, 4
      %v5751 = vrot.slane %v5256, 5
      %v5752 = vsel %vm3855, %v5750, %v5751
      %v5753 = vrot.slane %v5684, 5
      %v5754 = vrot.slane %v5753, 4
      %v5755 = vrot.slane %v5258, 5
      %v5756 = vsel %vm3855, %v5754, %v5755
      %v5757 = vrot.slane %v5685, 5
      %v5758 = vrot.slane %v5757, 4
      %v5759 = vrot.slane %v5260, 5
      %v5760 = vsel %vm3855, %v5758, %v5759
      %v5761 = vrot.slane %v5686, 5
      %v5762 = vrot.slane %v5761, 4
      %v5763 = vrot.slane %v5262, 5
      %v5764 = vsel %vm3855, %v5762, %v5763
      %v5765 = vrot.slane %v5687, 5
      %v5766 = vrot.slane %v5765, 4
      %v5767 = vrot.slane %v5264, 5
      %v5768 = vsel %vm3855, %v5766, %v5767
      %v5769 = vrot.slane %v5688, 5
      %v5770 = vrot.slane %v5769, 4
      %v5771 = vrot.slane %v5266, 5
      %v5772 = vsel %vm3855, %v5770, %v5771
      %v5773 = vrot.slane %v5689, 5
      %v5774 = vrot.slane %v5773, 4
      %v5775 = vrot.slane %v5268, 5
      %v5776 = vsel %vm3855, %v5774, %v5775
      %v5777 = vrot.slane %v5690, 5
      %v5778 = vrot.slane %v5777, 4
      %v5779 = vrot.slane %v5270, 5
      %v5780 = vsel %vm3855, %v5778, %v5779
      %v5781 = vrot.slane %v5691, 5
      %v5782 = vrot.slane %v5781, 4
      %v5783 = vrot.slane %v5272, 5
      %v5784 = vsel %vm3855, %v5782, %v5783
      %v5785 = vrot.slane %v5692, 5
      %v5786 = vrot.slane %v5785, 4
      %v5787 = vrot.slane %v5274, 5
      %v5788 = vsel %vm3855, %v5786, %v5787
      %s5789 = scalar_lea.vmem %s327, 128
      %v5790 = vld [vmem:[%s5789] sm:$0xf]
      %v5791 = vld [vmem:[%s5789 + $0x4] sm:$0xf]
      %v5792 = vld [vmem:[%s5789 + $0x8] sm:$0xf]
      %v5793 = vld [vmem:[%s5789 + $0xc] sm:$0xf]
      %v5794 = vunpack.c.l.b16 %v5728
      %v5795 = vunpack.c.l.b16 %v5732
      %v5796 = vunpack.c.l.b16 %v5736
      %v5797 = vunpack.c.l.b16 %v5740
      %v5798 = vunpack.c.l.b16 %v5744
      %v5799 = vunpack.c.l.b16 %v5748
      %v5800 = vunpack.c.l.b16 %v5752
      %v5801 = vunpack.c.l.b16 %v5756
      %v5802 = vunpack.c.l.b16 %v5760
      %v5803 = vunpack.c.l.b16 %v5764
      %v5804 = vunpack.c.l.b16 %v5768
      %v5805 = vunpack.c.l.b16 %v5772
      %v5806 = vunpack.c.l.b16 %v5776
      %v5807 = vunpack.c.l.b16 %v5780
      %v5808 = vunpack.c.l.b16 %v5784
      %v5809 = vunpack.c.l.b16 %v5788
      %v5810 = vpack.c.b16 %v5795, %v5794
      %v5811 = vpack.c.b16 %v5797, %v5796
      %v5812 = vpack.c.b16 %v5799, %v5798
      %v5813 = vpack.c.b16 %v5801, %v5800
      %v5814 = vpack.c.b16 %v5803, %v5802
      %v5815 = vpack.c.b16 %v5805, %v5804
      %v5816 = vpack.c.b16 %v5807, %v5806
      %v5817 = vpack.c.b16 %v5809, %v5808
      %v5822 = vunpack.c.l.b16 %v5790
      %v5823 = vunpack.c.l.b16 %v5791
      %v5824 = vunpack.c.l.b16 %v5792
      %v5825 = vunpack.c.l.b16 %v5793
      %v5826 = vpack.c.b16 %v5823, %v5822
      %v5827 = vpack.c.b16 %v5825, %v5824
      %v5831 = vsel %vm3510, %v5810, 0
      %v5834 = vsel %vm3510, %v5811, 0
      %v5837 = vsel %vm3510, %v5812, 0
      %v5840 = vsel %vm3510, %v5813, 0
      %v5843 = vsel %vm3510, %v5814, 0
      %v5846 = vsel %vm3510, %v5815, 0
      %v5849 = vsel %vm3510, %v5816, 0
      %v5852 = vsel %vm3510, %v5817, 0
      %5854 = vmatprep.subr.bf16.mxu0 0
      %5855 = vmatpush1.bf16.msra.mxu0 %v5826
      %5856 = vmatprep.subr.bf16.mxu0 0
      %5857 = vmatpush1.bf16.msra.mxu0 %v5827
      %5858 = vmatprep.subr.bf16.mxu0 0
      %5859 = vmatpush1.bf16.msra.mxu0 0
      %5860 = vmatprep.subr.bf16.mxu0 0
      %5861 = vmatpush1.bf16.msra.mxu0 0
      %5862 = vmatprep.subr.bf16.mxu0 0
      %5863 = vmatpush1.bf16.msra.mxu0 0
      %5864 = vmatprep.subr.bf16.mxu0 0
      %5865 = vmatpush1.bf16.msra.mxu0 0
      %5866 = vmatprep.subr.bf16.mxu0 0
      %5867 = vmatpush1.bf16.msra.mxu0 0
      %5868 = vmatprep.subr.bf16.mxu0 0
      %5869 = vmatpush1.bf16.msra.mxu0 0
      %5870 = vmatprep.subr.bf16.mxu0 0
      %5871 = vmatpush1.bf16.msra.mxu0 0
      %5872 = vmatprep.subr.bf16.mxu0 0
      %5873 = vmatpush1.bf16.msra.mxu0 0
      %5874 = vmatprep.subr.bf16.mxu0 0
      %5875 = vmatpush1.bf16.msra.mxu0 0
      %5876 = vmatprep.subr.bf16.mxu0 0
      %5877 = vmatpush1.bf16.msra.mxu0 0
      %5878 = vmatprep.subr.bf16.mxu0 0
      %5879 = vmatpush1.bf16.msra.mxu0 0
      %5880 = vmatprep.subr.bf16.mxu0 0
      %5881 = vmatpush1.bf16.msra.mxu0 0
      %5882 = vmatprep.subr.bf16.mxu0 0
      %5883 = vmatpush1.bf16.msra.mxu0 0
      %5884 = vmatprep.subr.bf16.mxu0 0
      %5885 = vmatpush1.bf16.msra.mxu0 0
      %5886 = vmatprep.mubr.bf16.mxu0 0
      %5887 = vmatmul.mubr.bf16.gmra.mrb[0].mxu0 %v5831
      %v5888 = vpop.f32.mrb[0].mxu0
      %v5889 = vadd.f32 0.0, %v5888
      %v5890 = vpop.f32.mrb[0].mxu0
      %v5891 = vpop.f32.mrb[0].mxu0
      %v5892 = vadd.f32 0.0, %v5891
      %v5893 = vpop.f32.mrb[0].mxu0
      %5894 = vmatprep.mubr.bf16.mxu0 0
      %5895 = vmatmul.mubr.bf16.gmra.mrb[0].mxu0 %v5834
      %v5896 = vpop.f32.mrb[0].mxu0
      %v5897 = vadd.f32 0.0, %v5896
      %v5898 = vpop.f32.mrb[0].mxu0
      %v5899 = vpop.f32.mrb[0].mxu0
      %v5900 = vadd.f32 0.0, %v5899
      %v5901 = vpop.f32.mrb[0].mxu0
      %5902 = vmatprep.mubr.bf16.mxu0 0
      %5903 = vmatmul.mubr.bf16.gmra.mrb[0].mxu0 %v5837
      %v5904 = vpop.f32.mrb[0].mxu0
      %v5905 = vadd.f32 0.0, %v5904
      %v5906 = vpop.f32.mrb[0].mxu0
      %v5907 = vpop.f32.mrb[0].mxu0
      %v5908 = vadd.f32 0.0, %v5907
      %v5909 = vpop.f32.mrb[0].mxu0
      %5910 = vmatprep.mubr.bf16.mxu0 0
      %5911 = vmatmul.mubr.bf16.gmra.mrb[0].mxu0 %v5840
      %v5912 = vpop.f32.mrb[0].mxu0
      %v5913 = vadd.f32 0.0, %v5912
      %v5914 = vpop.f32.mrb[0].mxu0
      %v5915 = vpop.f32.mrb[0].mxu0
      %v5916 = vadd.f32 0.0, %v5915
      %v5917 = vpop.f32.mrb[0].mxu0
      %5918 = vmatprep.mubr.bf16.mxu0 0
      %5919 = vmatmul.mubr.bf16.gmra.mrb[0].mxu0 %v5843
      %v5920 = vpop.f32.mrb[0].mxu0
      %v5921 = vadd.f32 0.0, %v5920
      %v5922 = vpop.f32.mrb[0].mxu0
      %v5923 = vpop.f32.mrb[0].mxu0
      %v5924 = vadd.f32 0.0, %v5923
      %v5925 = vpop.f32.mrb[0].mxu0
      %5926 = vmatprep.mubr.bf16.mxu0 0
      %5927 = vmatmul.mubr.bf16.gmra.mrb[0].mxu0 %v5846
      %v5928 = vpop.f32.mrb[0].mxu0
      %v5929 = vadd.f32 0.0, %v5928
      %v5930 = vpop.f32.mrb[0].mxu0
      %v5931 = vpop.f32.mrb[0].mxu0
      %v5932 = vadd.f32 0.0, %v5931
      %v5933 = vpop.f32.mrb[0].mxu0
      %5934 = vmatprep.mubr.bf16.mxu0 0
      %5935 = vmatmul.mubr.bf16.gmra.mrb[0].mxu0 %v5849
      %v5936 = vpop.f32.mrb[0].mxu0
      %v5937 = vadd.f32 0.0, %v5936
      %v5938 = vpop.f32.mrb[0].mxu0
      %v5939 = vpop.f32.mrb[0].mxu0
      %v5940 = vadd.f32 0.0, %v5939
      %v5941 = vpop.f32.mrb[0].mxu0
      %5942 = vmatprep.mubr.bf16.mxu0 0
      %5943 = vmatmul.mubr.bf16.gmra.mrb[0].mxu0 %v5852
      %v5944 = vpop.f32.mrb[0].mxu0
      %v5945 = vadd.f32 0.0, %v5944
      %v5946 = vpop.f32.mrb[0].mxu0
      %v5947 = vpop.f32.mrb[0].mxu0
      %v5948 = vadd.f32 0.0, %v5947
      %v5949 = vpop.f32.mrb[0].mxu0
      %5950 = vdwg.mxu0
      %v5951 = vadd.f32 %v5661, %v5889
      %v5952 = vadd.f32 %v5662, %v5892
      %v5953 = vadd.f32 %v5663, %v5897
      %v5954 = vadd.f32 %v5664, %v5900
      %v5955 = vadd.f32 %v5665, %v5905
      %v5956 = vadd.f32 %v5666, %v5908
      %v5957 = vadd.f32 %v5667, %v5913
      %v5958 = vadd.f32 %v5668, %v5916
      %v5959 = vadd.f32 %v5669, %v5921
      %v5960 = vadd.f32 %v5670, %v5924
      %v5961 = vadd.f32 %v5671, %v5929
      %v5962 = vadd.f32 %v5672, %v5932
      %v5963 = vadd.f32 %v5673, %v5937
      %v5964 = vadd.f32 %v5674, %v5940
      %v5965 = vadd.f32 %v5675, %v5945
      %v5966 = vadd.f32 %v5676, %v5948
      %v5967 = vld [vmem:[%s4] sm:$0x1]
      %v5969 = vlaneseq
      %v5970 = vshrl.u32 %v5969, 7
      %v5971 = vsub.s32 0, %v5970
      %v5972 = vrot.slane %v5967, %v5971
      %v5974 = vadd.f32 %v5951, %v5972
      %v5975 = vadd.f32 %v5952, %v5972
      %v5976 = vadd.f32 %v5953, %v5972
      %v5977 = vadd.f32 %v5954, %v5972
      %v5978 = vadd.f32 %v5955, %v5972
      %v5979 = vadd.f32 %v5956, %v5972
      %v5980 = vadd.f32 %v5957, %v5972
      %v5981 = vadd.f32 %v5958, %v5972
      %v5982 = vadd.f32 %v5959, %v5972
      %v5983 = vadd.f32 %v5960, %v5972
      %v5984 = vadd.f32 %v5961, %v5972
      %v5985 = vadd.f32 %v5962, %v5972
      %v5986 = vadd.f32 %v5963, %v5972
      %v5987 = vadd.f32 %v5964, %v5972
      %v5988 = vadd.f32 %v5965, %v5972
      %v5989 = vadd.f32 %v5966, %v5972
      %v5990 = vld [vmem:[%s1340] sm:$0xf]
      %v5991 = vld [vmem:[%s1340 + $0x8] sm:$0xf]
      %v5992 = vld [vmem:[%s1340 + $0x10] sm:$0xf]
      %v5993 = vld [vmem:[%s1340 + $0x18] sm:$0xf]
      %v5994 = vld [vmem:[%s1340 + $0x20] sm:$0xf]
      %v5995 = vld [vmem:[%s1340 + $0x28] sm:$0xf]
      %v5996 = vld [vmem:[%s1340 + $0x30] sm:$0xf]
      %v5997 = vld [vmem:[%s1340 + $0x38] sm:$0xf]
      %v5998 = vld [vmem:[%s1340 + $0x48] sm:$0xf]
      %v5999 = vld [vmem:[%s1340 + $0x50] sm:$0xf]
      %v6000 = vld [vmem:[%s1340 + $0x58] sm:$0xf]
      %v6001 = vld [vmem:[%s1340 + $0x60] sm:$0xf]
      %v6002 = vld [vmem:[%s1340 + $0x68] sm:$0xf]
      %v6003 = vld [vmem:[%s1340 + $0x70] sm:$0xf]
      %v6004 = vld [vmem:[%s1340 + $0x78] sm:$0xf]
      %v6005 = vld [vmem:[%s1340 + $0x80] sm:$0xf]
      %v6006 = vld [vmem:[%s5] sm:$0xf]
      %v6007 = vld [vmem:[%s5 + $0x4] sm:$0xf]
      %v6008 = vld [vmem:[%s6] sm:$0x1]
      %v6010 = vlaneseq
      %v6011 = vshrl.u32 %v6010, 7
      %v6012 = vsub.s32 0, %v6011
      %v6013 = vrot.slane %v6008, %v6012
      %v6031 = vunpack.c.l.b16 %v5990
      %v6032 = vunpack.c.l.b16 %v5991
      %v6033 = vunpack.c.l.b16 %v5992
      %v6034 = vunpack.c.l.b16 %v5993
      %v6035 = vunpack.c.l.b16 %v5994
      %v6036 = vunpack.c.l.b16 %v5995
      %v6037 = vunpack.c.l.b16 %v5996
      %v6038 = vunpack.c.l.b16 %v5997
      %v6039 = vunpack.c.l.b16 %v5998
      %v6040 = vunpack.c.l.b16 %v5999
      %v6041 = vunpack.c.l.b16 %v6000
      %v6042 = vunpack.c.l.b16 %v6001
      %v6043 = vunpack.c.l.b16 %v6002
      %v6044 = vunpack.c.l.b16 %v6003
      %v6045 = vunpack.c.l.b16 %v6004
      %v6046 = vunpack.c.l.b16 %v6005
      %v6047 = vpack.c.b16 %v6032, %v6031
      %v6048 = vpack.c.b16 %v6034, %v6033
      %v6049 = vpack.c.b16 %v6036, %v6035
      %v6050 = vpack.c.b16 %v6038, %v6037
      %v6051 = vpack.c.b16 %v6040, %v6039
      %v6052 = vpack.c.b16 %v6042, %v6041
      %v6053 = vpack.c.b16 %v6044, %v6043
      %v6054 = vpack.c.b16 %v6046, %v6045
      %v6057 = vunpack.c.l.b16 %v6006
      %v6058 = vunpack.c.l.b16 %v6007
      %v6059 = vpack.c.b16 %v6058, %v6057
      %v6062 = vsel %vm419, %v6047, 0
      %v6065 = vsel %vm419, %v6048, 0
      %v6068 = vsel %vm419, %v6049, 0
      %v6071 = vsel %vm419, %v6050, 0
      %v6074 = vsel %vm419, %v6051, 0
      %v6077 = vsel %vm419, %v6052, 0
      %v6080 = vsel %vm419, %v6053, 0
      %v6083 = vsel %vm419, %v6054, 0
      %6085 = vmatprep.subr.bf16.mxu0 0
      %6086 = vmatpush1.bf16.msra.mxu0 %v6059
      %6087 = vmatprep.subr.bf16.mxu0 0
      %6088 = vmatpush1.bf16.msra.mxu0 0
      %6089 = vmatprep.subr.bf16.mxu0 0
      %6090 = vmatpush1.bf16.msra.mxu0 0
      %6091 = vmatprep.subr.bf16.mxu0 0
      %6092 = vmatpush1.bf16.msra.mxu0 0
      %6093 = vmatprep.subr.bf16.mxu0 0
      %6094 = vmatpush1.bf16.msra.mxu0 0
      %6095 = vmatprep.subr.bf16.mxu0 0
      %6096 = vmatpush1.bf16.msra.mxu0 0
      %6097 = vmatprep.subr.bf16.mxu0 0
      %6098 = vmatpush1.bf16.msra.mxu0 0
      %6099 = vmatprep.subr.bf16.mxu0 0
      %6100 = vmatpush1.bf16.msra.mxu0 0
      %6101 = vmatprep.subr.bf16.mxu0 0
      %6102 = vmatpush1.bf16.msra.mxu0 0
      %6103 = vmatprep.subr.bf16.mxu0 0
      %6104 = vmatpush1.bf16.msra.mxu0 0
      %6105 = vmatprep.subr.bf16.mxu0 0
      %6106 = vmatpush1.bf16.msra.mxu0 0
      %6107 = vmatprep.subr.bf16.mxu0 0
      %6108 = vmatpush1.bf16.msra.mxu0 0
      %6109 = vmatprep.subr.bf16.mxu0 0
      %6110 = vmatpush1.bf16.msra.mxu0 0
      %6111 = vmatprep.subr.bf16.mxu0 0
      %6112 = vmatpush1.bf16.msra.mxu0 0
      %6113 = vmatprep.subr.bf16.mxu0 0
      %6114 = vmatpush1.bf16.msra.mxu0 0
      %6115 = vmatprep.subr.bf16.mxu0 0
      %6116 = vmatpush1.bf16.msra.mxu0 0
      %6117 = vmatprep.mubr.bf16.mxu0 0
      %6118 = vmatmul.mubr.bf16.gmra.mrb[0].mxu0 %v6062
      %v6119 = vpop.f32.mrb[0].mxu0
      %v6120 = vadd.f32 %v6013, %v6119
      %v6121 = vpop.f32.mrb[0].mxu0
      %v6122 = vpop.f32.mrb[0].mxu0
      %v6123 = vadd.f32 %v6013, %v6122
      %v6124 = vpop.f32.mrb[0].mxu0
      %6125 = vmatprep.mubr.bf16.mxu0 0
      %6126 = vmatmul.mubr.bf16.gmra.mrb[0].mxu0 %v6065
      %v6127 = vpop.f32.mrb[0].mxu0
      %v6128 = vadd.f32 %v6013, %v6127
      %v6129 = vpop.f32.mrb[0].mxu0
      %v6130 = vpop.f32.mrb[0].mxu0
      %v6131 = vadd.f32 %v6013, %v6130
      %v6132 = vpop.f32.mrb[0].mxu0
      %6133 = vmatprep.mubr.bf16.mxu0 0
      %6134 = vmatmul.mubr.bf16.gmra.mrb[0].mxu0 %v6068
      %v6135 = vpop.f32.mrb[0].mxu0
      %v6136 = vadd.f32 %v6013, %v6135
      %v6137 = vpop.f32.mrb[0].mxu0
      %v6138 = vpop.f32.mrb[0].mxu0
      %v6139 = vadd.f32 %v6013, %v6138
      %v6140 = vpop.f32.mrb[0].mxu0
      %6141 = vmatprep.mubr.bf16.mxu0 0
      %6142 = vmatmul.mubr.bf16.gmra.mrb[0].mxu0 %v6071
      %v6143 = vpop.f32.mrb[0].mxu0
      %v6144 = vadd.f32 %v6013, %v6143
      %v6145 = vpop.f32.mrb[0].mxu0
      %v6146 = vpop.f32.mrb[0].mxu0
      %v6147 = vadd.f32 %v6013, %v6146
      %v6148 = vpop.f32.mrb[0].mxu0
      %6149 = vmatprep.mubr.bf16.mxu0 0
      %6150 = vmatmul.mubr.bf16.gmra.mrb[0].mxu0 %v6074
      %v6151 = vpop.f32.mrb[0].mxu0
      %v6152 = vadd.f32 %v6013, %v6151
      %v6153 = vpop.f32.mrb[0].mxu0
      %v6154 = vpop.f32.mrb[0].mxu0
      %v6155 = vadd.f32 %v6013, %v6154
      %v6156 = vpop.f32.mrb[0].mxu0
      %6157 = vmatprep.mubr.bf16.mxu0 0
      %6158 = vmatmul.mubr.bf16.gmra.mrb[0].mxu0 %v6077
      %v6159 = vpop.f32.mrb[0].mxu0
      %v6160 = vadd.f32 %v6013, %v6159
      %v6161 = vpop.f32.mrb[0].mxu0
      %v6162 = vpop.f32.mrb[0].mxu0
      %v6163 = vadd.f32 %v6013, %v6162
      %v6164 = vpop.f32.mrb[0].mxu0
      %6165 = vmatprep.mubr.bf16.mxu0 0
      %6166 = vmatmul.mubr.bf16.gmra.mrb[0].mxu0 %v6080
      %v6167 = vpop.f32.mrb[0].mxu0
      %v6168 = vadd.f32 %v6013, %v6167
      %v6169 = vpop.f32.mrb[0].mxu0
      %v6170 = vpop.f32.mrb[0].mxu0
      %v6171 = vadd.f32 %v6013, %v6170
      %v6172 = vpop.f32.mrb[0].mxu0
      %6173 = vmatprep.mubr.bf16.mxu0 0
      %6174 = vmatmul.mubr.bf16.gmra.mrb[0].mxu0 %v6083
      %v6175 = vpop.f32.mrb[0].mxu0
      %v6176 = vadd.f32 %v6013, %v6175
      %v6177 = vpop.f32.mrb[0].mxu0
      %v6178 = vpop.f32.mrb[0].mxu0
      %v6179 = vadd.f32 %v6013, %v6178
      %v6180 = vpop.f32.mrb[0].mxu0
      %6181 = vdwg.mxu0
      %v6182 = vadd.f32 %v5974, %v6120
      %v6183 = vadd.f32 %v5975, %v6123
      %v6184 = vadd.f32 %v5976, %v6128
      %v6185 = vadd.f32 %v5977, %v6131
      %v6186 = vadd.f32 %v5978, %v6136
      %v6187 = vadd.f32 %v5979, %v6139
      %v6188 = vadd.f32 %v5980, %v6144
      %v6189 = vadd.f32 %v5981, %v6147
      %v6190 = vadd.f32 %v5982, %v6152
      %v6191 = vadd.f32 %v5983, %v6155
      %v6192 = vadd.f32 %v5984, %v6160
      %v6193 = vadd.f32 %v5985, %v6163
      %v6194 = vadd.f32 %v5986, %v6168
      %v6195 = vadd.f32 %v5987, %v6171
      %v6196 = vadd.f32 %v5988, %v6176
      %v6197 = vadd.f32 %v5989, %v6179
      %v6198 = vmax.f32 %v6182, 0.0
      %v6199 = vmax.f32 %v6183, 0.0
      %v6200 = vmax.f32 %v6184, 0.0
      %v6201 = vmax.f32 %v6185, 0.0
      %v6202 = vmax.f32 %v6186, 0.0
      %v6203 = vmax.f32 %v6187, 0.0
      %v6204 = vmax.f32 %v6188, 0.0
      %v6205 = vmax.f32 %v6189, 0.0
      %v6206 = vmax.f32 %v6190, 0.0
      %v6207 = vmax.f32 %v6191, 0.0
      %v6208 = vmax.f32 %v6192, 0.0
      %v6209 = vmax.f32 %v6193, 0.0
      %v6210 = vmax.f32 %v6194, 0.0
      %v6211 = vmax.f32 %v6195, 0.0
      %v6212 = vmax.f32 %v6196, 0.0
      %v6213 = vmax.f32 %v6197, 0.0
      %6214 = vst.msk [vmem:[%s333] sm:$0xff] %vm3510, %v6198
      %6215 = vst.msk [vmem:[%s333 + $0x8] sm:$0xff] %vm3510, %v6199
      %6216 = vst.msk [vmem:[%s333 + $0x10] sm:$0xff] %vm3510, %v6200
      %6217 = vst.msk [vmem:[%s333 + $0x18] sm:$0xff] %vm3510, %v6201
      %6218 = vst.msk [vmem:[%s333 + $0x20] sm:$0xff] %vm3510, %v6202
      %6219 = vst.msk [vmem:[%s333 + $0x28] sm:$0xff] %vm3510, %v6203
      %6220 = vst.msk [vmem:[%s333 + $0x30] sm:$0xff] %vm3510, %v6204
      %6221 = vst.msk [vmem:[%s333 + $0x38] sm:$0xff] %vm3510, %v6205
      %6222 = vst.msk [vmem:[%s333 + $0x40] sm:$0xff] %vm3510, %v6206
      %6223 = vst.msk [vmem:[%s333 + $0x48] sm:$0xff] %vm3510, %v6207
      %6224 = vst.msk [vmem:[%s333 + $0x50] sm:$0xff] %vm3510, %v6208
      %6225 = vst.msk [vmem:[%s333 + $0x58] sm:$0xff] %vm3510, %v6209
      %6226 = vst.msk [vmem:[%s333 + $0x60] sm:$0xff] %vm3510, %v6210
      %6227 = vst.msk [vmem:[%s333 + $0x68] sm:$0xff] %vm3510, %v6211
      %6228 = vst.msk [vmem:[%s333 + $0x70] sm:$0xff] %vm3510, %v6212
      %6229 = vst.msk [vmem:[%s333 + $0x78] sm:$0xff] %vm3510, %v6213
      %p6230 = scmp.lt.s32.totalorder %s18, 3
      %s6231 = scalar_select %p6230, %s18, 3
      %s6232 = smul.addr %s6231, 16
      %s6233 = smul.addr %s6232, 8
      %s6234 = scalar_lea.vmem %s7, %s6233
      // Predicated region
      $region49: #{tpu_custom_call.1} parent=47 // pred_check
        %p6235 = pneg %p198
      $region50: #{tpu_custom_call.1} parent=47 // pred_check_branch
        %6237 = sbr.rel (%p6235) target = $region52
      $region51: #{tpu_custom_call.1} parent=47 // pred_region
        _
      $region52: #{tpu_custom_call.1} parent=47 // pred_fallthru
        _
    $region48: #{tpu_custom_call.1} parent=5 // pred_fallthru
      _
    %p6238 = scmp.le.s32.totalorder 2, %s13
    // Predicated region
    $region53: #{tpu_custom_call.1} parent=5 // pred_check
      %p6239 = pneg %p6238
    $region54: #{tpu_custom_call.1} parent=5 // pred_check_branch
      %6241 = sbr.rel (%p6239) target = $region56
    $region55: #{tpu_custom_call.1} parent=5 // pred_region
      %s6242 = ssub.s32 %s13, 2
      // Predicated region
      $region57: #{tpu_custom_call.1} parent=55 // pred_check
        %p6243 = pneg %p204
      $region58: #{tpu_custom_call.1} parent=55 // pred_check_branch
        %6245 = sbr.rel (%p6243) target = $region60
      $region59: #{tpu_custom_call.1} parent=55 // pred_region
        %p6246 = scmp.lt.s32.totalorder %s19, 3
        %s6247 = scalar_select %p6246, %s19, 3
        %s6248 = smul.addr %s6247, 16
        %s6249 = smul.addr %s6248, 8
        %s6250 = scalar_lea.vmem %s7, %s6249
      $region60: #{tpu_custom_call.1} parent=55 // pred_fallthru
        _
    $region56: #{tpu_custom_call.1} parent=5 // pred_fallthru
      _
  $region6: #{tpu_custom_call.1} parent=0 // loop_footer
    %s17 = sadd.s32 1, %s13
  $region7: #{tpu_custom_call.1} parent=0 // loop_footer_branch
    %12 = sbr.rel target = $region3
  $region8: #{tpu_custom_call.1} parent=0 // loop_exit
    _

</llo_original>
